<compile_context>
chip_gen: v6e
topology: v6e:2x2x1
jax: 0.10.0
libtpu: 0.0.40
codegen_flags: <defaults>
</compile_context>

<pallas_src>
import functools
import math

import jax
import jax.numpy as jnp
from jax.experimental import pallas as pl
from jax.experimental.pallas import tpu as pltpu

EPS = 1e-5  # nn.LayerNorm default


def _layer_norm(x, gamma, beta):
    mean = jnp.mean(x, axis=-1, keepdims=True)
    var = jnp.mean((x - mean) ** 2, axis=-1, keepdims=True)
    return (x - mean) * jax.lax.rsqrt(var + EPS) * gamma + beta


# ---------------------------------------------------------------------------
# The ENTIRE encoder (input projection + layer stack) in one kernel.
#   grid = (batch_tiles, n_layers); the layer axis is "arbitrary" and the
#   output block index does not change along it, so o_ref stays resident in
#   VMEM and acts as the residual-stream accumulator across layers.
# ---------------------------------------------------------------------------
def _stack_kernel(x_ref, w_in_ref, b_in_ref, g_in_ref, bt_in_ref, pe_ref,
                  ln1g_ref, ln1b_ref, wqkv_ref, bqkv_ref, wo_ref, bo_ref,
                  ln2g_ref, ln2b_ref, w1_ref, b1_ref, w2_ref, b2_ref,
                  o_ref, *, num_heads):
    layer = pl.program_id(1)
    bb, tt, d_in = x_ref.shape
    d_model = o_ref.shape[-1]
    d_k = d_model // num_heads
    rows = bb * tt
    scale = 1.0 / math.sqrt(d_k)

    # ----- layer 0: fused input projection -> LayerNorm -> +PE (dropout = id) -----
    @pl.when(layer == 0)
    def _():
        xin = x_ref[...].reshape(rows, d_in).astype(jnp.bfloat16)
        h0 = jnp.dot(xin, w_in_ref[...],
                     preferred_element_type=jnp.float32) + b_in_ref[...]
        h0 = _layer_norm(h0, g_in_ref[...], bt_in_ref[...])
        o_ref[...] = h0.reshape(bb, tt, d_model) + pe_ref[...]

    h2 = o_ref[...].reshape(rows, d_model)          # f32 residual stream

    # ----- self attention (pre-norm) -----
    xn = _layer_norm(h2, ln1g_ref[0], ln1b_ref[0]).astype(jnp.bfloat16)

    # fused QKV projection: one [rows, D] @ [D, 3D] matmul
    qkv = jnp.dot(xn, wqkv_ref[0], preferred_element_type=jnp.float32) + bqkv_ref[0]

    # fold 1/sqrt(d_k) into q (rows*D muls instead of H*Bb*T*T)
    q = (qkv[:, :d_model] * scale).astype(jnp.bfloat16).reshape(bb, tt, d_model)
    k = qkv[:, d_model:2 * d_model].astype(jnp.bfloat16).reshape(bb, tt, d_model)
    v = qkv[:, 2 * d_model:].astype(jnp.bfloat16).reshape(bb, tt, d_model)

    # gather heads onto the leading batch axis (head-major) so the whole
    # attention runs as two batched einsums + one softmax pass.
    def split_heads(m):
        return jnp.concatenate(
            [m[:, :, hh * d_k:(hh + 1) * d_k] for hh in range(num_heads)], axis=0)

    qb, kb, vb = split_heads(q), split_heads(k), split_heads(v)   # [H*Bb, T, d_k]

    s = jnp.einsum("btd,bsd->bts", qb, kb, preferred_element_type=jnp.float32)
    s = s - jnp.max(s, axis=-1, keepdims=True)
    p = jnp.exp(s)
    denom = jnp.sum(p, axis=-1, keepdims=True)                    # [H*Bb, T, 1]
    ctx = jnp.einsum("bts,bsd->btd", p.astype(jnp.bfloat16), vb,
                     preferred_element_type=jnp.float32)
    # normalise the [T, d_k] context instead of the [T, T] probs (EUP recip)
    ctx = ctx * pl.reciprocal(denom, approx=True)                 # [H*Bb, T, d_k]
    ctx = jnp.concatenate(
        [ctx[hh * bb:(hh + 1) * bb] for hh in range(num_heads)], axis=-1)
    ctx = ctx.reshape(rows, d_model).astype(jnp.bfloat16)

    attn_out = jnp.dot(ctx, wo_ref[0],
                       preferred_element_type=jnp.float32) + bo_ref[0]
    h2 = h2 + attn_out                                            # residual

    # ----- position-wise feed forward (pre-norm) -----
    xn2 = _layer_norm(h2, ln2g_ref[0], ln2b_ref[0]).astype(jnp.bfloat16)
    ff = jnp.dot(xn2, w1_ref[0], preferred_element_type=jnp.float32) + b1_ref[0]
    ff = jnp.maximum(ff, 0.0).astype(jnp.bfloat16)                # ReLU (dropout=id)
    ff = jnp.dot(ff, w2_ref[0], preferred_element_type=jnp.float32) + b2_ref[0]
    h2 = h2 + ff                                                  # residual

    o_ref[...] = h2.reshape(bb, tt, d_model)


# ---------------------------------------------------------------------------
# Wrapper: generation-aware VMEM budget + rows-per-step selection
# ---------------------------------------------------------------------------
_STACK_KEYS = ("ln1g", "ln1b", "wqkv", "bqkv", "wo", "bo",
               "ln2g", "ln2b", "w1", "b1", "w2", "b2")


def _vmem_capacity_bytes():
    try:
        return int(pltpu.get_tpu_info().vmem_capacity_bytes)
    except Exception:
        return 64 * 1024 * 1024      # conservative (v7x per-core VMEM)


def _stack_vmem_estimate(b_blk, T, d_in, D, F, H):
    """Rough per-grid-step VMEM bytes: double-buffered weights + resident
    activation blocks + dominant compiler temporaries."""
    rows = b_blk * T
    bf, f32 = 2, 4
    w_layer = (4 * D * D + 2 * D * F) * bf + (5 * D + F) * f32   # bf16 weights + f32 biases/LN
    weights = 2 * w_layer                                        # next-layer prefetch buffer
    resid = 2 * rows * D * f32                                   # resident output block
    xblk = 2 * rows * d_in * f32
    inproj = d_in * D * bf + 4 * D * f32 + T * D * f32           # w_in/b_in/LN/PE
    scores = H * b_blk * T * T * (f32 + bf)
    tmps = rows * (4 * D * (f32 + bf) + F * (f32 + bf) + 2 * D * f32)
    return weights + resid + xblk + inproj + scores + tmps


def _pick_b_blk(B, T, d_in, D, F, H, vmem_limit, target_rows=768):
    # target_rows >= v6e weight-streaming ridge (~650) and a multiple of 256;
    # then cap by the VMEM estimate so the block always fits the chip.
    b_blk = max(1, min(B, max(1, target_rows // max(T, 1))))
    while B % b_blk:
        b_blk -= 1
    budget = int(vmem_limit * 0.85)
    while b_blk > 1 and _stack_vmem_estimate(b_blk, T, d_in, D, F, H) > budget:
        b_blk -= 1
        while B % b_blk:
            b_blk -= 1
    return b_blk


def transformer_encoder(x, params_in, stacked, pe, num_heads):
    B, T, d_in = x.shape
    d_model = params_in["w"].shape[1]
    d_ff = stacked["w1"].shape[2]
    n_layers = stacked["wqkv"].shape[0]
    assert d_model % num_heads == 0

    vmem_limit = int(_vmem_capacity_bytes() * 0.8)
    b_blk = _pick_b_blk(B, T, d_in, d_model, d_ff, num_heads, vmem_limit)

    args_const = [params_in["w"], params_in["b"],
                  params_in["gamma"], params_in["beta"], pe]
    args_layer = [stacked[k] for k in _STACK_KEYS]

    def full_spec(a):
        nd = a.ndim
        return pl.BlockSpec(a.shape, lambda bi, li: (0,) * nd)

    in_specs = [pl.BlockSpec((b_blk, T, d_in), lambda bi, li: (bi, 0, 0))]
    in_specs += [full_spec(a) for a in args_const]
    in_specs += [pl.BlockSpec((1,) + tuple(a.shape[1:]), lambda bi, li: (li, 0, 0))
                 for a in args_layer]

    kernel = functools.partial(_stack_kernel, num_heads=num_heads)
    return pl.pallas_call(
        kernel,
        out_shape=jax.ShapeDtypeStruct((B, T, d_model), jnp.float32),
        grid=(B // b_blk, n_layers),
        in_specs=in_specs,
        out_specs=pl.BlockSpec((b_blk, T, d_model), lambda bi, li: (bi, 0, 0)),
        compiler_params=pltpu.CompilerParams(
            dimension_semantics=("parallel", "arbitrary"),
            vmem_limit_bytes=vmem_limit),
    )(x, *args_const, *args_layer)


# ---------------------------------------------------------------------------
# Parameter init (deterministic, synthetic) + positional encoding.
# Weights stored as [in, out] bf16 (y = x @ W + b == PyTorch's x @ W.T + b),
# biases / LayerNorm params f32; per-layer weights stacked along a leading L
# axis so the stack kernel indexes them with the layer grid coordinate.
# ---------------------------------------------------------------------------
def sinusoidal_pe(T, d_model):
    pos = jnp.arange(T, dtype=jnp.float32)[:, None]
    i = jnp.arange(0, d_model, 2, dtype=jnp.float32)[None, :]
    div = jnp.exp(-i * (math.log(10000.0) / d_model))
    pe = jnp.zeros((T, d_model), jnp.float32)
    pe = pe.at[:, 0::2].set(jnp.sin(pos * div))
    pe = pe.at[:, 1::2].set(jnp.cos(pos * div))
    return pe


def init_params(key, d_input, d_model, d_ff, n_layers):
    def linear(k, fan_in, fan_out):
        k1, k2 = jax.random.split(k)
        bound = 1.0 / math.sqrt(fan_in)
        w = jax.random.uniform(k1, (fan_in, fan_out), jnp.float32, -bound, bound)
        b = jax.random.uniform(k2, (1, fan_out), jnp.float32, -bound, bound)
        return w.astype(jnp.bfloat16), b

    keys = jax.random.split(key, 1 + n_layers)
    w_in, b_in = linear(keys[0], d_input, d_model)
    params_in = dict(w=w_in, b=b_in,
                     gamma=jnp.ones((1, d_model), jnp.float32),
                     beta=jnp.zeros((1, d_model), jnp.float32))

    layers = []
    for i in range(n_layers):
        lk = jax.random.split(keys[1 + i], 6)
        wq, bq = linear(lk[0], d_model, d_model)
        wk, bk = linear(lk[1], d_model, d_model)
        wv, bv = linear(lk[2], d_model, d_model)
        wo, bo = linear(lk[3], d_model, d_model)
        w1, b1 = linear(lk[4], d_model, d_ff)
        w2, b2 = linear(lk[5], d_ff, d_model)
        layers.append(dict(
            ln1g=jnp.ones((1, d_model), jnp.float32),
            ln1b=jnp.zeros((1, d_model), jnp.float32),
            wqkv=jnp.concatenate([wq, wk, wv], axis=1),      # [D, 3D] bf16
            bqkv=jnp.concatenate([bq, bk, bv], axis=1),      # [1, 3D] f32
            wo=wo, bo=bo,
            ln2g=jnp.ones((1, d_model), jnp.float32),
            ln2b=jnp.zeros((1, d_model), jnp.float32),
            w1=w1, b1=b1, w2=w2, b2=b2))
    stacked = {k: jnp.stack([lp[k] for lp in layers], axis=0)
               for k in layers[0]}
    return params_in, stacked


# ---------------------------------------------------------------------------
# Pure-JAX reference (same bf16-operand / f32-accumulate math) for checking
# ---------------------------------------------------------------------------
def ref_forward(x, params_in, stacked, pe, num_heads):
    bf = jnp.bfloat16

    def mm(a, w):
        return jnp.dot(a.astype(bf), w.astype(bf),
                       preferred_element_type=jnp.float32)

    h = mm(x, params_in["w"]) + params_in["b"]
    h = _layer_norm(h, params_in["gamma"], params_in["beta"]) + pe
    B, T, D = h.shape
    H = num_heads
    dk = D // H
    L = stacked["wqkv"].shape[0]
    for li in range(L):
        p = {k: v[li] for k, v in stacked.items()}
        xn = _layer_norm(h, p["ln1g"], p["ln1b"])
        qkv = mm(xn, p["wqkv"]) + p["bqkv"]
        q, k, v = qkv[..., :D], qkv[..., D:2 * D], qkv[..., 2 * D:]
        qh = q.reshape(B, T, H, dk).transpose(0, 2, 1, 3).astype(bf)
        kh = k.reshape(B, T, H, dk).transpose(0, 2, 1, 3).astype(bf)
        vh = v.reshape(B, T, H, dk).transpose(0, 2, 1, 3).astype(bf)
        s = jnp.einsum("bhtd,bhsd->bhts", qh, kh,
                       preferred_element_type=jnp.float32) / math.sqrt(dk)
        a = jax.nn.softmax(s, axis=-1)
        ctx = jnp.einsum("bhts,bhsd->bhtd", a.astype(bf), vh,
                         preferred_element_type=jnp.float32)
        ctx = ctx.transpose(0, 2, 1, 3).reshape(B, T, D)
        h = h + mm(ctx, p["wo"]) + p["bo"]
        xn2 = _layer_norm(h, p["ln2g"], p["ln2b"])
        ff = jnp.maximum(mm(xn2, p["w1"]) + p["b1"], 0.0)
        h = h + mm(ff, p["w2"]) + p["b2"]
    return h


if __name__ == "__main__":
    # small but lane-dense shapes: T multiple of 8, d_model/d_ff multiples of 128
    B, T = 2, 8
    d_input, d_model, n_head, d_ff, n_layers = 16, 128, 4, 256, 2

    key = jax.random.PRNGKey(0)
    kx, kp = jax.random.split(key)
    x = jax.random.normal(kx, (B, T, d_input), jnp.float32)
    params_in, stacked = init_params(kp, d_input, d_model, d_ff, n_layers)
    pe = sinusoidal_pe(T, d_model)

    out = transformer_encoder(x, params_in, stacked, pe, n_head)
    out = jax.block_until_ready(out)

    ref = ref_forward(x, params_in, stacked, pe, n_head)
    err = float(jnp.max(jnp.abs(out - ref)))
    assert out.shape == (B, T, d_model), out.shape
    # bf16 matmul operands + approx reciprocal -> ~1e-2 level agreement
    assert err < 6e-2, err
    print("KERNEL_OK")
</pallas_src>

<mosaic_0001>
module attributes {stable_mosaic.version = 11 : i64} {
  func.func @_stack_kernel(%arg0: i32, %arg1: i32, %arg2: memref<2x8x16xf32, #tpu.memory_space<vmem>>, %arg3: memref<16x128xbf16, #tpu.memory_space<vmem>>, %arg4: memref<1x128xf32, #tpu.memory_space<vmem>>, %arg5: memref<1x128xf32, #tpu.memory_space<vmem>>, %arg6: memref<1x128xf32, #tpu.memory_space<vmem>>, %arg7: memref<8x128xf32, #tpu.memory_space<vmem>>, %arg8: memref<1x1x128xf32, #tpu.memory_space<vmem>>, %arg9: memref<1x1x128xf32, #tpu.memory_space<vmem>>, %arg10: memref<1x128x384xbf16, #tpu.memory_space<vmem>>, %arg11: memref<1x1x384xf32, #tpu.memory_space<vmem>>, %arg12: memref<1x128x128xbf16, #tpu.memory_space<vmem>>, %arg13: memref<1x1x128xf32, #tpu.memory_space<vmem>>, %arg14: memref<1x1x128xf32, #tpu.memory_space<vmem>>, %arg15: memref<1x1x128xf32, #tpu.memory_space<vmem>>, %arg16: memref<1x128x256xbf16, #tpu.memory_space<vmem>>, %arg17: memref<1x1x256xf32, #tpu.memory_space<vmem>>, %arg18: memref<1x256x128xbf16, #tpu.memory_space<vmem>>, %arg19: memref<1x1x128xf32, #tpu.memory_space<vmem>>, %arg20: memref<2x8x128xf32, #tpu.memory_space<vmem>>) attributes {dimension_semantics = [#tpu.dimension_semantics<parallel>, #tpu.dimension_semantics<arbitrary>], iteration_bounds = array<i64: 1, 2>, scalar_prefetch = 0 : i64, scratch_operands = 0 : i64, tpu.core_type = #tpu.core_type<tc>, window_params = [{transform_indices = @transform_0, window_bounds = array<i64: 2, 8, 16>}, {pipeline_mode = #tpu.pipeline_mode<synchronous>, transform_indices = @transform_1, window_bounds = array<i64: 16, 128>}, {pipeline_mode = #tpu.pipeline_mode<synchronous>, transform_indices = @transform_2, window_bounds = array<i64: 1, 128>}, {pipeline_mode = #tpu.pipeline_mode<synchronous>, transform_indices = @transform_3, window_bounds = array<i64: 1, 128>}, {pipeline_mode = #tpu.pipeline_mode<synchronous>, transform_indices = @transform_4, window_bounds = array<i64: 1, 128>}, {pipeline_mode = #tpu.pipeline_mode<synchronous>, transform_indices = @transform_5, window_bounds = array<i64: 8, 128>}, {transform_indices = @transform_6, window_bounds = array<i64: 1, 1, 128>}, {transform_indices = @transform_7, window_bounds = array<i64: 1, 1, 128>}, {transform_indices = @transform_8, window_bounds = array<i64: 1, 128, 384>}, {transform_indices = @transform_9, window_bounds = array<i64: 1, 1, 384>}, {transform_indices = @transform_10, window_bounds = array<i64: 1, 128, 128>}, {transform_indices = @transform_11, window_bounds = array<i64: 1, 1, 128>}, {transform_indices = @transform_12, window_bounds = array<i64: 1, 1, 128>}, {transform_indices = @transform_13, window_bounds = array<i64: 1, 1, 128>}, {transform_indices = @transform_14, window_bounds = array<i64: 1, 128, 256>}, {transform_indices = @transform_15, window_bounds = array<i64: 1, 1, 256>}, {transform_indices = @transform_16, window_bounds = array<i64: 1, 256, 128>}, {transform_indices = @transform_17, window_bounds = array<i64: 1, 1, 128>}, {transform_indices = @transform_18, window_bounds = array<i64: 2, 8, 128>}]} {
    %c0_i32 = arith.constant 0 : i32
    %0 = arith.cmpi eq, %arg1, %c0_i32 : i32
    %1 = arith.extui %0 : i1 to i32
    %c0_i32_0 = arith.constant 0 : i32
    %2 = arith.cmpi ne, %1, %c0_i32_0 : i32
    scf.if %2 {
      %c0_61 = arith.constant 0 : index
      %c0_62 = arith.constant 0 : index
      %c0_63 = arith.constant 0 : index
      %140 = vector.load %arg2[%c0_61, %c0_62, %c0_63] : memref<2x8x16xf32, #tpu.memory_space<vmem>>, vector<2x8x16xf32>
      %141 = vector.shape_cast %140 : vector<2x8x16xf32> to vector<16x16xf32>
      %142 = arith.truncf %141 : vector<16x16xf32> to vector<16x16xbf16>
      %c0_64 = arith.constant 0 : index
      %c0_65 = arith.constant 0 : index
      %143 = vector.load %arg3[%c0_64, %c0_65] : memref<16x128xbf16, #tpu.memory_space<vmem>>, vector<16x128xbf16>
      %cst_66 = arith.constant dense<0.000000e+00> : vector<16x128xf32>
      %144 = tpu.matmul %142, %143, %cst_66 {dimension_numbers = #tpu.dot_dimension_numbers<[1], [0], [0], [1], [0, 0, 1, 1], [], []>} : vector<16x16xbf16>, vector<16x128xbf16>, vector<16x128xf32> -> vector<16x128xf32>
      %c0_67 = arith.constant 0 : index
      %c0_68 = arith.constant 0 : index
      %145 = vector.load %arg4[%c0_67, %c0_68] : memref<1x128xf32, #tpu.memory_space<vmem>>, vector<1x128xf32>
      %146 = vector.broadcast %145 : vector<1x128xf32> to vector<16x128xf32>
      %147 = arith.addf %144, %146 : vector<16x128xf32>
      %c0_69 = arith.constant 0 : index
      %c0_70 = arith.constant 0 : index
      %148 = vector.load %arg5[%c0_69, %c0_70] : memref<1x128xf32, #tpu.memory_space<vmem>>, vector<1x128xf32>
      %c0_71 = arith.constant 0 : index
      %c0_72 = arith.constant 0 : index
      %149 = vector.load %arg6[%c0_71, %c0_72] : memref<1x128xf32, #tpu.memory_space<vmem>>, vector<1x128xf32>
      %cst_73 = arith.constant dense<0.000000e+00> : vector<16xf32>
      %150 = vector.multi_reduction <add>, %147, %cst_73 [1] : vector<16x128xf32> to vector<16xf32>
      %151 = vector.shape_cast %150 : vector<16xf32> to vector<16x1xf32>
      %cst_74 = arith.constant 1.280000e+02 : f32
      %152 = vector.broadcast %cst_74 : f32 to vector<16x1xf32>
      %153 = arith.divf %151, %152 : vector<16x1xf32>
      %154 = vector.broadcast %153 : vector<16x1xf32> to vector<16x128xf32>
      %155 = arith.subf %147, %154 : vector<16x128xf32>
      %156 = arith.mulf %155, %155 : vector<16x128xf32>
      %cst_75 = arith.constant dense<0.000000e+00> : vector<16xf32>
      %157 = vector.multi_reduction <add>, %156, %cst_75 [1] : vector<16x128xf32> to vector<16xf32>
      %158 = vector.shape_cast %157 : vector<16xf32> to vector<16x1xf32>
      %cst_76 = arith.constant 1.280000e+02 : f32
      %159 = vector.broadcast %cst_76 : f32 to vector<16x1xf32>
      %160 = arith.divf %158, %159 : vector<16x1xf32>
      %161 = vector.broadcast %153 : vector<16x1xf32> to vector<16x128xf32>
      %162 = arith.subf %147, %161 : vector<16x128xf32>
      %cst_77 = arith.constant 9.99999974E-6 : f32
      %163 = vector.broadcast %cst_77 : f32 to vector<16x1xf32>
      %164 = arith.addf %160, %163 : vector<16x1xf32>
      %165 = math.rsqrt %164 : vector<16x1xf32>
      %166 = vector.broadcast %165 : vector<16x1xf32> to vector<16x128xf32>
      %167 = arith.mulf %162, %166 : vector<16x128xf32>
      %168 = vector.broadcast %148 : vector<1x128xf32> to vector<16x128xf32>
      %169 = arith.mulf %167, %168 : vector<16x128xf32>
      %170 = vector.broadcast %149 : vector<1x128xf32> to vector<16x128xf32>
      %171 = arith.addf %169, %170 : vector<16x128xf32>
      %172 = vector.shape_cast %171 : vector<16x128xf32> to vector<2x8x128xf32>
      %c0_78 = arith.constant 0 : index
      %c0_79 = arith.constant 0 : index
      %173 = vector.load %arg7[%c0_78, %c0_79] : memref<8x128xf32, #tpu.memory_space<vmem>>, vector<8x128xf32>
      %174 = vector.shape_cast %173 : vector<8x128xf32> to vector<1x8x128xf32>
      %175 = vector.broadcast %174 : vector<1x8x128xf32> to vector<2x8x128xf32>
      %176 = arith.addf %172, %175 : vector<2x8x128xf32>
      %c0_80 = arith.constant 0 : index
      %c0_81 = arith.constant 0 : index
      %c0_82 = arith.constant 0 : index
      %177 = vector.load %arg20[%c0_80, %c0_81, %c0_82] : memref<2x8x128xf32, #tpu.memory_space<vmem>>, vector<2x8x128xf32>
      tpu.vector_store %arg20[%c0_80, %c0_81, %c0_82], %176 {strides = array<i32>} : memref<2x8x128xf32, #tpu.memory_space<vmem>>, vector<2x8x128xf32>,
    } else {
    }
    %c0 = arith.constant 0 : index
    %c0_1 = arith.constant 0 : index
    %c0_2 = arith.constant 0 : index
    %3 = vector.load %arg20[%c0, %c0_1, %c0_2] : memref<2x8x128xf32, #tpu.memory_space<vmem>>, vector<2x8x128xf32>
    %4 = vector.shape_cast %3 : vector<2x8x128xf32> to vector<16x128xf32>
    %c0_3 = arith.constant 0 : index
    %c0_4 = arith.constant 0 : index
    %c0_5 = arith.constant 0 : index
    %5 = vector.load %arg8[%c0_3, %c0_4, %c0_5] : memref<1x1x128xf32, #tpu.memory_space<vmem>>, vector<1x1x128xf32>
    %6 = vector.shape_cast %5 : vector<1x1x128xf32> to vector<1x128xf32>
    %c0_6 = arith.constant 0 : index
    %c0_7 = arith.constant 0 : index
    %c0_8 = arith.constant 0 : index
    %7 = vector.load %arg9[%c0_6, %c0_7, %c0_8] : memref<1x1x128xf32, #tpu.memory_space<vmem>>, vector<1x1x128xf32>
    %8 = vector.shape_cast %7 : vector<1x1x128xf32> to vector<1x128xf32>
    %cst = arith.constant dense<0.000000e+00> : vector<16xf32>
    %9 = vector.multi_reduction <add>, %4, %cst [1] : vector<16x128xf32> to vector<16xf32>
    %10 = vector.shape_cast %9 : vector<16xf32> to vector<16x1xf32>
    %cst_9 = arith.constant 1.280000e+02 : f32
    %11 = vector.broadcast %cst_9 : f32 to vector<16x1xf32>
    %12 = arith.divf %10, %11 : vector<16x1xf32>
    %13 = vector.broadcast %12 : vector<16x1xf32> to vector<16x128xf32>
    %14 = arith.subf %4, %13 : vector<16x128xf32>
    %15 = arith.mulf %14, %14 : vector<16x128xf32>
    %cst_10 = arith.constant dense<0.000000e+00> : vector<16xf32>
    %16 = vector.multi_reduction <add>, %15, %cst_10 [1] : vector<16x128xf32> to vector<16xf32>
    %17 = vector.shape_cast %16 : vector<16xf32> to vector<16x1xf32>
    %cst_11 = arith.constant 1.280000e+02 : f32
    %18 = vector.broadcast %cst_11 : f32 to vector<16x1xf32>
    %19 = arith.divf %17, %18 : vector<16x1xf32>
    %20 = vector.broadcast %12 : vector<16x1xf32> to vector<16x128xf32>
    %21 = arith.subf %4, %20 : vector<16x128xf32>
    %cst_12 = arith.constant 9.99999974E-6 : f32
    %22 = vector.broadcast %cst_12 : f32 to vector<16x1xf32>
    %23 = arith.addf %19, %22 : vector<16x1xf32>
    %24 = math.rsqrt %23 : vector<16x1xf32>
    %25 = vector.broadcast %24 : vector<16x1xf32> to vector<16x128xf32>
    %26 = arith.mulf %21, %25 : vector<16x128xf32>
    %27 = vector.broadcast %6 : vector<1x128xf32> to vector<16x128xf32>
    %28 = arith.mulf %26, %27 : vector<16x128xf32>
    %29 = vector.broadcast %8 : vector<1x128xf32> to vector<16x128xf32>
    %30 = arith.addf %28, %29 : vector<16x128xf32>
    %31 = arith.truncf %30 : vector<16x128xf32> to vector<16x128xbf16>
    %c0_13 = arith.constant 0 : index
    %c0_14 = arith.constant 0 : index
    %c0_15 = arith.constant 0 : index
    %32 = vector.load %arg10[%c0_13, %c0_14, %c0_15] : memref<1x128x384xbf16, #tpu.memory_space<vmem>>, vector<1x128x384xbf16>
    %33 = vector.shape_cast %32 : vector<1x128x384xbf16> to vector<128x384xbf16>
    %cst_16 = arith.constant dense<0.000000e+00> : vector<16x384xf32>
    %34 = tpu.matmul %31, %33, %cst_16 {dimension_numbers = #tpu.dot_dimension_numbers<[1], [0], [0], [1], [0, 0, 1, 1], [], []>} : vector<16x128xbf16>, vector<128x384xbf16>, vector<16x384xf32> -> vector<16x384xf32>
    %c0_17 = arith.constant 0 : index
    %c0_18 = arith.constant 0 : index
    %c0_19 = arith.constant 0 : index
    %35 = vector.load %arg11[%c0_17, %c0_18, %c0_19] : memref<1x1x384xf32, #tpu.memory_space<vmem>>, vector<1x1x384xf32>
    %36 = vector.shape_cast %35 : vector<1x1x384xf32> to vector<1x384xf32>
    %37 = vector.broadcast %36 : vector<1x384xf32> to vector<16x384xf32>
    %38 = arith.addf %34, %37 : vector<16x384xf32>
    %39 = vector.extract_strided_slice %38 {offsets = [0, 0], sizes = [16, 128], strides = [1, 1]} : vector<16x384xf32> to vector<16x128xf32>
    %cst_20 = arith.constant 0.176776692 : f32
    %40 = vector.broadcast %cst_20 : f32 to vector<16x128xf32>
    %41 = arith.mulf %39, %40 : vector<16x128xf32>
    %42 = arith.truncf %41 : vector<16x128xf32> to vector<16x128xbf16>
    %43 = vector.shape_cast %42 : vector<16x128xbf16> to vector<2x8x128xbf16>
    %44 = vector.extract_strided_slice %38 {offsets = [0, 128], sizes = [16, 128], strides = [1, 1]} : vector<16x384xf32> to vector<16x128xf32>
    %45 = arith.truncf %44 : vector<16x128xf32> to vector<16x128xbf16>
    %46 = vector.shape_cast %45 : vector<16x128xbf16> to vector<2x8x128xbf16>
    %47 = vector.extract_strided_slice %38 {offsets = [0, 256], sizes = [16, 128], strides = [1, 1]} : vector<16x384xf32> to vector<16x128xf32>
    %48 = arith.truncf %47 : vector<16x128xf32> to vector<16x128xbf16>
    %49 = vector.shape_cast %48 : vector<16x128xbf16> to vector<2x8x128xbf16>
    %50 = vector.extract_strided_slice %43 {offsets = [0, 0, 0], sizes = [2, 8, 32], strides = [1, 1, 1]} : vector<2x8x128xbf16> to vector<2x8x32xbf16>
    %51 = vector.extract_strided_slice %43 {offsets = [0, 0, 32], sizes = [2, 8, 32], strides = [1, 1, 1]} : vector<2x8x128xbf16> to vector<2x8x32xbf16>
    %52 = vector.extract_strided_slice %43 {offsets = [0, 0, 64], sizes = [2, 8, 32], strides = [1, 1, 1]} : vector<2x8x128xbf16> to vector<2x8x32xbf16>
    %53 = vector.extract_strided_slice %43 {offsets = [0, 0, 96], sizes = [2, 8, 32], strides = [1, 1, 1]} : vector<2x8x128xbf16> to vector<2x8x32xbf16>
    %54 = tpu.concatenate %50, %51, %52, %53 in 0 : vector<2x8x32xbf16>, vector<2x8x32xbf16>, vector<2x8x32xbf16>, vector<2x8x32xbf16> -> vector<8x8x32xbf16>
    %55 = vector.extract_strided_slice %46 {offsets = [0, 0, 0], sizes = [2, 8, 32], strides = [1, 1, 1]} : vector<2x8x128xbf16> to vector<2x8x32xbf16>
    %56 = vector.extract_strided_slice %46 {offsets = [0, 0, 32], sizes = [2, 8, 32], strides = [1, 1, 1]} : vector<2x8x128xbf16> to vector<2x8x32xbf16>
    %57 = vector.extract_strided_slice %46 {offsets = [0, 0, 64], sizes = [2, 8, 32], strides = [1, 1, 1]} : vector<2x8x128xbf16> to vector<2x8x32xbf16>
    %58 = vector.extract_strided_slice %46 {offsets = [0, 0, 96], sizes = [2, 8, 32], strides = [1, 1, 1]} : vector<2x8x128xbf16> to vector<2x8x32xbf16>
    %59 = tpu.concatenate %55, %56, %57, %58 in 0 : vector<2x8x32xbf16>, vector<2x8x32xbf16>, vector<2x8x32xbf16>, vector<2x8x32xbf16> -> vector<8x8x32xbf16>
    %60 = vector.extract_strided_slice %49 {offsets = [0, 0, 0], sizes = [2, 8, 32], strides = [1, 1, 1]} : vector<2x8x128xbf16> to vector<2x8x32xbf16>
    %61 = vector.extract_strided_slice %49 {offsets = [0, 0, 32], sizes = [2, 8, 32], strides = [1, 1, 1]} : vector<2x8x128xbf16> to vector<2x8x32xbf16>
    %62 = vector.extract_strided_slice %49 {offsets = [0, 0, 64], sizes = [2, 8, 32], strides = [1, 1, 1]} : vector<2x8x128xbf16> to vector<2x8x32xbf16>
    %63 = vector.extract_strided_slice %49 {offsets = [0, 0, 96], sizes = [2, 8, 32], strides = [1, 1, 1]} : vector<2x8x128xbf16> to vector<2x8x32xbf16>
    %64 = tpu.concatenate %60, %61, %62, %63 in 0 : vector<2x8x32xbf16>, vector<2x8x32xbf16>, vector<2x8x32xbf16>, vector<2x8x32xbf16> -> vector<8x8x32xbf16>
    "tpu.trace_start"() <{level = 10 : i32, message = "btd,bsd->bts"}> : () -> ()
    %cst_21 = arith.constant dense<0.000000e+00> : vector<8x8x8xf32>
    %65 = tpu.matmul %54, %59, %cst_21 {dimension_numbers = #tpu.dot_dimension_numbers<[2], [2], [1], [1], [0, 0, 0, 1, 1, 1], [0], [0]>} : vector<8x8x32xbf16>, vector<8x8x32xbf16>, vector<8x8x8xf32> -> vector<8x8x8xf32>
    "tpu.trace_stop"() : () -> ()
    %cst_22 = arith.constant dense<0xFF800000> : vector<8x8xf32>
    %66 = vector.multi_reduction <maximumf>, %65, %cst_22 [2] : vector<8x8x8xf32> to vector<8x8xf32>
    %67 = vector.shape_cast %66 : vector<8x8xf32> to vector<8x8x1xf32>
    %68 = vector.broadcast %67 : vector<8x8x1xf32> to vector<8x8x8xf32>
    %69 = arith.subf %65, %68 : vector<8x8x8xf32>
    %70 = math.exp %69 : vector<8x8x8xf32>
    %cst_23 = arith.constant dense<0.000000e+00> : vector<8x8xf32>
    %71 = vector.multi_reduction <add>, %70, %cst_23 [2] : vector<8x8x8xf32> to vector<8x8xf32>
    %72 = vector.shape_cast %71 : vector<8x8xf32> to vector<8x8x1xf32>
    %73 = arith.truncf %70 : vector<8x8x8xf32> to vector<8x8x8xbf16>
    "tpu.trace_start"() <{level = 10 : i32, message = "bts,bsd->btd"}> : () -> ()
    %cst_24 = arith.constant dense<0.000000e+00> : vector<8x8x32xf32>
    %74 = tpu.matmul %73, %64, %cst_24 {dimension_numbers = #tpu.dot_dimension_numbers<[2], [1], [1], [2], [0, 0, 0, 1, 1, 2], [0], [0]>} : vector<8x8x8xbf16>, vector<8x8x32xbf16>, vector<8x8x32xf32> -> vector<8x8x32xf32>
    "tpu.trace_stop"() : () -> ()
    %75 = tpu.reciprocal %72 {approx = true} : vector<8x8x1xf32> -> vector<8x8x1xf32>
    %76 = vector.broadcast %75 : vector<8x8x1xf32> to vector<8x8x32xf32>
    %77 = arith.mulf %74, %76 : vector<8x8x32xf32>
    %78 = vector.extract_strided_slice %77 {offsets = [0, 0, 0], sizes = [2, 8, 32], strides = [1, 1, 1]} : vector<8x8x32xf32> to vector<2x8x32xf32>
    %79 = vector.extract_strided_slice %77 {offsets = [2, 0, 0], sizes = [2, 8, 32], strides = [1, 1, 1]} : vector<8x8x32xf32> to vector<2x8x32xf32>
    %80 = vector.extract_strided_slice %77 {offsets = [4, 0, 0], sizes = [2, 8, 32], strides = [1, 1, 1]} : vector<8x8x32xf32> to vector<2x8x32xf32>
    %81 = vector.extract_strided_slice %77 {offsets = [6, 0, 0], sizes = [2, 8, 32], strides = [1, 1, 1]} : vector<8x8x32xf32> to vector<2x8x32xf32>
    %82 = tpu.concatenate %78, %79, %80, %81 in 2 : vector<2x8x32xf32>, vector<2x8x32xf32>, vector<2x8x32xf32>, vector<2x8x32xf32> -> vector<2x8x128xf32>
    %83 = vector.shape_cast %82 : vector<2x8x128xf32> to vector<16x128xf32>
    %84 = arith.truncf %83 : vector<16x128xf32> to vector<16x128xbf16>
    %c0_25 = arith.constant 0 : index
    %c0_26 = arith.constant 0 : index
    %c0_27 = arith.constant 0 : index
    %85 = vector.load %arg12[%c0_25, %c0_26, %c0_27] : memref<1x128x128xbf16, #tpu.memory_space<vmem>>, vector<1x128x128xbf16>
    %86 = vector.shape_cast %85 : vector<1x128x128xbf16> to vector<128x128xbf16>
    %cst_28 = arith.constant dense<0.000000e+00> : vector<16x128xf32>
    %87 = tpu.matmul %84, %86, %cst_28 {dimension_numbers = #tpu.dot_dimension_numbers<[1], [0], [0], [1], [0, 0, 1, 1], [], []>} : vector<16x128xbf16>, vector<128x128xbf16>, vector<16x128xf32> -> vector<16x128xf32>
    %c0_29 = arith.constant 0 : index
    %c0_30 = arith.constant 0 : index
    %c0_31 = arith.constant 0 : index
    %88 = vector.load %arg13[%c0_29, %c0_30, %c0_31] : memref<1x1x128xf32, #tpu.memory_space<vmem>>, vector<1x1x128xf32>
    %89 = vector.shape_cast %88 : vector<1x1x128xf32> to vector<1x128xf32>
    %90 = vector.broadcast %89 : vector<1x128xf32> to vector<16x128xf32>
    %91 = arith.addf %87, %90 : vector<16x128xf32>
    %92 = arith.addf %4, %91 : vector<16x128xf32>
    %c0_32 = arith.constant 0 : index
    %c0_33 = arith.constant 0 : index
    %c0_34 = arith.constant 0 : index
    %93 = vector.load %arg14[%c0_32, %c0_33, %c0_34] : memref<1x1x128xf32, #tpu.memory_space<vmem>>, vector<1x1x128xf32>
    %94 = vector.shape_cast %93 : vector<1x1x128xf32> to vector<1x128xf32>
    %c0_35 = arith.constant 0 : index
    %c0_36 = arith.constant 0 : index
    %c0_37 = arith.constant 0 : index
    %95 = vector.load %arg15[%c0_35, %c0_36, %c0_37] : memref<1x1x128xf32, #tpu.memory_space<vmem>>, vector<1x1x128xf32>
    %96 = vector.shape_cast %95 : vector<1x1x128xf32> to vector<1x128xf32>
    %cst_38 = arith.constant dense<0.000000e+00> : vector<16xf32>
    %97 = vector.multi_reduction <add>, %92, %cst_38 [1] : vector<16x128xf32> to vector<16xf32>
    %98 = vector.shape_cast %97 : vector<16xf32> to vector<16x1xf32>
    %cst_39 = arith.constant 1.280000e+02 : f32
    %99 = vector.broadcast %cst_39 : f32 to vector<16x1xf32>
    %100 = arith.divf %98, %99 : vector<16x1xf32>
    %101 = vector.broadcast %100 : vector<16x1xf32> to vector<16x128xf32>
    %102 = arith.subf %92, %101 : vector<16x128xf32>
    %103 = arith.mulf %102, %102 : vector<16x128xf32>
    %cst_40 = arith.constant dense<0.000000e+00> : vector<16xf32>
    %104 = vector.multi_reduction <add>, %103, %cst_40 [1] : vector<16x128xf32> to vector<16xf32>
    %105 = vector.shape_cast %104 : vector<16xf32> to vector<16x1xf32>
    %cst_41 = arith.constant 1.280000e+02 : f32
    %106 = vector.broadcast %cst_41 : f32 to vector<16x1xf32>
    %107 = arith.divf %105, %106 : vector<16x1xf32>
    %108 = vector.broadcast %100 : vector<16x1xf32> to vector<16x128xf32>
    %109 = arith.subf %92, %108 : vector<16x128xf32>
    %cst_42 = arith.constant 9.99999974E-6 : f32
    %110 = vector.broadcast %cst_42 : f32 to vector<16x1xf32>
    %111 = arith.addf %107, %110 : vector<16x1xf32>
    %112 = math.rsqrt %111 : vector<16x1xf32>
    %113 = vector.broadcast %112 : vector<16x1xf32> to vector<16x128xf32>
    %114 = arith.mulf %109, %113 : vector<16x128xf32>
    %115 = vector.broadcast %94 : vector<1x128xf32> to vector<16x128xf32>
    %116 = arith.mulf %114, %115 : vector<16x128xf32>
    %117 = vector.broadcast %96 : vector<1x128xf32> to vector<16x128xf32>
    %118 = arith.addf %116, %117 : vector<16x128xf32>
    %119 = arith.truncf %118 : vector<16x128xf32> to vector<16x128xbf16>
    %c0_43 = arith.constant 0 : index
    %c0_44 = arith.constant 0 : index
    %c0_45 = arith.constant 0 : index
    %120 = vector.load %arg16[%c0_43, %c0_44, %c0_45] : memref<1x128x256xbf16, #tpu.memory_space<vmem>>, vector<1x128x256xbf16>
    %121 = vector.shape_cast %120 : vector<1x128x256xbf16> to vector<128x256xbf16>
    %cst_46 = arith.constant dense<0.000000e+00> : vector<16x256xf32>
    %122 = tpu.matmul %119, %121, %cst_46 {dimension_numbers = #tpu.dot_dimension_numbers<[1], [0], [0], [1], [0, 0, 1, 1], [], []>} : vector<16x128xbf16>, vector<128x256xbf16>, vector<16x256xf32> -> vector<16x256xf32>
    %c0_47 = arith.constant 0 : index
    %c0_48 = arith.constant 0 : index
    %c0_49 = arith.constant 0 : index
    %123 = vector.load %arg17[%c0_47, %c0_48, %c0_49] : memref<1x1x256xf32, #tpu.memory_space<vmem>>, vector<1x1x256xf32>
    %124 = vector.shape_cast %123 : vector<1x1x256xf32> to vector<1x256xf32>
    %125 = vector.broadcast %124 : vector<1x256xf32> to vector<16x256xf32>
    %126 = arith.addf %122, %125 : vector<16x256xf32>
    %cst_50 = arith.constant 0.000000e+00 : f32
    %127 = vector.broadcast %cst_50 : f32 to vector<16x256xf32>
    %128 = arith.maximumf %126, %127 : vector<16x256xf32>
    %129 = arith.truncf %128 : vector<16x256xf32> to vector<16x256xbf16>
    %c0_51 = arith.constant 0 : index
    %c0_52 = arith.constant 0 : index
    %c0_53 = arith.constant 0 : index
    %130 = vector.load %arg18[%c0_51, %c0_52, %c0_53] : memref<1x256x128xbf16, #tpu.memory_space<vmem>>, vector<1x256x128xbf16>
    %131 = vector.shape_cast %130 : vector<1x256x128xbf16> to vector<256x128xbf16>
    %cst_54 = arith.constant dense<0.000000e+00> : vector<16x128xf32>
    %132 = tpu.matmul %129, %131, %cst_54 {dimension_numbers = #tpu.dot_dimension_numbers<[1], [0], [0], [1], [0, 0, 1, 1], [], []>} : vector<16x256xbf16>, vector<256x128xbf16>, vector<16x128xf32> -> vector<16x128xf32>
    %c0_55 = arith.constant 0 : index
    %c0_56 = arith.constant 0 : index
    %c0_57 = arith.constant 0 : index
    %133 = vector.load %arg19[%c0_55, %c0_56, %c0_57] : memref<1x1x128xf32, #tpu.memory_space<vmem>>, vector<1x1x128xf32>
    %134 = vector.shape_cast %133 : vector<1x1x128xf32> to vector<1x128xf32>
    %135 = vector.broadcast %134 : vector<1x128xf32> to vector<16x128xf32>
    %136 = arith.addf %132, %135 : vector<16x128xf32>
    %137 = arith.addf %92, %136 : vector<16x128xf32>
    %138 = vector.shape_cast %137 : vector<16x128xf32> to vector<2x8x128xf32>
    %c0_58 = arith.constant 0 : index
    %c0_59 = arith.constant 0 : index
    %c0_60 = arith.constant 0 : index
    %139 = vector.load %arg20[%c0_58, %c0_59, %c0_60] : memref<2x8x128xf32, #tpu.memory_space<vmem>>, vector<2x8x128xf32>
    tpu.vector_store %arg20[%c0_58, %c0_59, %c0_60], %138 {strides = array<i32>} : memref<2x8x128xf32, #tpu.memory_space<vmem>>, vector<2x8x128xf32>,
    return
  }
  func.func @transform_0(%arg0: i32, %arg1: i32) -> (i32, i32, i32) {
    %c0_i32 = arith.constant 0 : i32
    %c0_i32_0 = arith.constant 0 : i32
    %c0_i32_1 = arith.constant 0 : i32
    return %arg0, %c0_i32, %c0_i32_0 : i32, i32, i32
  }
  func.func @transform_1(%arg0: i32, %arg1: i32) -> (i32, i32) {
    %c0_i32 = arith.constant 0 : i32
    %c0_i32_0 = arith.constant 0 : i32
    %c0_i32_1 = arith.constant 0 : i32
    return %c0_i32, %c0_i32_0 : i32, i32
  }
  func.func @transform_2(%arg0: i32, %arg1: i32) -> (i32, i32) {
    %c0_i32 = arith.constant 0 : i32
    %c0_i32_0 = arith.constant 0 : i32
    %c0_i32_1 = arith.constant 0 : i32
    return %c0_i32, %c0_i32_0 : i32, i32
  }
  func.func @transform_3(%arg0: i32, %arg1: i32) -> (i32, i32) {
    %c0_i32 = arith.constant 0 : i32
    %c0_i32_0 = arith.constant 0 : i32
    %c0_i32_1 = arith.constant 0 : i32
    return %c0_i32, %c0_i32_0 : i32, i32
  }
  func.func @transform_4(%arg0: i32, %arg1: i32) -> (i32, i32) {
    %c0_i32 = arith.constant 0 : i32
    %c0_i32_0 = arith.constant 0 : i32
    %c0_i32_1 = arith.constant 0 : i32
    return %c0_i32, %c0_i32_0 : i32, i32
  }
  func.func @transform_5(%arg0: i32, %arg1: i32) -> (i32, i32) {
    %c0_i32 = arith.constant 0 : i32
    %c0_i32_0 = arith.constant 0 : i32
    %c0_i32_1 = arith.constant 0 : i32
    return %c0_i32, %c0_i32_0 : i32, i32
  }
  func.func @transform_6(%arg0: i32, %arg1: i32) -> (i32, i32, i32) {
    %c0_i32 = arith.constant 0 : i32
    %c0_i32_0 = arith.constant 0 : i32
    %c0_i32_1 = arith.constant 0 : i32
    return %arg1, %c0_i32, %c0_i32_0 : i32, i32, i32
  }
  func.func @transform_7(%arg0: i32, %arg1: i32) -> (i32, i32, i32) {
    %c0_i32 = arith.constant 0 : i32
    %c0_i32_0 = arith.constant 0 : i32
    %c0_i32_1 = arith.constant 0 : i32
    return %arg1, %c0_i32, %c0_i32_0 : i32, i32, i32
  }
  func.func @transform_8(%arg0: i32, %arg1: i32) -> (i32, i32, i32) {
    %c0_i32 = arith.constant 0 : i32
    %c0_i32_0 = arith.constant 0 : i32
    %c0_i32_1 = arith.constant 0 : i32
    return %arg1, %c0_i32, %c0_i32_0 : i32, i32, i32
  }
  func.func @transform_9(%arg0: i32, %arg1: i32) -> (i32, i32, i32) {
    %c0_i32 = arith.constant 0 : i32
    %c0_i32_0 = arith.constant 0 : i32
    %c0_i32_1 = arith.constant 0 : i32
    return %arg1, %c0_i32, %c0_i32_0 : i32, i32, i32
  }
  func.func @transform_10(%arg0: i32, %arg1: i32) -> (i32, i32, i32) {
    %c0_i32 = arith.constant 0 : i32
    %c0_i32_0 = arith.constant 0 : i32
    %c0_i32_1 = arith.constant 0 : i32
    return %arg1, %c0_i32, %c0_i32_0 : i32, i32, i32
  }
  func.func @transform_11(%arg0: i32, %arg1: i32) -> (i32, i32, i32) {
    %c0_i32 = arith.constant 0 : i32
    %c0_i32_0 = arith.constant 0 : i32
    %c0_i32_1 = arith.constant 0 : i32
    return %arg1, %c0_i32, %c0_i32_0 : i32, i32, i32
  }
  func.func @transform_12(%arg0: i32, %arg1: i32) -> (i32, i32, i32) {
    %c0_i32 = arith.constant 0 : i32
    %c0_i32_0 = arith.constant 0 : i32
    %c0_i32_1 = arith.constant 0 : i32
    return %arg1, %c0_i32, %c0_i32_0 : i32, i32, i32
  }
  func.func @transform_13(%arg0: i32, %arg1: i32) -> (i32, i32, i32) {
    %c0_i32 = arith.constant 0 : i32
    %c0_i32_0 = arith.constant 0 : i32
    %c0_i32_1 = arith.constant 0 : i32
    return %arg1, %c0_i32, %c0_i32_0 : i32, i32, i32
  }
  func.func @transform_14(%arg0: i32, %arg1: i32) -> (i32, i32, i32) {
    %c0_i32 = arith.constant 0 : i32
    %c0_i32_0 = arith.constant 0 : i32
    %c0_i32_1 = arith.constant 0 : i32
    return %arg1, %c0_i32, %c0_i32_0 : i32, i32, i32
  }
  func.func @transform_15(%arg0: i32, %arg1: i32) -> (i32, i32, i32) {
    %c0_i32 = arith.constant 0 : i32
    %c0_i32_0 = arith.constant 0 : i32
    %c0_i32_1 = arith.constant 0 : i32
    return %arg1, %c0_i32, %c0_i32_0 : i32, i32, i32
  }
  func.func @transform_16(%arg0: i32, %arg1: i32) -> (i32, i32, i32) {
    %c0_i32 = arith.constant 0 : i32
    %c0_i32_0 = arith.constant 0 : i32
    %c0_i32_1 = arith.constant 0 : i32
    return %arg1, %c0_i32, %c0_i32_0 : i32, i32, i32
  }
  func.func @transform_17(%arg0: i32, %arg1: i32) -> (i32, i32, i32) {
    %c0_i32 = arith.constant 0 : i32
    %c0_i32_0 = arith.constant 0 : i32
    %c0_i32_1 = arith.constant 0 : i32
    return %arg1, %c0_i32, %c0_i32_0 : i32, i32, i32
  }
  func.func @transform_18(%arg0: i32, %arg1: i32) -> (i32, i32, i32) {
    %c0_i32 = arith.constant 0 : i32
    %c0_i32_0 = arith.constant 0 : i32
    %c0_i32_1 = arith.constant 0 : i32
    return %arg0, %c0_i32, %c0_i32_0 : i32, i32, i32
  }
}

</mosaic_0001>

<llo_original>
// kernel: tpu_custom_call.1
$region0: #{tpu_custom_call.1}
  #allocation0 [shape = 'u32[]', space=smem, size = 0x4, offset = 0x4, fixed_abs, tag = 'smem constant byte address 0x4 - core index']
  #allocation1 [shape = 'u32[144,128]{1,0:T(1,128)}', space=vmem, size = 0x12000, scoped, tag = 'internal scratch']
  %s0 = inlined_call_operand.hbm [shape: f32[2,8,16], index: 0, kind: input, shape index: {}]
  %s1 = inlined_call_operand.hbm [shape: bf16[16,128], index: 1, kind: input, shape index: {}]
  %s2 = inlined_call_operand.hbm [shape: f32[1,128], index: 2, kind: input, shape index: {}]
  %s3 = inlined_call_operand.hbm [shape: f32[1,128], index: 3, kind: input, shape index: {}]
  %s4 = inlined_call_operand.hbm [shape: f32[1,128], index: 4, kind: input, shape index: {}]
  %s5 = inlined_call_operand.vmem [shape: f32[8,128], index: 5, kind: input, shape index: {}]
  %s6 = inlined_call_operand.hbm [shape: f32[2,1,128], index: 6, kind: input, shape index: {}]
  %s7 = inlined_call_operand.hbm [shape: f32[2,1,128], index: 7, kind: input, shape index: {}]
  %s8 = inlined_call_operand.hbm [shape: bf16[2,128,384], index: 8, kind: input, shape index: {}]
  %s9 = inlined_call_operand.vmem [shape: f32[2,1,384], index: 9, kind: input, shape index: {}]
  %s10 = inlined_call_operand.hbm [shape: bf16[2,128,128], index: 10, kind: input, shape index: {}]
  %s11 = inlined_call_operand.vmem [shape: f32[2,1,128], index: 11, kind: input, shape index: {}]
  %s12 = inlined_call_operand.hbm [shape: f32[2,1,128], index: 12, kind: input, shape index: {}]
  %s13 = inlined_call_operand.vmem [shape: f32[2,1,128], index: 13, kind: input, shape index: {}]
  %s14 = inlined_call_operand.hbm [shape: bf16[2,128,256], index: 14, kind: input, shape index: {}]
  %s15 = inlined_call_operand.vmem [shape: f32[2,1,256], index: 15, kind: input, shape index: {}]
  %s16 = inlined_call_operand.hbm [shape: bf16[2,256,128], index: 16, kind: input, shape index: {}]
  %s17 = inlined_call_operand.vmem [shape: f32[2,1,128], index: 17, kind: input, shape index: {}]
  %s18 = inlined_call_operand.hbm [shape: f32[2,8,128], index: 18, kind: output, shape index: {}]
  %s19 = sld [smem:[#allocation0]]
  $region157: #{tpu_custom_call.1} parent=0
    _
  %s21 = ssub.s32 1, %s19
  %s22 = scalar_select 0, %s21, %s19
  $region1: #{tpu_custom_call.1} parent=0
    #allocation2 [shape = 'u8[8192]{0}', space=vmem, size = 0x2000, scoped, tag = 'input window, operand 0, single buffered']
    #allocation3 [shape = 's32[2]{0}', space=sflag, size = 0x8, scoped, tag = 'scoped memory for tpu_custom_call.1']
    #allocation4 [shape = 's32[2]{0}', space=sflag, size = 0x8, scoped, tag = 'scoped memory for tpu_custom_call.1']
    #allocation5 [shape = 'u8[4096]{0}', space=vmem, size = 0x1000, scoped, tag = 'input window, operand 1, single buffered']
    #allocation6 [shape = 's32[1]{0}', space=sflag, size = 0x4, scoped, tag = 'scoped memory for tpu_custom_call.1']
    #allocation7 [shape = 'u8[512]{0}', space=vmem, size = 0x400, scoped, tag = 'input window, operand 2, single buffered']
    #allocation8 [shape = 'u8[512]{0}', space=vmem, size = 0x400, scoped, tag = 'input window, operand 3, single buffered']
    #allocation9 [shape = 's32[1]{0}', space=sflag, size = 0x4, scoped, tag = 'scoped memory for tpu_custom_call.1']
    #allocation10 [shape = 'u8[512]{0}', space=vmem, size = 0x400, scoped, tag = 'input window, operand 4, single buffered']
    #allocation11 [shape = 'u8[1024]{0}', space=vmem, size = 0x400, scoped, tag = 'input window, operand 6']
    #allocation12 [shape = 's32[2]{0}', space=sflag, size = 0x8, scoped, tag = 'scoped memory for tpu_custom_call.1']
    #allocation13 [shape = 'u8[1024]{0}', space=vmem, size = 0x400, scoped, tag = 'input window, operand 7']
    #allocation14 [shape = 'u8[196608]{0}', space=vmem, size = 0x30000, scoped, tag = 'input window, operand 8']
    #allocation15 [shape = 's32[2]{0}', space=sflag, size = 0x8, scoped, tag = 'scoped memory for tpu_custom_call.1']
    #allocation16 [shape = 'u8[65536]{0}', space=vmem, size = 0x10000, scoped, tag = 'input window, operand 10']
    #allocation17 [shape = 'u8[1024]{0}', space=vmem, size = 0x400, scoped, tag = 'input window, operand 12']
    #allocation18 [shape = 's32[2]{0}', space=sflag, size = 0x8, scoped, tag = 'scoped memory for tpu_custom_call.1']
    #allocation19 [shape = 'u8[131072]{0}', space=vmem, size = 0x20000, scoped, tag = 'input window, operand 14']
    #allocation20 [shape = 'u8[131072]{0}', space=vmem, size = 0x20000, scoped, tag = 'input window, operand 16']
    #allocation21 [shape = 's32[2]{0}', space=sflag, size = 0x8, scoped, tag = 'scoped memory for tpu_custom_call.1']
    #allocation22 [shape = 'u8[8192]{0}', space=vmem, size = 0x2000, scoped, tag = 'output window, operand 0, single buffered']
    %23 = vsyncpa [#allocation3], 0
    %24 = vsyncpa [#allocation6], 0
    %25 = vsyncpa [#allocation9], 0
    %26 = vsyncpa [#allocation12], 0
    %s27 = scalar_lea.sflag [#allocation12], 1
    %28 = vsyncpa %s27, 0
    %29 = vsyncpa [#allocation15], 0
    %s30 = scalar_lea.sflag [#allocation15], 1
    %31 = vsyncpa %s30, 0
    %32 = vsyncpa [#allocation18], 0
    %s33 = scalar_lea.sflag [#allocation18], 1
    %34 = vsyncpa %s33, 0
    %35 = vsyncpa [#allocation21], 0
    %s36 = scalar_lea.sflag [#allocation21], 1
    %37 = vsyncpa %s36, 0
    %38 = vsyncpa [#allocation4], 0
    loop: start=0, step=1, limit=4
    $region2: #{tpu_custom_call.1} parent=1 // loop_pre_header
      _
    $region3: #{tpu_custom_call.1} parent=1 // loop_header
      %s40 = sphi 0, %s44
      %p41 = scmp.ge.s32.totalorder %s40, 4
      %s47 = sphi 0, %s59
      %s48 = sphi 0, %s55
      %s49 = sphi 0, %s47
      %s50 = sphi 0, %s48
      %s51 = sphi 0, %s49
      %s52 = sphi 0, %s50
      %s62 = sphi 0, %s64
      %s65 = sphi 0, %s62
      %s66 = sphi 0, %s65
      %s82 = sphi 0, %s66
      %s86 = sphi 0, %s86
      %s88 = sphi 0, %s86
      %s89 = sphi 0, %s88
      %s103 = sphi 0, %s89
      %s107 = sphi 0, %s107
      %s109 = sphi 0, %s107
      %s110 = sphi 0, %s109
      %s124 = sphi 0, %s110
      %s128 = sphi 0, %s128
      %s130 = sphi 0, %s128
      %s131 = sphi 0, %s130
      %s145 = sphi 0, %s131
      %s149 = sphi 0, %s149
      %s151 = sphi 0, %s149
      %s152 = sphi 0, %s151
      %s166 = sphi 0, %s152
      %s170 = sphi 0, %s170
      %s172 = sphi 0, %s170
      %s173 = sphi 0, %s172
      %s187 = sphi 0, %s173
      %s193 = sphi 0, %s195
      %s196 = sphi 0, %s193
      %s197 = sphi 0, %s196
      %s213 = sphi 0, %s197
      %s219 = sphi 0, %s221
      %s222 = sphi 0, %s219
      %s223 = sphi 0, %s222
      %s239 = sphi 0, %s223
      %s245 = sphi 0, %s247
      %s248 = sphi 0, %s245
      %s249 = sphi 0, %s248
      %s265 = sphi 0, %s249
      %s271 = sphi 0, %s273
      %s274 = sphi 0, %s271
      %s275 = sphi 0, %s274
      %s291 = sphi 0, %s275
      %s297 = sphi 0, %s299
      %s300 = sphi 0, %s297
      %s301 = sphi 0, %s300
      %s317 = sphi 0, %s301
      %s323 = sphi 0, %s325
      %s326 = sphi 0, %s323
      %s327 = sphi 0, %s326
      %s343 = sphi 0, %s327
      %s349 = sphi 0, %s351
      %s352 = sphi 0, %s349
      %s353 = sphi 0, %s352
      %s369 = sphi 0, %s353
      %s375 = sphi 0, %s377
      %s378 = sphi 0, %s375
      %s379 = sphi 0, %s378
      %s395 = sphi 0, %s379
      %s401 = sphi 0, %s403
      %s404 = sphi 0, %s401
      %s405 = sphi 0, %s404
      %s421 = sphi 0, %s405
      %s427 = sphi 0, %s429
      %s430 = sphi 0, %s427
      %s431 = sphi 0, %s430
      %s447 = sphi 0, %s431
      %s453 = sphi 0, %s455
      %s456 = sphi 0, %s453
      %s457 = sphi 0, %s456
      %s473 = sphi 0, %s457
      %s479 = sphi 0, %s481
      %s482 = sphi 0, %s479
      %s483 = sphi 0, %s482
      %s499 = sphi 0, %s483
      %s505 = sphi 0, %s507
      %s508 = sphi 0, %s505
      %s509 = sphi 0, %s508
      %s525 = sphi 0, %s509
    $region4: #{tpu_custom_call.1} parent=1 // loop_header_branch
      %43 = sbr.rel (%p41) target = $region8
    $region5: #{tpu_custom_call.1} parent=1 // loop_body
      %s45 = ssub.s32 %s40, 1
      %s46 = ssub.s32 %s40, 2
      %s53 = sadd.s32 1, %s48
      %p54 = scmp.ge.s32.totalorder %s53, 2
      %s55 = scalar_select %p54, 0, %s53
      %s56 = sadd.s32 1, %s47
      %s57 = scalar_select %p54, %s56, %s47
      %p58 = scmp.ge.s32.totalorder %s57, 1
      %s59 = scalar_select %p58, 0, %s57
      %s60 = ssub.s32 %s47, %s59
      %p61 = scmp.eq.s32.totalorder %s60, 0
      %s63 = sadd.s32 %s62, 1
      %s64 = scalar_select %p61, %s62, %s63
      %p67 = pneg %p61
      %p68 = scmp.eq.s32.totalorder %s40, 1
      %p69 = por %p67, %p68
      %p70 = scmp.ne.s32.totalorder %s62, %s65
      %p71 = scmp.eq.s32.totalorder %s40, 0
      %p72 = por %p70, %p71
      %p73 = scmp.ne.s32.totalorder %s62, %s65
      %p74 = scmp.eq.s32.totalorder %s45, 1
      %p75 = por %p73, %p74
      %p76 = scmp.ne.s32.totalorder %s65, %s66
      %p77 = scmp.eq.s32.totalorder %s45, 0
      %p78 = por %p76, %p77
      %p79 = scmp.ne.s32.totalorder %s65, %s66
      %p80 = scmp.eq.s32.totalorder %s46, 1
      %p81 = por %p79, %p80
      %p83 = scmp.ne.s32.totalorder %s66, %s82
      %p84 = scmp.eq.s32.totalorder %s46, 0
      %p85 = por %p83, %p84
      %s87 = sadd.s32 %s86, 1
      %p90 = scmp.eq.s32.totalorder %s40, 1
      %p91 = scmp.ne.s32.totalorder %s86, %s88
      %p92 = scmp.eq.s32.totalorder %s40, 0
      %p93 = por %p91, %p92
      %p94 = scmp.ne.s32.totalorder %s86, %s88
      %p95 = scmp.eq.s32.totalorder %s45, 1
      %p96 = por %p94, %p95
      %p97 = scmp.ne.s32.totalorder %s88, %s89
      %p98 = scmp.eq.s32.totalorder %s45, 0
      %p99 = por %p97, %p98
      %p100 = scmp.ne.s32.totalorder %s88, %s89
      %p101 = scmp.eq.s32.totalorder %s46, 1
      %p102 = por %p100, %p101
      %p104 = scmp.ne.s32.totalorder %s89, %s103
      %p105 = scmp.eq.s32.totalorder %s46, 0
      %p106 = por %p104, %p105
      %s108 = sadd.s32 %s107, 1
      %p111 = scmp.eq.s32.totalorder %s40, 1
      %p112 = scmp.ne.s32.totalorder %s107, %s109
      %p113 = scmp.eq.s32.totalorder %s40, 0
      %p114 = por %p112, %p113
      %p115 = scmp.ne.s32.totalorder %s107, %s109
      %p116 = scmp.eq.s32.totalorder %s45, 1
      %p117 = por %p115, %p116
      %p118 = scmp.ne.s32.totalorder %s109, %s110
      %p119 = scmp.eq.s32.totalorder %s45, 0
      %p120 = por %p118, %p119
      %p121 = scmp.ne.s32.totalorder %s109, %s110
      %p122 = scmp.eq.s32.totalorder %s46, 1
      %p123 = por %p121, %p122
      %p125 = scmp.ne.s32.totalorder %s110, %s124
      %p126 = scmp.eq.s32.totalorder %s46, 0
      %p127 = por %p125, %p126
      %s129 = sadd.s32 %s128, 1
      %p132 = scmp.eq.s32.totalorder %s40, 1
      %p133 = scmp.ne.s32.totalorder %s128, %s130
      %p134 = scmp.eq.s32.totalorder %s40, 0
      %p135 = por %p133, %p134
      %p136 = scmp.ne.s32.totalorder %s128, %s130
      %p137 = scmp.eq.s32.totalorder %s45, 1
      %p138 = por %p136, %p137
      %p139 = scmp.ne.s32.totalorder %s130, %s131
      %p140 = scmp.eq.s32.totalorder %s45, 0
      %p141 = por %p139, %p140
      %p142 = scmp.ne.s32.totalorder %s130, %s131
      %p143 = scmp.eq.s32.totalorder %s46, 1
      %p144 = por %p142, %p143
      %p146 = scmp.ne.s32.totalorder %s131, %s145
      %p147 = scmp.eq.s32.totalorder %s46, 0
      %p148 = por %p146, %p147
      %s150 = sadd.s32 %s149, 1
      %p153 = scmp.eq.s32.totalorder %s40, 1
      %p154 = scmp.ne.s32.totalorder %s149, %s151
      %p155 = scmp.eq.s32.totalorder %s40, 0
      %p156 = por %p154, %p155
      %p157 = scmp.ne.s32.totalorder %s149, %s151
      %p158 = scmp.eq.s32.totalorder %s45, 1
      %p159 = por %p157, %p158
      %p160 = scmp.ne.s32.totalorder %s151, %s152
      %p161 = scmp.eq.s32.totalorder %s45, 0
      %p162 = por %p160, %p161
      %p163 = scmp.ne.s32.totalorder %s151, %s152
      %p164 = scmp.eq.s32.totalorder %s46, 1
      %p165 = por %p163, %p164
      %p167 = scmp.ne.s32.totalorder %s152, %s166
      %p168 = scmp.eq.s32.totalorder %s46, 0
      %p169 = por %p167, %p168
      %s171 = sadd.s32 %s170, 1
      %p174 = scmp.eq.s32.totalorder %s40, 1
      %p175 = scmp.ne.s32.totalorder %s170, %s172
      %p176 = scmp.eq.s32.totalorder %s40, 0
      %p177 = por %p175, %p176
      %p178 = scmp.ne.s32.totalorder %s170, %s172
      %p179 = scmp.eq.s32.totalorder %s45, 1
      %p180 = por %p178, %p179
      %p181 = scmp.ne.s32.totalorder %s172, %s173
      %p182 = scmp.eq.s32.totalorder %s45, 0
      %p183 = por %p181, %p182
      %p184 = scmp.ne.s32.totalorder %s172, %s173
      %p185 = scmp.eq.s32.totalorder %s46, 1
      %p186 = por %p184, %p185
      %p188 = scmp.ne.s32.totalorder %s173, %s187
      %p189 = scmp.eq.s32.totalorder %s46, 0
      %p190 = por %p188, %p189
      %s191 = ssub.s32 %s48, %s55
      %p192 = scmp.eq.s32.totalorder %s191, 0
      %s194 = sadd.s32 %s193, 1
      %s195 = scalar_select %p192, %s193, %s194
      %p198 = pneg %p192
      %p199 = scmp.eq.s32.totalorder %s40, 1
      %p200 = por %p198, %p199
      %p201 = scmp.ne.s32.totalorder %s193, %s196
      %p202 = scmp.eq.s32.totalorder %s40, 0
      %p203 = por %p201, %p202
      %p204 = scmp.ne.s32.totalorder %s193, %s196
      %p205 = scmp.eq.s32.totalorder %s45, 1
      %p206 = por %p204, %p205
      %p207 = scmp.ne.s32.totalorder %s196, %s197
      %p208 = scmp.eq.s32.totalorder %s45, 0
      %p209 = por %p207, %p208
      %p210 = scmp.ne.s32.totalorder %s196, %s197
      %p211 = scmp.eq.s32.totalorder %s46, 1
      %p212 = por %p210, %p211
      %p214 = scmp.ne.s32.totalorder %s197, %s213
      %p215 = scmp.eq.s32.totalorder %s46, 0
      %p216 = por %p214, %p215
      %s217 = ssub.s32 %s48, %s55
      %p218 = scmp.eq.s32.totalorder %s217, 0
      %s220 = sadd.s32 %s219, 1
      %s221 = scalar_select %p218, %s219, %s220
      %p224 = pneg %p218
      %p225 = scmp.eq.s32.totalorder %s40, 1
      %p226 = por %p224, %p225
      %p227 = scmp.ne.s32.totalorder %s219, %s222
      %p228 = scmp.eq.s32.totalorder %s40, 0
      %p229 = por %p227, %p228
      %p230 = scmp.ne.s32.totalorder %s219, %s222
      %p231 = scmp.eq.s32.totalorder %s45, 1
      %p232 = por %p230, %p231
      %p233 = scmp.ne.s32.totalorder %s222, %s223
      %p234 = scmp.eq.s32.totalorder %s45, 0
      %p235 = por %p233, %p234
      %p236 = scmp.ne.s32.totalorder %s222, %s223
      %p237 = scmp.eq.s32.totalorder %s46, 1
      %p238 = por %p236, %p237
      %p240 = scmp.ne.s32.totalorder %s223, %s239
      %p241 = scmp.eq.s32.totalorder %s46, 0
      %p242 = por %p240, %p241
      %s243 = ssub.s32 %s48, %s55
      %p244 = scmp.eq.s32.totalorder %s243, 0
      %s246 = sadd.s32 %s245, 1
      %s247 = scalar_select %p244, %s245, %s246
      %p250 = pneg %p244
      %p251 = scmp.eq.s32.totalorder %s40, 1
      %p252 = por %p250, %p251
      %p253 = scmp.ne.s32.totalorder %s245, %s248
      %p254 = scmp.eq.s32.totalorder %s40, 0
      %p255 = por %p253, %p254
      %p256 = scmp.ne.s32.totalorder %s245, %s248
      %p257 = scmp.eq.s32.totalorder %s45, 1
      %p258 = por %p256, %p257
      %p259 = scmp.ne.s32.totalorder %s248, %s249
      %p260 = scmp.eq.s32.totalorder %s45, 0
      %p261 = por %p259, %p260
      %p262 = scmp.ne.s32.totalorder %s248, %s249
      %p263 = scmp.eq.s32.totalorder %s46, 1
      %p264 = por %p262, %p263
      %p266 = scmp.ne.s32.totalorder %s249, %s265
      %p267 = scmp.eq.s32.totalorder %s46, 0
      %p268 = por %p266, %p267
      %s269 = ssub.s32 %s48, %s55
      %p270 = scmp.eq.s32.totalorder %s269, 0
      %s272 = sadd.s32 %s271, 1
      %s273 = scalar_select %p270, %s271, %s272
      %p276 = pneg %p270
      %p277 = scmp.eq.s32.totalorder %s40, 1
      %p278 = por %p276, %p277
      %p279 = scmp.ne.s32.totalorder %s271, %s274
      %p280 = scmp.eq.s32.totalorder %s40, 0
      %p281 = por %p279, %p280
      %p282 = scmp.ne.s32.totalorder %s271, %s274
      %p283 = scmp.eq.s32.totalorder %s45, 1
      %p284 = por %p282, %p283
      %p285 = scmp.ne.s32.totalorder %s274, %s275
      %p286 = scmp.eq.s32.totalorder %s45, 0
      %p287 = por %p285, %p286
      %p288 = scmp.ne.s32.totalorder %s274, %s275
      %p289 = scmp.eq.s32.totalorder %s46, 1
      %p290 = por %p288, %p289
      %p292 = scmp.ne.s32.totalorder %s275, %s291
      %p293 = scmp.eq.s32.totalorder %s46, 0
      %p294 = por %p292, %p293
      %s295 = ssub.s32 %s48, %s55
      %p296 = scmp.eq.s32.totalorder %s295, 0
      %s298 = sadd.s32 %s297, 1
      %s299 = scalar_select %p296, %s297, %s298
      %p302 = pneg %p296
      %p303 = scmp.eq.s32.totalorder %s40, 1
      %p304 = por %p302, %p303
      %p305 = scmp.ne.s32.totalorder %s297, %s300
      %p306 = scmp.eq.s32.totalorder %s40, 0
      %p307 = por %p305, %p306
      %p308 = scmp.ne.s32.totalorder %s297, %s300
      %p309 = scmp.eq.s32.totalorder %s45, 1
      %p310 = por %p308, %p309
      %p311 = scmp.ne.s32.totalorder %s300, %s301
      %p312 = scmp.eq.s32.totalorder %s45, 0
      %p313 = por %p311, %p312
      %p314 = scmp.ne.s32.totalorder %s300, %s301
      %p315 = scmp.eq.s32.totalorder %s46, 1
      %p316 = por %p314, %p315
      %p318 = scmp.ne.s32.totalorder %s301, %s317
      %p319 = scmp.eq.s32.totalorder %s46, 0
      %p320 = por %p318, %p319
      %s321 = ssub.s32 %s48, %s55
      %p322 = scmp.eq.s32.totalorder %s321, 0
      %s324 = sadd.s32 %s323, 1
      %s325 = scalar_select %p322, %s323, %s324
      %p328 = pneg %p322
      %p329 = scmp.eq.s32.totalorder %s40, 1
      %p330 = por %p328, %p329
      %p331 = scmp.ne.s32.totalorder %s323, %s326
      %p332 = scmp.eq.s32.totalorder %s40, 0
      %p333 = por %p331, %p332
      %p334 = scmp.ne.s32.totalorder %s323, %s326
      %p335 = scmp.eq.s32.totalorder %s45, 1
      %p336 = por %p334, %p335
      %p337 = scmp.ne.s32.totalorder %s326, %s327
      %p338 = scmp.eq.s32.totalorder %s45, 0
      %p339 = por %p337, %p338
      %p340 = scmp.ne.s32.totalorder %s326, %s327
      %p341 = scmp.eq.s32.totalorder %s46, 1
      %p342 = por %p340, %p341
      %p344 = scmp.ne.s32.totalorder %s327, %s343
      %p345 = scmp.eq.s32.totalorder %s46, 0
      %p346 = por %p344, %p345
      %s347 = ssub.s32 %s48, %s55
      %p348 = scmp.eq.s32.totalorder %s347, 0
      %s350 = sadd.s32 %s349, 1
      %s351 = scalar_select %p348, %s349, %s350
      %p354 = pneg %p348
      %p355 = scmp.eq.s32.totalorder %s40, 1
      %p356 = por %p354, %p355
      %p357 = scmp.ne.s32.totalorder %s349, %s352
      %p358 = scmp.eq.s32.totalorder %s40, 0
      %p359 = por %p357, %p358
      %p360 = scmp.ne.s32.totalorder %s349, %s352
      %p361 = scmp.eq.s32.totalorder %s45, 1
      %p362 = por %p360, %p361
      %p363 = scmp.ne.s32.totalorder %s352, %s353
      %p364 = scmp.eq.s32.totalorder %s45, 0
      %p365 = por %p363, %p364
      %p366 = scmp.ne.s32.totalorder %s352, %s353
      %p367 = scmp.eq.s32.totalorder %s46, 1
      %p368 = por %p366, %p367
      %p370 = scmp.ne.s32.totalorder %s353, %s369
      %p371 = scmp.eq.s32.totalorder %s46, 0
      %p372 = por %p370, %p371
      %s373 = ssub.s32 %s48, %s55
      %p374 = scmp.eq.s32.totalorder %s373, 0
      %s376 = sadd.s32 %s375, 1
      %s377 = scalar_select %p374, %s375, %s376
      %p380 = pneg %p374
      %p381 = scmp.eq.s32.totalorder %s40, 1
      %p382 = por %p380, %p381
      %p383 = scmp.ne.s32.totalorder %s375, %s378
      %p384 = scmp.eq.s32.totalorder %s40, 0
      %p385 = por %p383, %p384
      %p386 = scmp.ne.s32.totalorder %s375, %s378
      %p387 = scmp.eq.s32.totalorder %s45, 1
      %p388 = por %p386, %p387
      %p389 = scmp.ne.s32.totalorder %s378, %s379
      %p390 = scmp.eq.s32.totalorder %s45, 0
      %p391 = por %p389, %p390
      %p392 = scmp.ne.s32.totalorder %s378, %s379
      %p393 = scmp.eq.s32.totalorder %s46, 1
      %p394 = por %p392, %p393
      %p396 = scmp.ne.s32.totalorder %s379, %s395
      %p397 = scmp.eq.s32.totalorder %s46, 0
      %p398 = por %p396, %p397
      %s399 = ssub.s32 %s48, %s55
      %p400 = scmp.eq.s32.totalorder %s399, 0
      %s402 = sadd.s32 %s401, 1
      %s403 = scalar_select %p400, %s401, %s402
      %p406 = pneg %p400
      %p407 = scmp.eq.s32.totalorder %s40, 1
      %p408 = por %p406, %p407
      %p409 = scmp.ne.s32.totalorder %s401, %s404
      %p410 = scmp.eq.s32.totalorder %s40, 0
      %p411 = por %p409, %p410
      %p412 = scmp.ne.s32.totalorder %s401, %s404
      %p413 = scmp.eq.s32.totalorder %s45, 1
      %p414 = por %p412, %p413
      %p415 = scmp.ne.s32.totalorder %s404, %s405
      %p416 = scmp.eq.s32.totalorder %s45, 0
      %p417 = por %p415, %p416
      %p418 = scmp.ne.s32.totalorder %s404, %s405
      %p419 = scmp.eq.s32.totalorder %s46, 1
      %p420 = por %p418, %p419
      %p422 = scmp.ne.s32.totalorder %s405, %s421
      %p423 = scmp.eq.s32.totalorder %s46, 0
      %p424 = por %p422, %p423
      %s425 = ssub.s32 %s48, %s55
      %p426 = scmp.eq.s32.totalorder %s425, 0
      %s428 = sadd.s32 %s427, 1
      %s429 = scalar_select %p426, %s427, %s428
      %p432 = pneg %p426
      %p433 = scmp.eq.s32.totalorder %s40, 1
      %p434 = por %p432, %p433
      %p435 = scmp.ne.s32.totalorder %s427, %s430
      %p436 = scmp.eq.s32.totalorder %s40, 0
      %p437 = por %p435, %p436
      %p438 = scmp.ne.s32.totalorder %s427, %s430
      %p439 = scmp.eq.s32.totalorder %s45, 1
      %p440 = por %p438, %p439
      %p441 = scmp.ne.s32.totalorder %s430, %s431
      %p442 = scmp.eq.s32.totalorder %s45, 0
      %p443 = por %p441, %p442
      %p444 = scmp.ne.s32.totalorder %s430, %s431
      %p445 = scmp.eq.s32.totalorder %s46, 1
      %p446 = por %p444, %p445
      %p448 = scmp.ne.s32.totalorder %s431, %s447
      %p449 = scmp.eq.s32.totalorder %s46, 0
      %p450 = por %p448, %p449
      %s451 = ssub.s32 %s48, %s55
      %p452 = scmp.eq.s32.totalorder %s451, 0
      %s454 = sadd.s32 %s453, 1
      %s455 = scalar_select %p452, %s453, %s454
      %p458 = pneg %p452
      %p459 = scmp.eq.s32.totalorder %s40, 1
      %p460 = por %p458, %p459
      %p461 = scmp.ne.s32.totalorder %s453, %s456
      %p462 = scmp.eq.s32.totalorder %s40, 0
      %p463 = por %p461, %p462
      %p464 = scmp.ne.s32.totalorder %s453, %s456
      %p465 = scmp.eq.s32.totalorder %s45, 1
      %p466 = por %p464, %p465
      %p467 = scmp.ne.s32.totalorder %s456, %s457
      %p468 = scmp.eq.s32.totalorder %s45, 0
      %p469 = por %p467, %p468
      %p470 = scmp.ne.s32.totalorder %s456, %s457
      %p471 = scmp.eq.s32.totalorder %s46, 1
      %p472 = por %p470, %p471
      %p474 = scmp.ne.s32.totalorder %s457, %s473
      %p475 = scmp.eq.s32.totalorder %s46, 0
      %p476 = por %p474, %p475
      %s477 = ssub.s32 %s48, %s55
      %p478 = scmp.eq.s32.totalorder %s477, 0
      %s480 = sadd.s32 %s479, 1
      %s481 = scalar_select %p478, %s479, %s480
      %p484 = pneg %p478
      %p485 = scmp.eq.s32.totalorder %s40, 1
      %p486 = por %p484, %p485
      %p487 = scmp.ne.s32.totalorder %s479, %s482
      %p488 = scmp.eq.s32.totalorder %s40, 0
      %p489 = por %p487, %p488
      %p490 = scmp.ne.s32.totalorder %s479, %s482
      %p491 = scmp.eq.s32.totalorder %s45, 1
      %p492 = por %p490, %p491
      %p493 = scmp.ne.s32.totalorder %s482, %s483
      %p494 = scmp.eq.s32.totalorder %s45, 0
      %p495 = por %p493, %p494
      %p496 = scmp.ne.s32.totalorder %s482, %s483
      %p497 = scmp.eq.s32.totalorder %s46, 1
      %p498 = por %p496, %p497
      %p500 = scmp.ne.s32.totalorder %s483, %s499
      %p501 = scmp.eq.s32.totalorder %s46, 0
      %p502 = por %p500, %p501
      %s503 = ssub.s32 %s47, %s59
      %p504 = scmp.eq.s32.totalorder %s503, 0
      %s506 = sadd.s32 %s505, 1
      %s507 = scalar_select %p504, %s505, %s506
      %p510 = pneg %p504
      %p511 = scmp.eq.s32.totalorder %s40, 1
      %p512 = por %p510, %p511
      %p513 = scmp.ne.s32.totalorder %s505, %s508
      %p514 = scmp.eq.s32.totalorder %s40, 0
      %p515 = por %p513, %p514
      %p516 = scmp.ne.s32.totalorder %s505, %s508
      %p517 = scmp.eq.s32.totalorder %s45, 1
      %p518 = por %p516, %p517
      %p519 = scmp.ne.s32.totalorder %s508, %s509
      %p520 = scmp.eq.s32.totalorder %s45, 0
      %p521 = por %p519, %p520
      %p522 = scmp.ne.s32.totalorder %s508, %s509
      %p523 = scmp.eq.s32.totalorder %s46, 1
      %p524 = por %p522, %p523
      %p526 = scmp.ne.s32.totalorder %s509, %s525
      %p527 = scmp.eq.s32.totalorder %s46, 0
      %p528 = por %p526, %p527
      %p529 = scmp.le.s32.totalorder 1, %s40
      %p530 = scmp.lt.s32.totalorder %s40, 3
      %p531 = pnand %p529, %p530
      %p532 = pneg %p531
      // Predicated region
      $region9: #{tpu_custom_call.1} parent=5 // pred_check
        _
      $region10: #{tpu_custom_call.1} parent=5 // pred_check_branch
        %534 = sbr.rel (%p531) target = $region12
      $region11: #{tpu_custom_call.1} parent=5 // pred_region
        %s535 = ssub.s32 %s40, 1
        // Predicated region
        $region13: #{tpu_custom_call.1} parent=11 // pred_check
          %p536 = pneg %p78
        $region14: #{tpu_custom_call.1} parent=11 // pred_check_branch
          %538 = sbr.rel (%p536) target = $region16
        $region15: #{tpu_custom_call.1} parent=11 // pred_region
          %s539 = smul.u32 2, %s49
          %s541 = ssub.s32 256, 256
          %542 = vsyncadd [#allocation3], %s541
          %s543 = smul.addr %s539, 128
          %s544 = scalar_lea.hbm %s0, %s543
          %s545 = sshll.u32 [#allocation2], 4
          %s546 = int_to_ptr.vmem [resolvable:$true] %s545
          %551 = dma.hbm_to_vmem [thread:$0]  %s544, 256, %s546, [#allocation3], 128, 128, 8
        $region16: #{tpu_custom_call.1} parent=11 // pred_fallthru
          _
        // Predicated region
        $region17: #{tpu_custom_call.1} parent=11 // pred_check
          %p552 = pneg %p99
        $region18: #{tpu_custom_call.1} parent=11 // pred_check_branch
          %554 = sbr.rel (%p552) target = $region20
        $region19: #{tpu_custom_call.1} parent=11 // pred_region
          %s556 = ssub.s32 128, 128
          %557 = vsyncadd [#allocation6], %s556
          %s558 = sshll.u32 [#allocation5], 4
          %s559 = int_to_ptr.vmem [resolvable:$true] %s558
          %564 = dma.hbm_to_vmem [thread:$0]  %s1, 128, %s559, [#allocation6], 64, 64, 4
        $region20: #{tpu_custom_call.1} parent=11 // pred_fallthru
          _
        // Predicated region
        $region21: #{tpu_custom_call.1} parent=11 // pred_check
          %p565 = pneg %p120
        $region22: #{tpu_custom_call.1} parent=11 // pred_check_branch
          %567 = sbr.rel (%p565) target = $region24
        $region23: #{tpu_custom_call.1} parent=11 // pred_region
          %s569 = ssub.s32 16, 16
          %570 = vsyncadd [#allocation6], %s569
          %s572 = sshll.u32 [#allocation7], 4
          %s573 = int_to_ptr.vmem [resolvable:$true] %s572
          %575 = dma.hbm_to_vmem [thread:$0]  %s2, 16, %s573, [#allocation6]
        $region24: #{tpu_custom_call.1} parent=11 // pred_fallthru
          _
        // Predicated region
        $region25: #{tpu_custom_call.1} parent=11 // pred_check
          %p576 = pneg %p141
        $region26: #{tpu_custom_call.1} parent=11 // pred_check_branch
          %578 = sbr.rel (%p576) target = $region28
        $region27: #{tpu_custom_call.1} parent=11 // pred_region
          %s580 = ssub.s32 16, 16
          %581 = vsyncadd [#allocation9], %s580
          %s583 = sshll.u32 [#allocation8], 4
          %s584 = int_to_ptr.vmem [resolvable:$true] %s583
          %586 = dma.hbm_to_vmem [thread:$0]  %s3, 16, %s584, [#allocation9]
        $region28: #{tpu_custom_call.1} parent=11 // pred_fallthru
          _
        // Predicated region
        $region29: #{tpu_custom_call.1} parent=11 // pred_check
          %p587 = pneg %p162
        $region30: #{tpu_custom_call.1} parent=11 // pred_check_branch
          %589 = sbr.rel (%p587) target = $region32
        $region31: #{tpu_custom_call.1} parent=11 // pred_region
          %s591 = ssub.s32 16, 16
          %592 = vsyncadd [#allocation9], %s591
          %s594 = sshll.u32 [#allocation10], 4
          %s595 = int_to_ptr.vmem [resolvable:$true] %s594
          %597 = dma.hbm_to_vmem [thread:$0]  %s4, 16, %s595, [#allocation9]
        $region32: #{tpu_custom_call.1} parent=11 // pred_fallthru
          _
        // Predicated region
        $region33: #{tpu_custom_call.1} parent=11 // pred_check
          %p598 = pneg %p183
        $region34: #{tpu_custom_call.1} parent=11 // pred_check_branch
          %600 = sbr.rel (%p598) target = $region36
        $region35: #{tpu_custom_call.1} parent=11 // pred_region
          _
        $region36: #{tpu_custom_call.1} parent=11 // pred_fallthru
          _
      $region12: #{tpu_custom_call.1} parent=5 // pred_fallthru
        _
      %p601 = scmp.lt.s32.totalorder %s40, 2
      // Predicated region
      $region37: #{tpu_custom_call.1} parent=5 // pred_check
        %p602 = pneg %p601
      $region38: #{tpu_custom_call.1} parent=5 // pred_check_branch
        %604 = sbr.rel (%p602) target = $region40
      $region39: #{tpu_custom_call.1} parent=5 // pred_region
        // Predicated region
        $region41: #{tpu_custom_call.1} parent=39 // pred_check
          %p605 = pneg %p203
        $region42: #{tpu_custom_call.1} parent=39 // pred_check_branch
          %607 = sbr.rel (%p605) target = $region44
        $region43: #{tpu_custom_call.1} parent=39 // pred_region
          %s608 = sand.u32 %s40, 1
          %s609 = scalar_lea.sflag [#allocation12], %s608
          %s610 = sand.u32 %s193, 1
          %s611 = scalar_lea.vmem [#allocation11], %s610
          %s613 = ssub.s32 16, 16
          %614 = vsyncadd %s609, %s613
          %s615 = smul.addr %s48, 16
          %s616 = scalar_lea.hbm %s6, %s615
          %s618 = sshll.u32 %s611, 4
          %s619 = int_to_ptr.vmem [resolvable:$true] %s618
          %621 = dma.hbm_to_vmem [thread:$0]  %s616, 16, %s619, %s609
        $region44: #{tpu_custom_call.1} parent=39 // pred_fallthru
          _
        // Predicated region
        $region45: #{tpu_custom_call.1} parent=39 // pred_check
          %p622 = pneg %p229
        $region46: #{tpu_custom_call.1} parent=39 // pred_check_branch
          %624 = sbr.rel (%p622) target = $region48
        $region47: #{tpu_custom_call.1} parent=39 // pred_region
          %s625 = sand.u32 %s40, 1
          %s626 = scalar_lea.sflag [#allocation12], %s625
          %s627 = sand.u32 %s219, 1
          %s628 = scalar_lea.vmem [#allocation13], %s627
          %s630 = ssub.s32 16, 16
          %631 = vsyncadd %s626, %s630
          %s632 = smul.addr %s48, 16
          %s633 = scalar_lea.hbm %s7, %s632
          %s635 = sshll.u32 %s628, 4
          %s636 = int_to_ptr.vmem [resolvable:$true] %s635
          %638 = dma.hbm_to_vmem [thread:$0]  %s633, 16, %s636, %s626
        $region48: #{tpu_custom_call.1} parent=39 // pred_fallthru
          _
        // Predicated region
        $region49: #{tpu_custom_call.1} parent=39 // pred_check
          %p639 = pneg %p255
        $region50: #{tpu_custom_call.1} parent=39 // pred_check_branch
          %641 = sbr.rel (%p639) target = $region52
        $region51: #{tpu_custom_call.1} parent=39 // pred_region
          %s642 = sand.u32 %s40, 1
          %s643 = scalar_lea.sflag [#allocation15], %s642
          %s644 = sand.u32 %s245, 1
          %s645 = smul.addr %s644, 192
          %s646 = scalar_lea.vmem [#allocation14], %s645
          %s648 = ssub.s32 3072, 3072
          %649 = vsyncadd %s643, %s648
          %s650 = smul.addr %s48, 48
          %s651 = smul.addr %s650, 64
          %s652 = scalar_lea.hbm %s8, %s651
          %s653 = sshll.u32 %s646, 4
          %s654 = int_to_ptr.vmem [resolvable:$true] %s653
          %659 = dma.hbm_to_vmem [thread:$0]  %s652, 3072, %s654, %s643, 192, 192, 12
        $region52: #{tpu_custom_call.1} parent=39 // pred_fallthru
          _
        // Predicated region
        $region53: #{tpu_custom_call.1} parent=39 // pred_check
          %p660 = pneg %p281
        $region54: #{tpu_custom_call.1} parent=39 // pred_check_branch
          %662 = sbr.rel (%p660) target = $region56
        $region55: #{tpu_custom_call.1} parent=39 // pred_region
          %p663 = scmp.lt.s32.totalorder %s48, 1
          %s664 = scalar_select %p663, %s48, 1
          %s665 = smul.addr %s664, 3
          %s666 = scalar_lea.vmem %s9, %s665
        $region56: #{tpu_custom_call.1} parent=39 // pred_fallthru
          _
        // Predicated region
        $region57: #{tpu_custom_call.1} parent=39 // pred_check
          %p667 = pneg %p307
        $region58: #{tpu_custom_call.1} parent=39 // pred_check_branch
          %669 = sbr.rel (%p667) target = $region60
        $region59: #{tpu_custom_call.1} parent=39 // pred_region
          %s670 = sand.u32 %s40, 1
          %s671 = scalar_lea.sflag [#allocation15], %s670
          %s672 = sand.u32 %s297, 1
          %s673 = smul.addr %s672, 64
          %s674 = scalar_lea.vmem [#allocation16], %s673
          %s676 = ssub.s32 1024, 1024
          %677 = vsyncadd %s671, %s676
          %s678 = smul.addr %s48, 16
          %s679 = smul.addr %s678, 64
          %s680 = scalar_lea.hbm %s10, %s679
          %s681 = sshll.u32 %s674, 4
          %s682 = int_to_ptr.vmem [resolvable:$true] %s681
          %687 = dma.hbm_to_vmem [thread:$0]  %s680, 1024, %s682, %s671, 64, 64, 4
        $region60: #{tpu_custom_call.1} parent=39 // pred_fallthru
          _
        // Predicated region
        $region61: #{tpu_custom_call.1} parent=39 // pred_check
          %p688 = pneg %p333
        $region62: #{tpu_custom_call.1} parent=39 // pred_check_branch
          %690 = sbr.rel (%p688) target = $region64
        $region63: #{tpu_custom_call.1} parent=39 // pred_region
          %p691 = scmp.lt.s32.totalorder %s48, 1
          %s692 = scalar_select %p691, %s48, 1
          %s693 = scalar_lea.vmem %s11, %s692
        $region64: #{tpu_custom_call.1} parent=39 // pred_fallthru
          _
        // Predicated region
        $region65: #{tpu_custom_call.1} parent=39 // pred_check
          %p694 = pneg %p359
        $region66: #{tpu_custom_call.1} parent=39 // pred_check_branch
          %696 = sbr.rel (%p694) target = $region68
        $region67: #{tpu_custom_call.1} parent=39 // pred_region
          %s697 = sand.u32 %s40, 1
          %s698 = scalar_lea.sflag [#allocation18], %s697
          %s699 = sand.u32 %s349, 1
          %s700 = scalar_lea.vmem [#allocation17], %s699
          %s702 = ssub.s32 16, 16
          %703 = vsyncadd %s698, %s702
          %s704 = smul.addr %s48, 16
          %s705 = scalar_lea.hbm %s12, %s704
          %s707 = sshll.u32 %s700, 4
          %s708 = int_to_ptr.vmem [resolvable:$true] %s707
          %710 = dma.hbm_to_vmem [thread:$0]  %s705, 16, %s708, %s698
        $region68: #{tpu_custom_call.1} parent=39 // pred_fallthru
          _
        // Predicated region
        $region69: #{tpu_custom_call.1} parent=39 // pred_check
          %p711 = pneg %p385
        $region70: #{tpu_custom_call.1} parent=39 // pred_check_branch
          %713 = sbr.rel (%p711) target = $region72
        $region71: #{tpu_custom_call.1} parent=39 // pred_region
          %p714 = scmp.lt.s32.totalorder %s48, 1
          %s715 = scalar_select %p714, %s48, 1
          %s716 = scalar_lea.vmem %s13, %s715
        $region72: #{tpu_custom_call.1} parent=39 // pred_fallthru
          _
        // Predicated region
        $region73: #{tpu_custom_call.1} parent=39 // pred_check
          %p717 = pneg %p411
        $region74: #{tpu_custom_call.1} parent=39 // pred_check_branch
          %719 = sbr.rel (%p717) target = $region76
        $region75: #{tpu_custom_call.1} parent=39 // pred_region
          %s720 = sand.u32 %s40, 1
          %s721 = scalar_lea.sflag [#allocation18], %s720
          %s722 = sand.u32 %s401, 1
          %s723 = smul.addr %s722, 128
          %s724 = scalar_lea.vmem [#allocation19], %s723
          %s726 = ssub.s32 2048, 2048
          %727 = vsyncadd %s721, %s726
          %s728 = smul.addr %s48, 32
          %s729 = smul.addr %s728, 64
          %s730 = scalar_lea.hbm %s14, %s729
          %s731 = sshll.u32 %s724, 4
          %s732 = int_to_ptr.vmem [resolvable:$true] %s731
          %737 = dma.hbm_to_vmem [thread:$0]  %s730, 2048, %s732, %s721, 128, 128, 8
        $region76: #{tpu_custom_call.1} parent=39 // pred_fallthru
          _
        // Predicated region
        $region77: #{tpu_custom_call.1} parent=39 // pred_check
          %p738 = pneg %p437
        $region78: #{tpu_custom_call.1} parent=39 // pred_check_branch
          %740 = sbr.rel (%p738) target = $region80
        $region79: #{tpu_custom_call.1} parent=39 // pred_region
          %p741 = scmp.lt.s32.totalorder %s48, 1
          %s742 = scalar_select %p741, %s48, 1
          %s743 = smul.addr %s742, 2
          %s744 = scalar_lea.vmem %s15, %s743
        $region80: #{tpu_custom_call.1} parent=39 // pred_fallthru
          _
        // Predicated region
        $region81: #{tpu_custom_call.1} parent=39 // pred_check
          %p745 = pneg %p463
        $region82: #{tpu_custom_call.1} parent=39 // pred_check_branch
          %747 = sbr.rel (%p745) target = $region84
        $region83: #{tpu_custom_call.1} parent=39 // pred_region
          %s748 = sand.u32 %s453, 1
          %s749 = scalar_lea.sflag [#allocation21], %s748
          %s750 = sand.u32 %s453, 1
          %s751 = smul.addr %s750, 128
          %s752 = scalar_lea.vmem [#allocation20], %s751
          %s754 = ssub.s32 2048, 2048
          %755 = vsyncadd %s749, %s754
          %s756 = smul.addr %s48, 32
          %s757 = smul.addr %s756, 64
          %s758 = scalar_lea.hbm %s16, %s757
          %s759 = sshll.u32 %s752, 4
          %s760 = int_to_ptr.vmem [resolvable:$true] %s759
          %765 = dma.hbm_to_vmem [thread:$0]  %s758, 2048, %s760, %s749, 64, 64, 4
        $region84: #{tpu_custom_call.1} parent=39 // pred_fallthru
          _
        // Predicated region
        $region85: #{tpu_custom_call.1} parent=39 // pred_check
          %p766 = pneg %p489
        $region86: #{tpu_custom_call.1} parent=39 // pred_check_branch
          %768 = sbr.rel (%p766) target = $region88
        $region87: #{tpu_custom_call.1} parent=39 // pred_region
          %p769 = scmp.lt.s32.totalorder %s48, 1
          %s770 = scalar_select %p769, %s48, 1
          %s771 = scalar_lea.vmem %s17, %s770
        $region88: #{tpu_custom_call.1} parent=39 // pred_fallthru
          _
      $region40: #{tpu_custom_call.1} parent=5 // pred_fallthru
        _
      %p772 = scmp.le.s32.totalorder 1, %s40
      %p773 = scmp.lt.s32.totalorder %s40, 3
      %p774 = pnand %p772, %p773
      %p775 = pneg %p774
      // Predicated region
      $region89: #{tpu_custom_call.1} parent=5 // pred_check
        _
      $region90: #{tpu_custom_call.1} parent=5 // pred_check_branch
        %777 = sbr.rel (%p774) target = $region92
      $region91: #{tpu_custom_call.1} parent=5 // pred_region
        %s778 = ssub.s32 %s40, 1
        // Predicated region
        $region93: #{tpu_custom_call.1} parent=91 // pred_check
          %p779 = pneg %p78
        $region94: #{tpu_custom_call.1} parent=91 // pred_check_branch
          %781 = sbr.rel (%p779) target = $region96
        $region95: #{tpu_custom_call.1} parent=91 // pred_region
          %782 = dma.done [#allocation3], 256
        $region96: #{tpu_custom_call.1} parent=91 // pred_fallthru
          _
        // Predicated region
        $region97: #{tpu_custom_call.1} parent=91 // pred_check
          %p783 = pneg %p99
        $region98: #{tpu_custom_call.1} parent=91 // pred_check_branch
          %785 = sbr.rel (%p783) target = $region100
        $region99: #{tpu_custom_call.1} parent=91 // pred_region
          %786 = dma.done [#allocation6], 128
        $region100: #{tpu_custom_call.1} parent=91 // pred_fallthru
          _
        // Predicated region
        $region101: #{tpu_custom_call.1} parent=91 // pred_check
          %p787 = pneg %p120
        $region102: #{tpu_custom_call.1} parent=91 // pred_check_branch
          %789 = sbr.rel (%p787) target = $region104
        $region103: #{tpu_custom_call.1} parent=91 // pred_region
          %790 = dma.done [#allocation6], 16
        $region104: #{tpu_custom_call.1} parent=91 // pred_fallthru
          _
        // Predicated region
        $region105: #{tpu_custom_call.1} parent=91 // pred_check
          %p791 = pneg %p141
        $region106: #{tpu_custom_call.1} parent=91 // pred_check_branch
          %793 = sbr.rel (%p791) target = $region108
        $region107: #{tpu_custom_call.1} parent=91 // pred_region
          %794 = dma.done [#allocation9], 16
        $region108: #{tpu_custom_call.1} parent=91 // pred_fallthru
          _
        // Predicated region
        $region109: #{tpu_custom_call.1} parent=91 // pred_check
          %p795 = pneg %p162
        $region110: #{tpu_custom_call.1} parent=91 // pred_check_branch
          %797 = sbr.rel (%p795) target = $region112
        $region111: #{tpu_custom_call.1} parent=91 // pred_region
          %798 = dma.done [#allocation9], 16
        $region112: #{tpu_custom_call.1} parent=91 // pred_fallthru
          _
        %s799 = sand.u32 %s45, 1
        %s800 = scalar_lea.sflag [#allocation12], %s799
        %s801 = sand.u32 %s196, 1
        %s802 = scalar_lea.vmem [#allocation11], %s801
        // Predicated region
        $region113: #{tpu_custom_call.1} parent=91 // pred_check
          %p803 = pneg %p209
        $region114: #{tpu_custom_call.1} parent=91 // pred_check_branch
          %805 = sbr.rel (%p803) target = $region116
        $region115: #{tpu_custom_call.1} parent=91 // pred_region
          %806 = dma.done %s800, 16
        $region116: #{tpu_custom_call.1} parent=91 // pred_fallthru
          _
        %s807 = sand.u32 %s45, 1
        %s808 = scalar_lea.sflag [#allocation12], %s807
        %s809 = sand.u32 %s222, 1
        %s810 = scalar_lea.vmem [#allocation13], %s809
        // Predicated region
        $region117: #{tpu_custom_call.1} parent=91 // pred_check
          %p811 = pneg %p235
        $region118: #{tpu_custom_call.1} parent=91 // pred_check_branch
          %813 = sbr.rel (%p811) target = $region120
        $region119: #{tpu_custom_call.1} parent=91 // pred_region
          %814 = dma.done %s808, 16
        $region120: #{tpu_custom_call.1} parent=91 // pred_fallthru
          _
        %s815 = sand.u32 %s45, 1
        %s816 = scalar_lea.sflag [#allocation15], %s815
        %s817 = sand.u32 %s248, 1
        %s818 = smul.addr %s817, 192
        %s819 = scalar_lea.vmem [#allocation14], %s818
        // Predicated region
        $region121: #{tpu_custom_call.1} parent=91 // pred_check
          %p820 = pneg %p261
        $region122: #{tpu_custom_call.1} parent=91 // pred_check_branch
          %822 = sbr.rel (%p820) target = $region124
        $region123: #{tpu_custom_call.1} parent=91 // pred_region
          %823 = dma.done %s816, 3072
        $region124: #{tpu_custom_call.1} parent=91 // pred_fallthru
          _
        %s824 = sand.u32 %s45, 1
        %s825 = scalar_lea.sflag [#allocation15], %s824
        %s826 = sand.u32 %s300, 1
        %s827 = smul.addr %s826, 64
        %s828 = scalar_lea.vmem [#allocation16], %s827
        // Predicated region
        $region125: #{tpu_custom_call.1} parent=91 // pred_check
          %p829 = pneg %p313
        $region126: #{tpu_custom_call.1} parent=91 // pred_check_branch
          %831 = sbr.rel (%p829) target = $region128
        $region127: #{tpu_custom_call.1} parent=91 // pred_region
          %832 = dma.done %s825, 1024
        $region128: #{tpu_custom_call.1} parent=91 // pred_fallthru
          _
        %s833 = sand.u32 %s45, 1
        %s834 = scalar_lea.sflag [#allocation18], %s833
        %s835 = sand.u32 %s352, 1
        %s836 = scalar_lea.vmem [#allocation17], %s835
        // Predicated region
        $region129: #{tpu_custom_call.1} parent=91 // pred_check
          %p837 = pneg %p365
        $region130: #{tpu_custom_call.1} parent=91 // pred_check_branch
          %839 = sbr.rel (%p837) target = $region132
        $region131: #{tpu_custom_call.1} parent=91 // pred_region
          %840 = dma.done %s834, 16
        $region132: #{tpu_custom_call.1} parent=91 // pred_fallthru
          _
        %s841 = sand.u32 %s45, 1
        %s842 = scalar_lea.sflag [#allocation18], %s841
        %s843 = sand.u32 %s404, 1
        %s844 = smul.addr %s843, 128
        %s845 = scalar_lea.vmem [#allocation19], %s844
        // Predicated region
        $region133: #{tpu_custom_call.1} parent=91 // pred_check
          %p846 = pneg %p417
        $region134: #{tpu_custom_call.1} parent=91 // pred_check_branch
          %848 = sbr.rel (%p846) target = $region136
        $region135: #{tpu_custom_call.1} parent=91 // pred_region
          %849 = dma.done %s842, 2048
        $region136: #{tpu_custom_call.1} parent=91 // pred_fallthru
          _
        %s850 = sand.u32 %s456, 1
        %s851 = scalar_lea.sflag [#allocation21], %s850
        %s852 = sand.u32 %s456, 1
        %s853 = smul.addr %s852, 128
        %s854 = scalar_lea.vmem [#allocation20], %s853
        // Predicated region
        $region137: #{tpu_custom_call.1} parent=91 // pred_check
          %p855 = pneg %p469
        $region138: #{tpu_custom_call.1} parent=91 // pred_check_branch
          %857 = sbr.rel (%p855) target = $region140
        $region139: #{tpu_custom_call.1} parent=91 // pred_region
          %858 = dma.done %s851, 2048
        $region140: #{tpu_custom_call.1} parent=91 // pred_fallthru
          _
        %p859 = pneg %p78
        %p860 = pneg %p75
        %p861 = pneg %p99
        %p862 = pneg %p96
        %p863 = pneg %p120
        %p864 = pneg %p117
        %p865 = pneg %p141
        %p866 = pneg %p138
        %p867 = pneg %p162
        %p868 = pneg %p159
        %p869 = pneg %p183
        %p870 = pneg %p180
        %s871 = sand.u32 %s45, 1
        %s872 = scalar_lea.sflag [#allocation12], %s871
        %s873 = sand.u32 %s196, 1
        %s874 = scalar_lea.vmem [#allocation11], %s873
        %p875 = pneg %p209
        %p876 = pneg %p206
        %s877 = sand.u32 %s45, 1
        %s878 = scalar_lea.sflag [#allocation12], %s877
        %s879 = sand.u32 %s222, 1
        %s880 = scalar_lea.vmem [#allocation13], %s879
        %p881 = pneg %p235
        %p882 = pneg %p232
        %s883 = sand.u32 %s45, 1
        %s884 = scalar_lea.sflag [#allocation15], %s883
        %s885 = sand.u32 %s248, 1
        %s886 = smul.addr %s885, 192
        %s887 = scalar_lea.vmem [#allocation14], %s886
        %p888 = pneg %p261
        %p889 = pneg %p258
        %p890 = scmp.lt.s32.totalorder %s50, 1
        %s891 = scalar_select %p890, %s50, 1
        %s892 = smul.addr %s891, 3
        %s893 = scalar_lea.vmem %s9, %s892
        %p894 = pneg %p287
        %p895 = pneg %p284
        %s896 = sand.u32 %s45, 1
        %s897 = scalar_lea.sflag [#allocation15], %s896
        %s898 = sand.u32 %s300, 1
        %s899 = smul.addr %s898, 64
        %s900 = scalar_lea.vmem [#allocation16], %s899
        %p901 = pneg %p313
        %p902 = pneg %p310
        %p903 = scmp.lt.s32.totalorder %s50, 1
        %s904 = scalar_select %p903, %s50, 1
        %s905 = scalar_lea.vmem %s11, %s904
        %p906 = pneg %p339
        %p907 = pneg %p336
        %s908 = sand.u32 %s45, 1
        %s909 = scalar_lea.sflag [#allocation18], %s908
        %s910 = sand.u32 %s352, 1
        %s911 = scalar_lea.vmem [#allocation17], %s910
        %p912 = pneg %p365
        %p913 = pneg %p362
        %p914 = scmp.lt.s32.totalorder %s50, 1
        %s915 = scalar_select %p914, %s50, 1
        %s916 = scalar_lea.vmem %s13, %s915
        %p917 = pneg %p391
        %p918 = pneg %p388
        %s919 = sand.u32 %s45, 1
        %s920 = scalar_lea.sflag [#allocation18], %s919
        %s921 = sand.u32 %s404, 1
        %s922 = smul.addr %s921, 128
        %s923 = scalar_lea.vmem [#allocation19], %s922
        %p924 = pneg %p417
        %p925 = pneg %p414
        %p926 = scmp.lt.s32.totalorder %s50, 1
        %s927 = scalar_select %p926, %s50, 1
        %s928 = smul.addr %s927, 2
        %s929 = scalar_lea.vmem %s15, %s928
        %p930 = pneg %p443
        %p931 = pneg %p440
        %s932 = sand.u32 %s456, 1
        %s933 = scalar_lea.sflag [#allocation21], %s932
        %s934 = sand.u32 %s456, 1
        %s935 = smul.addr %s934, 128
        %s936 = scalar_lea.vmem [#allocation20], %s935
        %p937 = pneg %p469
        %p938 = pneg %p466
        %p939 = scmp.lt.s32.totalorder %s50, 1
        %s940 = scalar_select %p939, %s50, 1
        %s941 = scalar_lea.vmem %s17, %s940
        %p942 = pneg %p495
        %p943 = pneg %p492
        %p944 = pneg %p521
        %p945 = pneg %p518
        %s946 = smul.u32 2, %s49
        %p947 = scmp.lt.s32.totalorder %s50, 1
        %s948 = scalar_select %p947, %s50, 1
        %s949 = smul.addr %s948, 3
        %s950 = scalar_lea.vmem %s9, %s949
        %p951 = scmp.lt.s32.totalorder %s50, 1
        %s952 = scalar_select %p951, %s50, 1
        %s953 = scalar_lea.vmem %s11, %s952
        %p954 = scmp.lt.s32.totalorder %s50, 1
        %s955 = scalar_select %p954, %s50, 1
        %s956 = scalar_lea.vmem %s13, %s955
        %p957 = scmp.lt.s32.totalorder %s50, 1
        %s958 = scalar_select %p957, %s50, 1
        %s959 = smul.addr %s958, 2
        %s960 = scalar_lea.vmem %s15, %s959
        %p961 = scmp.lt.s32.totalorder %s50, 1
        %s962 = scalar_select %p961, %s50, 1
        %s963 = scalar_lea.vmem %s17, %s962
        %s964 = smul.u32 2, %s49
        %p966 = scmp.eq.s32.totalorder %s50, 0
        // Predicated region
        $region141: #{tpu_custom_call.1} parent=91 // pred_check
          %p967 = pneg %p966
        $region142: #{tpu_custom_call.1} parent=91 // pred_check_branch
          %969 = sbr.rel (%p967) target = $region144
        $region143: #{tpu_custom_call.1} parent=91 // pred_region
          %v970 = vld [vmem:[#allocation2] sm:$0xff]
          %v971 = vld [vmem:[#allocation2 + $0x8] sm:$0xff]
          %v972 = vpack.c.bf16 %v971, %v970
          %v973 = vld [vmem:[#allocation5] sm:$0xf]
          %v974 = vld [vmem:[#allocation5 + $0x4] sm:$0xf]
          %v975 = vld [vmem:[#allocation7] sm:$0x1]
          %v977 = vlaneseq
          %v978 = vshrl.u32 %v977, 7
          %v979 = vsub.s32 0, %v978
          %v980 = vrot.slane %v975, %v979
          %v984 = vunpack.c.l.b16 %v973
          %v985 = vunpack.c.l.b16 %v974
          %v986 = vpack.c.b16 %v985, %v984
          %vm988 = vcmask 130048
          %v990 = vsel %vm988, %v972, 0
          %992 = vmatprep.subr.bf16.mxu0 0
          %993 = vmatpush1.bf16.msra.mxu0 0
          %994 = vmatprep.subr.bf16.mxu0 0
          %995 = vmatpush1.bf16.msra.mxu0 0
          %996 = vmatprep.subr.bf16.mxu0 0
          %997 = vmatpush1.bf16.msra.mxu0 0
          %998 = vmatprep.subr.bf16.mxu0 0
          %999 = vmatpush1.bf16.msra.mxu0 0
          %1000 = vmatprep.subr.bf16.mxu0 0
          %1001 = vmatpush1.bf16.msra.mxu0 0
          %1002 = vmatprep.subr.bf16.mxu0 0
          %1003 = vmatpush1.bf16.msra.mxu0 0
          %1004 = vmatprep.subr.bf16.mxu0 0
          %1005 = vmatpush1.bf16.msra.mxu0 0
          %1006 = vmatprep.subr.bf16.mxu0 0
          %1007 = vmatpush1.bf16.msra.mxu0 %v986
          %1008 = vmatprep.subr.bf16.mxu0 0
          %1009 = vmatpush2.bf16.msra.mxu0 0
          %1010 = vmatprep.subr.bf16.mxu0 0
          %1011 = vmatpush2.bf16.msra.mxu0 0
          %1012 = vmatprep.subr.bf16.mxu0 0
          %1013 = vmatpush2.bf16.msra.mxu0 0
          %1014 = vmatprep.subr.bf16.mxu0 0
          %1015 = vmatpush2.bf16.msra.mxu0 0
          %1016 = vmatprep.subr.bf16.mxu0 0
          %1017 = vmatpush2.bf16.msra.mxu0 0
          %1018 = vmatprep.subr.bf16.mxu0 0
          %1019 = vmatpush2.bf16.msra.mxu0 0
          %1020 = vmatprep.subr.bf16.mxu0 0
          %1021 = vmatpush2.bf16.msra.mxu0 0
          %1022 = vmatprep.subr.bf16.mxu0 0
          %1023 = vmatpush2.bf16.msra.mxu0 0
          %1024 = vmatprep.mubr.bf16.mxu0 0
          %1025 = vmatmul.mubr.bf16.gmra.mxu0 %v990
          %v1026 = vpop.f32.mrf.mxu0
          %v1027 = vadd.f32 %v980, %v1026
          %v1028 = vpop.f32.mrf.mxu0
          %v1029 = vpop.f32.mrf.mxu0
          %v1030 = vadd.f32 %v980, %v1029
          %v1031 = vpop.f32.mrf.mxu0
          %1032 = vdwg.mxu0
          %v1033 = vld [vmem:[#allocation8] sm:$0x1]
          %v1034 = vld [vmem:[#allocation10] sm:$0x1]
          %1035 = vadd.xlane.f32.xlu0 %v1027
          %v1036 = vpop.xlane.xlu0 %1035
          %1037 = vadd.xlane.f32.xlu0 %v1030
          %v1038 = vpop.xlane.xlu0 %1037
          %v1039 = vrcp.pop 128.0
          %v1040 = vmul.f32 %v1036, %v1039
          %v1041 = vmul.f32 %v1038, %v1039
          %v1042 = vsub.f32 %v1027, %v1040
          %v1043 = vsub.f32 %v1030, %v1041
          %v1044 = vmul.f32 %v1042, %v1042
          %v1045 = vmul.f32 %v1043, %v1043
          %1046 = vadd.xlane.f32.xlu0 %v1044
          %v1047 = vpop.xlane.xlu0 %1046
          %1048 = vadd.xlane.f32.xlu0 %v1045
          %v1049 = vpop.xlane.xlu0 %1048
          %v1050 = vmul.f32 %v1047, %v1039
          %v1051 = vmul.f32 %v1049, %v1039
          %v1052 = vadd.f32 %v1050, 1e-05
          %v1053 = vadd.f32 %v1051, 1e-05
          %v1054 = vrsqrt.pop %v1052
          %v1055 = vrsqrt.pop %v1053
          %v1056 = vmul.f32 %v1042, %v1054
          %v1057 = vmul.f32 %v1043, %v1055
          %v1059 = vlaneseq
          %v1060 = vshrl.u32 %v1059, 7
          %v1061 = vsub.s32 0, %v1060
          %v1062 = vrot.slane %v1033, %v1061
          %v1064 = vmul.f32 %v1056, %v1062
          %v1065 = vmul.f32 %v1057, %v1062
          %v1067 = vlaneseq
          %v1068 = vshrl.u32 %v1067, 7
          %v1069 = vsub.s32 0, %v1068
          %v1070 = vrot.slane %v1034, %v1069
          %v1072 = vadd.f32 %v1064, %v1070
          %v1073 = vadd.f32 %v1065, %v1070
          %v1074 = vld [vmem:[%s5] sm:$0xff]
          %v1075 = vadd.f32 %v1072, %v1074
          %v1076 = vadd.f32 %v1073, %v1074
          %1077 = vst [vmem:[#allocation22] sm:$0xff] %v1075
          %1078 = vst [vmem:[#allocation22 + $0x8] sm:$0xff] %v1076
        $region144: #{tpu_custom_call.1} parent=91 // pred_fallthru
          _
        %v1079 = vld [vmem:[#allocation22] sm:$0xff]
        %v1080 = vld [vmem:[#allocation22 + $0x8] sm:$0xff]
        %v1081 = vld [vmem:[%s802] sm:$0x1]
        %v1082 = vld [vmem:[%s810] sm:$0x1]
        %1083 = vadd.xlane.f32.xlu0 %v1079
        %v1084 = vpop.xlane.xlu0 %1083
        %1085 = vadd.xlane.f32.xlu0 %v1080
        %v1086 = vpop.xlane.xlu0 %1085
        %v1087 = vrcp.pop 128.0
        %v1088 = vmul.f32 %v1084, %v1087
        %v1089 = vmul.f32 %v1086, %v1087
        %v1090 = vsub.f32 %v1079, %v1088
        %v1091 = vsub.f32 %v1080, %v1089
        %v1092 = vmul.f32 %v1090, %v1090
        %v1093 = vmul.f32 %v1091, %v1091
        %1094 = vadd.xlane.f32.xlu0 %v1092
        %v1095 = vpop.xlane.xlu0 %1094
        %1096 = vadd.xlane.f32.xlu0 %v1093
        %v1097 = vpop.xlane.xlu0 %1096
        %v1098 = vmul.f32 %v1095, %v1087
        %v1099 = vmul.f32 %v1097, %v1087
        %v1100 = vadd.f32 %v1098, 1e-05
        %v1101 = vadd.f32 %v1099, 1e-05
        %v1102 = vrsqrt.pop %v1100
        %v1103 = vrsqrt.pop %v1101
        %v1104 = vmul.f32 %v1090, %v1102
        %v1105 = vmul.f32 %v1091, %v1103
        %v1107 = vlaneseq
        %v1108 = vshrl.u32 %v1107, 7
        %v1109 = vsub.s32 0, %v1108
        %v1110 = vrot.slane %v1081, %v1109
        %v1112 = vmul.f32 %v1104, %v1110
        %v1113 = vmul.f32 %v1105, %v1110
        %v1115 = vlaneseq
        %v1116 = vshrl.u32 %v1115, 7
        %v1117 = vsub.s32 0, %v1116
        %v1118 = vrot.slane %v1082, %v1117
        %v1120 = vadd.f32 %v1112, %v1118
        %v1121 = vadd.f32 %v1113, %v1118
        %v1122 = vpack.c.bf16 %v1121, %v1120
        %v1123 = vld [vmem:[%s819] sm:$0xff]
        %v1124 = vld [vmem:[%s819 + $0x8] sm:$0xf]
        %v1125 = vld [vmem:[%s819 + $0xc] sm:$0xff]
        %v1126 = vld [vmem:[%s819 + $0x14] sm:$0xf]
        %v1127 = vld [vmem:[%s819 + $0x18] sm:$0xff]
        %v1128 = vld [vmem:[%s819 + $0x20] sm:$0xf]
        %v1129 = vld [vmem:[%s819 + $0x24] sm:$0xff]
        %v1130 = vld [vmem:[%s819 + $0x2c] sm:$0xf]
        %v1131 = vld [vmem:[%s819 + $0x30] sm:$0xff]
        %v1132 = vld [vmem:[%s819 + $0x38] sm:$0xf]
        %v1133 = vld [vmem:[%s819 + $0x3c] sm:$0xff]
        %v1134 = vld [vmem:[%s819 + $0x44] sm:$0xf]
        %v1135 = vld [vmem:[%s819 + $0x48] sm:$0xff]
        %v1136 = vld [vmem:[%s819 + $0x50] sm:$0xf]
        %v1137 = vld [vmem:[%s819 + $0x54] sm:$0xff]
        %v1138 = vld [vmem:[%s819 + $0x5c] sm:$0xf]
        %v1139 = vld [vmem:[%s819 + $0x60] sm:$0xff]
        %v1140 = vld [vmem:[%s819 + $0x68] sm:$0xf]
        %v1141 = vld [vmem:[%s819 + $0x6c] sm:$0xff]
        %v1142 = vld [vmem:[%s819 + $0x74] sm:$0xf]
        %v1143 = vld [vmem:[%s819 + $0x78] sm:$0xff]
        %v1144 = vld [vmem:[%s819 + $0x80] sm:$0xf]
        %v1145 = vld [vmem:[%s819 + $0x84] sm:$0xff]
        %v1146 = vld [vmem:[%s819 + $0x8c] sm:$0xf]
        %v1147 = vld [vmem:[%s819 + $0x90] sm:$0xff]
        %v1148 = vld [vmem:[%s819 + $0x98] sm:$0xf]
        %v1149 = vld [vmem:[%s819 + $0x9c] sm:$0xff]
        %v1150 = vld [vmem:[%s819 + $0xa4] sm:$0xf]
        %v1151 = vld [vmem:[%s819 + $0xa8] sm:$0xff]
        %v1152 = vld [vmem:[%s819 + $0xb0] sm:$0xf]
        %v1153 = vld [vmem:[%s819 + $0xb4] sm:$0xff]
        %v1154 = vld [vmem:[%s819 + $0xbc] sm:$0xf]
        %v1155 = vld [vmem:[%s950] sm:$0x7]
        %v1157 = vlaneseq
        %v1158 = vshrl.u32 %v1157, 7
        %v1159 = vsub.s32 0, %v1158
        %v1160 = vrot.slane %v1155, %v1159
        %v1161 = vlaneseq
        %v1162 = vshrl.u32 %v1161, 7
        %v1163 = vsub.s32 1, %v1162
        %v1164 = vrot.slane %v1155, %v1163
        %v1165 = vlaneseq
        %v1166 = vshrl.u32 %v1165, 7
        %v1167 = vsub.s32 2, %v1166
        %v1168 = vrot.slane %v1155, %v1167
        %v1204 = vunpack.c.l.b16 %v1123
        %v1205 = vunpack.c.h.b16 %v1123
        %v1206 = vunpack.c.l.b16 %v1124
        %v1207 = vunpack.c.l.b16 %v1125
        %v1208 = vunpack.c.h.b16 %v1125
        %v1209 = vunpack.c.l.b16 %v1126
        %v1210 = vunpack.c.l.b16 %v1127
        %v1211 = vunpack.c.h.b16 %v1127
        %v1212 = vunpack.c.l.b16 %v1128
        %v1213 = vunpack.c.l.b16 %v1129
        %v1214 = vunpack.c.h.b16 %v1129
        %v1215 = vunpack.c.l.b16 %v1130
        %v1216 = vunpack.c.l.b16 %v1131
        %v1217 = vunpack.c.h.b16 %v1131
        %v1218 = vunpack.c.l.b16 %v1132
        %v1219 = vunpack.c.l.b16 %v1133
        %v1220 = vunpack.c.h.b16 %v1133
        %v1221 = vunpack.c.l.b16 %v1134
        %v1222 = vunpack.c.l.b16 %v1135
        %v1223 = vunpack.c.h.b16 %v1135
        %v1224 = vunpack.c.l.b16 %v1136
        %v1225 = vunpack.c.l.b16 %v1137
        %v1226 = vunpack.c.h.b16 %v1137
        %v1227 = vunpack.c.l.b16 %v1138
        %v1228 = vunpack.c.l.b16 %v1139
        %v1229 = vunpack.c.h.b16 %v1139
        %v1230 = vunpack.c.l.b16 %v1140
        %v1231 = vunpack.c.l.b16 %v1141
        %v1232 = vunpack.c.h.b16 %v1141
        %v1233 = vunpack.c.l.b16 %v1142
        %v1234 = vunpack.c.l.b16 %v1143
        %v1235 = vunpack.c.h.b16 %v1143
        %v1236 = vunpack.c.l.b16 %v1144
        %v1237 = vunpack.c.l.b16 %v1145
        %v1238 = vunpack.c.h.b16 %v1145
        %v1239 = vunpack.c.l.b16 %v1146
        %v1240 = vunpack.c.l.b16 %v1147
        %v1241 = vunpack.c.h.b16 %v1147
        %v1242 = vunpack.c.l.b16 %v1148
        %v1243 = vunpack.c.l.b16 %v1149
        %v1244 = vunpack.c.h.b16 %v1149
        %v1245 = vunpack.c.l.b16 %v1150
        %v1246 = vunpack.c.l.b16 %v1151
        %v1247 = vunpack.c.h.b16 %v1151
        %v1248 = vunpack.c.l.b16 %v1152
        %v1249 = vunpack.c.l.b16 %v1153
        %v1250 = vunpack.c.h.b16 %v1153
        %v1251 = vunpack.c.l.b16 %v1154
        %v1252 = vpack.c.b16 %v1207, %v1204
        %v1253 = vpack.c.b16 %v1208, %v1205
        %v1254 = vpack.c.b16 %v1209, %v1206
        %v1255 = vpack.c.b16 %v1213, %v1210
        %v1256 = vpack.c.b16 %v1214, %v1211
        %v1257 = vpack.c.b16 %v1215, %v1212
        %v1258 = vpack.c.b16 %v1219, %v1216
        %v1259 = vpack.c.b16 %v1220, %v1217
        %v1260 = vpack.c.b16 %v1221, %v1218
        %v1261 = vpack.c.b16 %v1225, %v1222
        %v1262 = vpack.c.b16 %v1226, %v1223
        %v1263 = vpack.c.b16 %v1227, %v1224
        %v1264 = vpack.c.b16 %v1231, %v1228
        %v1265 = vpack.c.b16 %v1232, %v1229
        %v1266 = vpack.c.b16 %v1233, %v1230
        %v1267 = vpack.c.b16 %v1237, %v1234
        %v1268 = vpack.c.b16 %v1238, %v1235
        %v1269 = vpack.c.b16 %v1239, %v1236
        %v1270 = vpack.c.b16 %v1243, %v1240
        %v1271 = vpack.c.b16 %v1244, %v1241
        %v1272 = vpack.c.b16 %v1245, %v1242
        %v1273 = vpack.c.b16 %v1249, %v1246
        %v1274 = vpack.c.b16 %v1250, %v1247
        %v1275 = vpack.c.b16 %v1251, %v1248
        %1300 = vmatprep.subr.bf16.mxu0 %v1274
        %1301 = vmatpush1.bf16.msra.mxu0 %v1273
        %1302 = vmatprep.subr.bf16.mxu0 %v1271
        %1303 = vmatpush1.bf16.msra.mxu0 %v1270
        %1304 = vmatprep.subr.bf16.mxu0 %v1268
        %1305 = vmatpush1.bf16.msra.mxu0 %v1267
        %1306 = vmatprep.subr.bf16.mxu0 %v1265
        %1307 = vmatpush1.bf16.msra.mxu0 %v1264
        %1308 = vmatprep.subr.bf16.mxu0 %v1262
        %1309 = vmatpush1.bf16.msra.mxu0 %v1261
        %1310 = vmatprep.subr.bf16.mxu0 %v1259
        %1311 = vmatpush1.bf16.msra.mxu0 %v1258
        %1312 = vmatprep.subr.bf16.mxu0 %v1256
        %1313 = vmatpush1.bf16.msra.mxu0 %v1255
        %1314 = vmatprep.subr.bf16.mxu0 %v1253
        %1315 = vmatpush1.bf16.msra.mxu0 %v1252
        %1316 = vmatprep.subr.bf16.mxu0 0
        %1317 = vmatpush2.bf16.msra.mxu0 0
        %1318 = vmatprep.subr.bf16.mxu0 0
        %1319 = vmatpush2.bf16.msra.mxu0 0
        %1320 = vmatprep.subr.bf16.mxu0 0
        %1321 = vmatpush2.bf16.msra.mxu0 0
        %1322 = vmatprep.subr.bf16.mxu0 0
        %1323 = vmatpush2.bf16.msra.mxu0 0
        %1324 = vmatprep.subr.bf16.mxu0 0
        %1325 = vmatpush2.bf16.msra.mxu0 0
        %1326 = vmatprep.subr.bf16.mxu0 0
        %1327 = vmatpush2.bf16.msra.mxu0 0
        %1328 = vmatprep.subr.bf16.mxu0 0
        %1329 = vmatpush2.bf16.msra.mxu0 0
        %1330 = vmatprep.subr.bf16.mxu0 0
        %1331 = vmatpush2.bf16.msra.mxu0 0
        %1332 = vmatprep.mubr.bf16.mxu0 0
        %1333 = vmatmul.mubr.bf16.gmra.mxu0 %v1122
        %v1334 = vpop.f32.mrf.mxu0
        %v1335 = vadd.f32 %v1160, %v1334
        %v1336 = vpop.f32.mrf.mxu0
        %v1337 = vadd.f32 %v1164, %v1336
        %v1338 = vpop.f32.mrf.mxu0
        %v1339 = vadd.f32 %v1160, %v1338
        %v1340 = vpop.f32.mrf.mxu0
        %v1341 = vadd.f32 %v1164, %v1340
        %1342 = vdwg.mxu0
        %1343 = vmatprep.subr.bf16.mxu0 0
        %1344 = vmatpush1.bf16.msra.mxu0 %v1275
        %1345 = vmatprep.subr.bf16.mxu0 0
        %1346 = vmatpush1.bf16.msra.mxu0 %v1272
        %1347 = vmatprep.subr.bf16.mxu0 0
        %1348 = vmatpush1.bf16.msra.mxu0 %v1269
        %1349 = vmatprep.subr.bf16.mxu0 0
        %1350 = vmatpush1.bf16.msra.mxu0 %v1266
        %1351 = vmatprep.subr.bf16.mxu0 0
        %1352 = vmatpush1.bf16.msra.mxu0 %v1263
        %1353 = vmatprep.subr.bf16.mxu0 0
        %1354 = vmatpush1.bf16.msra.mxu0 %v1260
        %1355 = vmatprep.subr.bf16.mxu0 0
        %1356 = vmatpush1.bf16.msra.mxu0 %v1257
        %1357 = vmatprep.subr.bf16.mxu0 0
        %1358 = vmatpush1.bf16.msra.mxu0 %v1254
        %1359 = vmatprep.subr.bf16.mxu0 0
        %1360 = vmatpush2.bf16.msra.mxu0 0
        %1361 = vmatprep.subr.bf16.mxu0 0
        %1362 = vmatpush2.bf16.msra.mxu0 0
        %1363 = vmatprep.subr.bf16.mxu0 0
        %1364 = vmatpush2.bf16.msra.mxu0 0
        %1365 = vmatprep.subr.bf16.mxu0 0
        %1366 = vmatpush2.bf16.msra.mxu0 0
        %1367 = vmatprep.subr.bf16.mxu0 0
        %1368 = vmatpush2.bf16.msra.mxu0 0
        %1369 = vmatprep.subr.bf16.mxu0 0
        %1370 = vmatpush2.bf16.msra.mxu0 0
        %1371 = vmatprep.subr.bf16.mxu0 0
        %1372 = vmatpush2.bf16.msra.mxu0 0
        %1373 = vmatprep.subr.bf16.mxu0 0
        %1374 = vmatpush2.bf16.msra.mxu0 0
        %1375 = vmatprep.mubr.bf16.mxu0 0
        %1376 = vmatmul.mubr.bf16.gmra.mxu0 %v1122
        %v1377 = vpop.f32.mrf.mxu0
        %v1378 = vadd.f32 %v1168, %v1377
        %v1379 = vpop.f32.mrf.mxu0
        %v1380 = vpop.f32.mrf.mxu0
        %v1381 = vadd.f32 %v1168, %v1380
        %v1382 = vpop.f32.mrf.mxu0
        %1383 = vdwg.mxu0
        %v1384 = vmul.f32 %v1335, 0.17677669
        %v1385 = vmul.f32 %v1339, 0.17677669
        %v1386 = vpack.c.bf16 %v1385, %v1384
        %v1388 = vunpack.c.l.b16 %v1386
        %v1389 = vunpack.c.h.b16 %v1386
        %v1390 = vpack.c.b16 %v1388, %v1388
        %v1391 = vpack.c.b16 %v1389, %v1389
        %v1392 = vpack.c.bf16 %v1341, %v1337
        %v1394 = vunpack.c.l.b16 %v1392
        %v1395 = vunpack.c.h.b16 %v1392
        %v1396 = vpack.c.b16 %v1394, %v1394
        %v1397 = vpack.c.b16 %v1395, %v1395
        %v1398 = vpack.c.bf16 %v1381, %v1378
        %v1400 = vunpack.c.l.b16 %v1398
        %v1401 = vunpack.c.h.b16 %v1398
        %v1402 = vpack.c.b16 %v1400, %v1400
        %v1403 = vpack.c.b16 %v1401, %v1401
        %1404 = vrot.lane.b32.xlu0 %v1390, 96
        %v1405 = vpop.permute.xlu0 %1404
        %1406 = vrot.lane.b32.xlu0 %v1391, 96
        %v1407 = vpop.permute.xlu0 %1406
        %1408 = vrot.lane.b32.xlu0 %v1390, 64
        %v1409 = vpop.permute.xlu0 %1408
        %1410 = vrot.lane.b32.xlu0 %v1391, 64
        %v1411 = vpop.permute.xlu0 %1410
        %1412 = vrot.lane.b32.xlu0 %v1390, 32
        %v1413 = vpop.permute.xlu0 %1412
        %1414 = vrot.lane.b32.xlu0 %v1391, 32
        %v1415 = vpop.permute.xlu0 %1414
        %1416 = vrot.lane.b32.xlu0 %v1396, 96
        %v1417 = vpop.permute.xlu0 %1416
        %1418 = vrot.lane.b32.xlu0 %v1397, 96
        %v1419 = vpop.permute.xlu0 %1418
        %1420 = vrot.lane.b32.xlu0 %v1396, 64
        %v1421 = vpop.permute.xlu0 %1420
        %1422 = vrot.lane.b32.xlu0 %v1397, 64
        %v1423 = vpop.permute.xlu0 %1422
        %1424 = vrot.lane.b32.xlu0 %v1396, 32
        %v1425 = vpop.permute.xlu0 %1424
        %1426 = vrot.lane.b32.xlu0 %v1397, 32
        %v1427 = vpop.permute.xlu0 %1426
        %1428 = vrot.lane.b32.xlu0 %v1402, 96
        %v1429 = vpop.permute.xlu0 %1428
        %1430 = vrot.lane.b32.xlu0 %v1403, 96
        %v1431 = vpop.permute.xlu0 %1430
        %1432 = vrot.lane.b32.xlu0 %v1402, 64
        %v1433 = vpop.permute.xlu0 %1432
        %1434 = vrot.lane.b32.xlu0 %v1403, 64
        %v1435 = vpop.permute.xlu0 %1434
        %1436 = vrot.lane.b32.xlu0 %v1402, 32
        %v1437 = vpop.permute.xlu0 %1436
        %1438 = vrot.lane.b32.xlu0 %v1403, 32
        %v1439 = vpop.permute.xlu0 %1438
        %vm1440 = vcmask 261120
        %v1442 = vsel %vm1440, %v1390, 0
        %v1445 = vsel %vm1440, %v1396, 0
        %1447 = vmatprep.subr.bf16.mxu0 0
        %1448 = vmatpush1.bf16.xpose.msra.mxu0 0
        %1449 = vmatprep.subr.bf16.mxu0 0
        %1450 = vmatpush1.bf16.xpose.msra.mxu0 0
        %1451 = vmatprep.subr.bf16.mxu0 0
        %1452 = vmatpush1.bf16.xpose.msra.mxu0 0
        %1453 = vmatprep.subr.bf16.mxu0 0
        %1454 = vmatpush1.bf16.xpose.msra.mxu0 0
        %1455 = vmatprep.subr.bf16.mxu0 0
        %1456 = vmatpush1.bf16.xpose.msra.mxu0 0
        %1457 = vmatprep.subr.bf16.mxu0 0
        %1458 = vmatpush1.bf16.xpose.msra.mxu0 0
        %1459 = vmatprep.subr.bf16.mxu0 0
        %1460 = vmatpush1.bf16.xpose.msra.mxu0 0
        %1461 = vmatprep.subr.bf16.mxu0 0
        %1462 = vmatpush1.bf16.xpose.msra.mxu0 %v1445
        %1463 = vmatprep.subr.bf16.mxu0 0
        %1464 = vmatpush2.bf16.xpose.msra.mxu0 0
        %1465 = vmatprep.subr.bf16.mxu0 0
        %1466 = vmatpush2.bf16.xpose.msra.mxu0 0
        %1467 = vmatprep.subr.bf16.mxu0 0
        %1468 = vmatpush2.bf16.xpose.msra.mxu0 0
        %1469 = vmatprep.subr.bf16.mxu0 0
        %1470 = vmatpush2.bf16.xpose.msra.mxu0 0
        %1471 = vmatprep.subr.bf16.mxu0 0
        %1472 = vmatpush2.bf16.xpose.msra.mxu0 0
        %1473 = vmatprep.subr.bf16.mxu0 0
        %1474 = vmatpush2.bf16.xpose.msra.mxu0 0
        %1475 = vmatprep.subr.bf16.mxu0 0
        %1476 = vmatpush2.bf16.xpose.msra.mxu0 0
        %1477 = vmatprep.subr.bf16.mxu0 0
        %1478 = vmatpush2.bf16.xpose.msra.mxu0 0
        %1479 = vmatprep.mubr.bf16.mxu0 0
        %1480 = vmatmul.mubr.bf16.gmra.mxu0 %v1442
        %v1481 = vpop.f32.mrf.mxu0
        %v1482 = vadd.f32 0.0, %v1481
        %v1483 = vpop.f32.mrf.mxu0
        %v1484 = vpop.f32.mrf.mxu0
        %v1485 = vpop.f32.mrf.mxu0
        %1486 = vdwg.mxu0
        %v1488 = vsel %vm1440, %v1391, 0
        %v1491 = vsel %vm1440, %v1397, 0
        %1493 = vmatprep.subr.bf16.mxu0 0
        %1494 = vmatpush1.bf16.xpose.msra.mxu0 0
        %1495 = vmatprep.subr.bf16.mxu0 0
        %1496 = vmatpush1.bf16.xpose.msra.mxu0 0
        %1497 = vmatprep.subr.bf16.mxu0 0
        %1498 = vmatpush1.bf16.xpose.msra.mxu0 0
        %1499 = vmatprep.subr.bf16.mxu0 0
        %1500 = vmatpush1.bf16.xpose.msra.mxu0 0
        %1501 = vmatprep.subr.bf16.mxu0 0
        %1502 = vmatpush1.bf16.xpose.msra.mxu0 0
        %1503 = vmatprep.subr.bf16.mxu0 0
        %1504 = vmatpush1.bf16.xpose.msra.mxu0 0
        %1505 = vmatprep.subr.bf16.mxu0 0
        %1506 = vmatpush1.bf16.xpose.msra.mxu0 0
        %1507 = vmatprep.subr.bf16.mxu0 0
        %1508 = vmatpush1.bf16.xpose.msra.mxu0 %v1491
        %1509 = vmatprep.subr.bf16.mxu0 0
        %1510 = vmatpush2.bf16.xpose.msra.mxu0 0
        %1511 = vmatprep.subr.bf16.mxu0 0
        %1512 = vmatpush2.bf16.xpose.msra.mxu0 0
        %1513 = vmatprep.subr.bf16.mxu0 0
        %1514 = vmatpush2.bf16.xpose.msra.mxu0 0
        %1515 = vmatprep.subr.bf16.mxu0 0
        %1516 = vmatpush2.bf16.xpose.msra.mxu0 0
        %1517 = vmatprep.subr.bf16.mxu0 0
        %1518 = vmatpush2.bf16.xpose.msra.mxu0 0
        %1519 = vmatprep.subr.bf16.mxu0 0
        %1520 = vmatpush2.bf16.xpose.msra.mxu0 0
        %1521 = vmatprep.subr.bf16.mxu0 0
        %1522 = vmatpush2.bf16.xpose.msra.mxu0 0
        %1523 = vmatprep.subr.bf16.mxu0 0
        %1524 = vmatpush2.bf16.xpose.msra.mxu0 0
        %1525 = vmatprep.mubr.bf16.mxu0 0
        %1526 = vmatmul.mubr.bf16.gmra.mxu0 %v1488
        %v1527 = vpop.f32.mrf.mxu0
        %v1528 = vadd.f32 0.0, %v1527
        %v1529 = vpop.f32.mrf.mxu0
        %v1530 = vpop.f32.mrf.mxu0
        %v1531 = vpop.f32.mrf.mxu0
        %1532 = vdwg.mxu0
        %v1534 = vsel %vm1440, %v1405, 0
        %v1537 = vsel %vm1440, %v1417, 0
        %1539 = vmatprep.subr.bf16.mxu0 0
        %1540 = vmatpush1.bf16.xpose.msra.mxu0 0
        %1541 = vmatprep.subr.bf16.mxu0 0
        %1542 = vmatpush1.bf16.xpose.msra.mxu0 0
        %1543 = vmatprep.subr.bf16.mxu0 0
        %1544 = vmatpush1.bf16.xpose.msra.mxu0 0
        %1545 = vmatprep.subr.bf16.mxu0 0
        %1546 = vmatpush1.bf16.xpose.msra.mxu0 0
        %1547 = vmatprep.subr.bf16.mxu0 0
        %1548 = vmatpush1.bf16.xpose.msra.mxu0 0
        %1549 = vmatprep.subr.bf16.mxu0 0
        %1550 = vmatpush1.bf16.xpose.msra.mxu0 0
        %1551 = vmatprep.subr.bf16.mxu0 0
        %1552 = vmatpush1.bf16.xpose.msra.mxu0 0
        %1553 = vmatprep.subr.bf16.mxu0 0
        %1554 = vmatpush1.bf16.xpose.msra.mxu0 %v1537
        %1555 = vmatprep.subr.bf16.mxu0 0
        %1556 = vmatpush2.bf16.xpose.msra.mxu0 0
        %1557 = vmatprep.subr.bf16.mxu0 0
        %1558 = vmatpush2.bf16.xpose.msra.mxu0 0
        %1559 = vmatprep.subr.bf16.mxu0 0
        %1560 = vmatpush2.bf16.xpose.msra.mxu0 0
        %1561 = vmatprep.subr.bf16.mxu0 0
        %1562 = vmatpush2.bf16.xpose.msra.mxu0 0
        %1563 = vmatprep.subr.bf16.mxu0 0
        %1564 = vmatpush2.bf16.xpose.msra.mxu0 0
        %1565 = vmatprep.subr.bf16.mxu0 0
        %1566 = vmatpush2.bf16.xpose.msra.mxu0 0
        %1567 = vmatprep.subr.bf16.mxu0 0
        %1568 = vmatpush2.bf16.xpose.msra.mxu0 0
        %1569 = vmatprep.subr.bf16.mxu0 0
        %1570 = vmatpush2.bf16.xpose.msra.mxu0 0
        %1571 = vmatprep.mubr.bf16.mxu0 0
        %1572 = vmatmul.mubr.bf16.gmra.mxu0 %v1534
        %v1573 = vpop.f32.mrf.mxu0
        %v1574 = vadd.f32 0.0, %v1573
        %v1575 = vpop.f32.mrf.mxu0
        %v1576 = vpop.f32.mrf.mxu0
        %v1577 = vpop.f32.mrf.mxu0
        %1578 = vdwg.mxu0
        %v1580 = vsel %vm1440, %v1407, 0
        %v1583 = vsel %vm1440, %v1419, 0
        %1585 = vmatprep.subr.bf16.mxu0 0
        %1586 = vmatpush1.bf16.xpose.msra.mxu0 0
        %1587 = vmatprep.subr.bf16.mxu0 0
        %1588 = vmatpush1.bf16.xpose.msra.mxu0 0
        %1589 = vmatprep.subr.bf16.mxu0 0
        %1590 = vmatpush1.bf16.xpose.msra.mxu0 0
        %1591 = vmatprep.subr.bf16.mxu0 0
        %1592 = vmatpush1.bf16.xpose.msra.mxu0 0
        %1593 = vmatprep.subr.bf16.mxu0 0
        %1594 = vmatpush1.bf16.xpose.msra.mxu0 0
        %1595 = vmatprep.subr.bf16.mxu0 0
        %1596 = vmatpush1.bf16.xpose.msra.mxu0 0
        %1597 = vmatprep.subr.bf16.mxu0 0
        %1598 = vmatpush1.bf16.xpose.msra.mxu0 0
        %1599 = vmatprep.subr.bf16.mxu0 0
        %1600 = vmatpush1.bf16.xpose.msra.mxu0 %v1583
        %1601 = vmatprep.subr.bf16.mxu0 0
        %1602 = vmatpush2.bf16.xpose.msra.mxu0 0
        %1603 = vmatprep.subr.bf16.mxu0 0
        %1604 = vmatpush2.bf16.xpose.msra.mxu0 0
        %1605 = vmatprep.subr.bf16.mxu0 0
        %1606 = vmatpush2.bf16.xpose.msra.mxu0 0
        %1607 = vmatprep.subr.bf16.mxu0 0
        %1608 = vmatpush2.bf16.xpose.msra.mxu0 0
        %1609 = vmatprep.subr.bf16.mxu0 0
        %1610 = vmatpush2.bf16.xpose.msra.mxu0 0
        %1611 = vmatprep.subr.bf16.mxu0 0
        %1612 = vmatpush2.bf16.xpose.msra.mxu0 0
        %1613 = vmatprep.subr.bf16.mxu0 0
        %1614 = vmatpush2.bf16.xpose.msra.mxu0 0
        %1615 = vmatprep.subr.bf16.mxu0 0
        %1616 = vmatpush2.bf16.xpose.msra.mxu0 0
        %1617 = vmatprep.mubr.bf16.mxu0 0
        %1618 = vmatmul.mubr.bf16.gmra.mxu0 %v1580
        %v1619 = vpop.f32.mrf.mxu0
        %v1620 = vadd.f32 0.0, %v1619
        %v1621 = vpop.f32.mrf.mxu0
        %v1622 = vpop.f32.mrf.mxu0
        %v1623 = vpop.f32.mrf.mxu0
        %1624 = vdwg.mxu0
        %v1626 = vsel %vm1440, %v1409, 0
        %v1629 = vsel %vm1440, %v1421, 0
        %1631 = vmatprep.subr.bf16.mxu0 0
        %1632 = vmatpush1.bf16.xpose.msra.mxu0 0
        %1633 = vmatprep.subr.bf16.mxu0 0
        %1634 = vmatpush1.bf16.xpose.msra.mxu0 0
        %1635 = vmatprep.subr.bf16.mxu0 0
        %1636 = vmatpush1.bf16.xpose.msra.mxu0 0
        %1637 = vmatprep.subr.bf16.mxu0 0
        %1638 = vmatpush1.bf16.xpose.msra.mxu0 0
        %1639 = vmatprep.subr.bf16.mxu0 0
        %1640 = vmatpush1.bf16.xpose.msra.mxu0 0
        %1641 = vmatprep.subr.bf16.mxu0 0
        %1642 = vmatpush1.bf16.xpose.msra.mxu0 0
        %1643 = vmatprep.subr.bf16.mxu0 0
        %1644 = vmatpush1.bf16.xpose.msra.mxu0 0
        %1645 = vmatprep.subr.bf16.mxu0 0
        %1646 = vmatpush1.bf16.xpose.msra.mxu0 %v1629
        %1647 = vmatprep.subr.bf16.mxu0 0
        %1648 = vmatpush2.bf16.xpose.msra.mxu0 0
        %1649 = vmatprep.subr.bf16.mxu0 0
        %1650 = vmatpush2.bf16.xpose.msra.mxu0 0
        %1651 = vmatprep.subr.bf16.mxu0 0
        %1652 = vmatpush2.bf16.xpose.msra.mxu0 0
        %1653 = vmatprep.subr.bf16.mxu0 0
        %1654 = vmatpush2.bf16.xpose.msra.mxu0 0
        %1655 = vmatprep.subr.bf16.mxu0 0
        %1656 = vmatpush2.bf16.xpose.msra.mxu0 0
        %1657 = vmatprep.subr.bf16.mxu0 0
        %1658 = vmatpush2.bf16.xpose.msra.mxu0 0
        %1659 = vmatprep.subr.bf16.mxu0 0
        %1660 = vmatpush2.bf16.xpose.msra.mxu0 0
        %1661 = vmatprep.subr.bf16.mxu0 0
        %1662 = vmatpush2.bf16.xpose.msra.mxu0 0
        %1663 = vmatprep.mubr.bf16.mxu0 0
        %1664 = vmatmul.mubr.bf16.gmra.mxu0 %v1626
        %v1665 = vpop.f32.mrf.mxu0
        %v1666 = vadd.f32 0.0, %v1665
        %v1667 = vpop.f32.mrf.mxu0
        %v1668 = vpop.f32.mrf.mxu0
        %v1669 = vpop.f32.mrf.mxu0
        %1670 = vdwg.mxu0
        %v1672 = vsel %vm1440, %v1411, 0
        %v1675 = vsel %vm1440, %v1423, 0
        %1677 = vmatprep.subr.bf16.mxu0 0
        %1678 = vmatpush1.bf16.xpose.msra.mxu0 0
        %1679 = vmatprep.subr.bf16.mxu0 0
        %1680 = vmatpush1.bf16.xpose.msra.mxu0 0
        %1681 = vmatprep.subr.bf16.mxu0 0
        %1682 = vmatpush1.bf16.xpose.msra.mxu0 0
        %1683 = vmatprep.subr.bf16.mxu0 0
        %1684 = vmatpush1.bf16.xpose.msra.mxu0 0
        %1685 = vmatprep.subr.bf16.mxu0 0
        %1686 = vmatpush1.bf16.xpose.msra.mxu0 0
        %1687 = vmatprep.subr.bf16.mxu0 0
        %1688 = vmatpush1.bf16.xpose.msra.mxu0 0
        %1689 = vmatprep.subr.bf16.mxu0 0
        %1690 = vmatpush1.bf16.xpose.msra.mxu0 0
        %1691 = vmatprep.subr.bf16.mxu0 0
        %1692 = vmatpush1.bf16.xpose.msra.mxu0 %v1675
        %1693 = vmatprep.subr.bf16.mxu0 0
        %1694 = vmatpush2.bf16.xpose.msra.mxu0 0
        %1695 = vmatprep.subr.bf16.mxu0 0
        %1696 = vmatpush2.bf16.xpose.msra.mxu0 0
        %1697 = vmatprep.subr.bf16.mxu0 0
        %1698 = vmatpush2.bf16.xpose.msra.mxu0 0
        %1699 = vmatprep.subr.bf16.mxu0 0
        %1700 = vmatpush2.bf16.xpose.msra.mxu0 0
        %1701 = vmatprep.subr.bf16.mxu0 0
        %1702 = vmatpush2.bf16.xpose.msra.mxu0 0
        %1703 = vmatprep.subr.bf16.mxu0 0
        %1704 = vmatpush2.bf16.xpose.msra.mxu0 0
        %1705 = vmatprep.subr.bf16.mxu0 0
        %1706 = vmatpush2.bf16.xpose.msra.mxu0 0
        %1707 = vmatprep.subr.bf16.mxu0 0
        %1708 = vmatpush2.bf16.xpose.msra.mxu0 0
        %1709 = vmatprep.mubr.bf16.mxu0 0
        %1710 = vmatmul.mubr.bf16.gmra.mxu0 %v1672
        %v1711 = vpop.f32.mrf.mxu0
        %v1712 = vadd.f32 0.0, %v1711
        %v1713 = vpop.f32.mrf.mxu0
        %v1714 = vpop.f32.mrf.mxu0
        %v1715 = vpop.f32.mrf.mxu0
        %1716 = vdwg.mxu0
        %v1718 = vsel %vm1440, %v1413, 0
        %v1721 = vsel %vm1440, %v1425, 0
        %1723 = vmatprep.subr.bf16.mxu0 0
        %1724 = vmatpush1.bf16.xpose.msra.mxu0 0
        %1725 = vmatprep.subr.bf16.mxu0 0
        %1726 = vmatpush1.bf16.xpose.msra.mxu0 0
        %1727 = vmatprep.subr.bf16.mxu0 0
        %1728 = vmatpush1.bf16.xpose.msra.mxu0 0
        %1729 = vmatprep.subr.bf16.mxu0 0
        %1730 = vmatpush1.bf16.xpose.msra.mxu0 0
        %1731 = vmatprep.subr.bf16.mxu0 0
        %1732 = vmatpush1.bf16.xpose.msra.mxu0 0
        %1733 = vmatprep.subr.bf16.mxu0 0
        %1734 = vmatpush1.bf16.xpose.msra.mxu0 0
        %1735 = vmatprep.subr.bf16.mxu0 0
        %1736 = vmatpush1.bf16.xpose.msra.mxu0 0
        %1737 = vmatprep.subr.bf16.mxu0 0
        %1738 = vmatpush1.bf16.xpose.msra.mxu0 %v1721
        %1739 = vmatprep.subr.bf16.mxu0 0
        %1740 = vmatpush2.bf16.xpose.msra.mxu0 0
        %1741 = vmatprep.subr.bf16.mxu0 0
        %1742 = vmatpush2.bf16.xpose.msra.mxu0 0
        %1743 = vmatprep.subr.bf16.mxu0 0
        %1744 = vmatpush2.bf16.xpose.msra.mxu0 0
        %1745 = vmatprep.subr.bf16.mxu0 0
        %1746 = vmatpush2.bf16.xpose.msra.mxu0 0
        %1747 = vmatprep.subr.bf16.mxu0 0
        %1748 = vmatpush2.bf16.xpose.msra.mxu0 0
        %1749 = vmatprep.subr.bf16.mxu0 0
        %1750 = vmatpush2.bf16.xpose.msra.mxu0 0
        %1751 = vmatprep.subr.bf16.mxu0 0
        %1752 = vmatpush2.bf16.xpose.msra.mxu0 0
        %1753 = vmatprep.subr.bf16.mxu0 0
        %1754 = vmatpush2.bf16.xpose.msra.mxu0 0
        %1755 = vmatprep.mubr.bf16.mxu0 0
        %1756 = vmatmul.mubr.bf16.gmra.mxu0 %v1718
        %v1757 = vpop.f32.mrf.mxu0
        %v1758 = vadd.f32 0.0, %v1757
        %v1759 = vpop.f32.mrf.mxu0
        %v1760 = vpop.f32.mrf.mxu0
        %v1761 = vpop.f32.mrf.mxu0
        %1762 = vdwg.mxu0
        %v1764 = vsel %vm1440, %v1415, 0
        %v1767 = vsel %vm1440, %v1427, 0
        %1769 = vmatprep.subr.bf16.mxu0 0
        %1770 = vmatpush1.bf16.xpose.msra.mxu0 0
        %1771 = vmatprep.subr.bf16.mxu0 0
        %1772 = vmatpush1.bf16.xpose.msra.mxu0 0
        %1773 = vmatprep.subr.bf16.mxu0 0
        %1774 = vmatpush1.bf16.xpose.msra.mxu0 0
        %1775 = vmatprep.subr.bf16.mxu0 0
        %1776 = vmatpush1.bf16.xpose.msra.mxu0 0
        %1777 = vmatprep.subr.bf16.mxu0 0
        %1778 = vmatpush1.bf16.xpose.msra.mxu0 0
        %1779 = vmatprep.subr.bf16.mxu0 0
        %1780 = vmatpush1.bf16.xpose.msra.mxu0 0
        %1781 = vmatprep.subr.bf16.mxu0 0
        %1782 = vmatpush1.bf16.xpose.msra.mxu0 0
        %1783 = vmatprep.subr.bf16.mxu0 0
        %1784 = vmatpush1.bf16.xpose.msra.mxu0 %v1767
        %1785 = vmatprep.subr.bf16.mxu0 0
        %1786 = vmatpush2.bf16.xpose.msra.mxu0 0
        %1787 = vmatprep.subr.bf16.mxu0 0
        %1788 = vmatpush2.bf16.xpose.msra.mxu0 0
        %1789 = vmatprep.subr.bf16.mxu0 0
        %1790 = vmatpush2.bf16.xpose.msra.mxu0 0
        %1791 = vmatprep.subr.bf16.mxu0 0
        %1792 = vmatpush2.bf16.xpose.msra.mxu0 0
        %1793 = vmatprep.subr.bf16.mxu0 0
        %1794 = vmatpush2.bf16.xpose.msra.mxu0 0
        %1795 = vmatprep.subr.bf16.mxu0 0
        %1796 = vmatpush2.bf16.xpose.msra.mxu0 0
        %1797 = vmatprep.subr.bf16.mxu0 0
        %1798 = vmatpush2.bf16.xpose.msra.mxu0 0
        %1799 = vmatprep.subr.bf16.mxu0 0
        %1800 = vmatpush2.bf16.xpose.msra.mxu0 0
        %1801 = vmatprep.mubr.bf16.mxu0 0
        %1802 = vmatmul.mubr.bf16.gmra.mxu0 %v1764
        %v1803 = vpop.f32.mrf.mxu0
        %v1804 = vadd.f32 0.0, %v1803
        %v1805 = vpop.f32.mrf.mxu0
        %v1806 = vpop.f32.mrf.mxu0
        %v1807 = vpop.f32.mrf.mxu0
        %1808 = vdwg.mxu0
        %vm1809 = vcmask 64512
        %v1810 = vsel %vm1809, %v1482, -inf
        %1811 = vmax.xlane.f32.xlu0 %v1810
        %v1812 = vpop.xlane.xlu0 %1811
        %v1813 = vsel %vm1809, %v1528, -inf
        %1814 = vmax.xlane.f32.xlu0 %v1813
        %v1815 = vpop.xlane.xlu0 %1814
        %v1816 = vsel %vm1809, %v1574, -inf
        %1817 = vmax.xlane.f32.xlu0 %v1816
        %v1818 = vpop.xlane.xlu0 %1817
        %v1819 = vsel %vm1809, %v1620, -inf
        %1820 = vmax.xlane.f32.xlu0 %v1819
        %v1821 = vpop.xlane.xlu0 %1820
        %v1822 = vsel %vm1809, %v1666, -inf
        %1823 = vmax.xlane.f32.xlu0 %v1822
        %v1824 = vpop.xlane.xlu0 %1823
        %v1825 = vsel %vm1809, %v1712, -inf
        %1826 = vmax.xlane.f32.xlu0 %v1825
        %v1827 = vpop.xlane.xlu0 %1826
        %v1828 = vsel %vm1809, %v1758, -inf
        %1829 = vmax.xlane.f32.xlu0 %v1828
        %v1830 = vpop.xlane.xlu0 %1829
        %v1831 = vsel %vm1809, %v1804, -inf
        %1832 = vmax.xlane.f32.xlu0 %v1831
        %v1833 = vpop.xlane.xlu0 %1832
        %v1834 = vsub.f32 %v1482, %v1812
        %v1835 = vsub.f32 %v1528, %v1815
        %v1836 = vsub.f32 %v1574, %v1818
        %v1837 = vsub.f32 %v1620, %v1821
        %v1838 = vsub.f32 %v1666, %v1824
        %v1839 = vsub.f32 %v1712, %v1827
        %v1840 = vsub.f32 %v1758, %v1830
        %v1841 = vsub.f32 %v1804, %v1833
        %v1842 = vmul.f32 %v1834, 1.442695
        %v1843 = vpow.pop %v1842
        %v1844 = vmul.f32 %v1835, 1.442695
        %v1845 = vpow.pop %v1844
        %v1846 = vmul.f32 %v1836, 1.442695
        %v1847 = vpow.pop %v1846
        %v1848 = vmul.f32 %v1837, 1.442695
        %v1849 = vpow.pop %v1848
        %v1850 = vmul.f32 %v1838, 1.442695
        %v1851 = vpow.pop %v1850
        %v1852 = vmul.f32 %v1839, 1.442695
        %v1853 = vpow.pop %v1852
        %v1854 = vmul.f32 %v1840, 1.442695
        %v1855 = vpow.pop %v1854
        %v1856 = vmul.f32 %v1841, 1.442695
        %v1857 = vpow.pop %v1856
        %v1858 = vsel %vm1809, %v1843, 0.0
        %1859 = vadd.xlane.f32.xlu0 %v1858
        %v1860 = vpop.xlane.xlu0 %1859
        %v1861 = vsel %vm1809, %v1845, 0.0
        %1862 = vadd.xlane.f32.xlu0 %v1861
        %v1863 = vpop.xlane.xlu0 %1862
        %v1864 = vsel %vm1809, %v1847, 0.0
        %1865 = vadd.xlane.f32.xlu0 %v1864
        %v1866 = vpop.xlane.xlu0 %1865
        %v1867 = vsel %vm1809, %v1849, 0.0
        %1868 = vadd.xlane.f32.xlu0 %v1867
        %v1869 = vpop.xlane.xlu0 %1868
        %v1870 = vsel %vm1809, %v1851, 0.0
        %1871 = vadd.xlane.f32.xlu0 %v1870
        %v1872 = vpop.xlane.xlu0 %1871
        %v1873 = vsel %vm1809, %v1853, 0.0
        %1874 = vadd.xlane.f32.xlu0 %v1873
        %v1875 = vpop.xlane.xlu0 %1874
        %v1876 = vsel %vm1809, %v1855, 0.0
        %1877 = vadd.xlane.f32.xlu0 %v1876
        %v1878 = vpop.xlane.xlu0 %1877
        %v1879 = vsel %vm1809, %v1857, 0.0
        %1880 = vadd.xlane.f32.xlu0 %v1879
        %v1881 = vpop.xlane.xlu0 %1880
        %v1882 = vpack.c.bf16 %v1843, %v1843
        %v1883 = vpack.c.bf16 %v1845, %v1845
        %v1884 = vpack.c.bf16 %v1847, %v1847
        %v1885 = vpack.c.bf16 %v1849, %v1849
        %v1886 = vpack.c.bf16 %v1851, %v1851
        %v1887 = vpack.c.bf16 %v1853, %v1853
        %v1888 = vpack.c.bf16 %v1855, %v1855
        %v1889 = vpack.c.bf16 %v1857, %v1857
        %v1891 = vsel %vm1809, %v1882, 0
        %vm1893 = vcmask 1043456
        %v1895 = vsel %vm1893, %v1402, 0
        %1897 = vmatprep.subr.bf16.mxu0 0
        %1898 = vmatpush1.bf16.msra.mxu0 0
        %1899 = vmatprep.subr.bf16.mxu0 0
        %1900 = vmatpush1.bf16.msra.mxu0 0
        %1901 = vmatprep.subr.bf16.mxu0 0
        %1902 = vmatpush1.bf16.msra.mxu0 0
        %1903 = vmatprep.subr.bf16.mxu0 0
        %1904 = vmatpush1.bf16.msra.mxu0 0
        %1905 = vmatprep.subr.bf16.mxu0 0
        %1906 = vmatpush1.bf16.msra.mxu0 0
        %1907 = vmatprep.subr.bf16.mxu0 0
        %1908 = vmatpush1.bf16.msra.mxu0 0
        %1909 = vmatprep.subr.bf16.mxu0 0
        %1910 = vmatpush1.bf16.msra.mxu0 0
        %1911 = vmatprep.subr.bf16.mxu0 0
        %1912 = vmatpush1.bf16.msra.mxu0 %v1895
        %1913 = vmatprep.subr.bf16.mxu0 0
        %1914 = vmatpush2.bf16.msra.mxu0 0
        %1915 = vmatprep.subr.bf16.mxu0 0
        %1916 = vmatpush2.bf16.msra.mxu0 0
        %1917 = vmatprep.subr.bf16.mxu0 0
        %1918 = vmatpush2.bf16.msra.mxu0 0
        %1919 = vmatprep.subr.bf16.mxu0 0
        %1920 = vmatpush2.bf16.msra.mxu0 0
        %1921 = vmatprep.subr.bf16.mxu0 0
        %1922 = vmatpush2.bf16.msra.mxu0 0
        %1923 = vmatprep.subr.bf16.mxu0 0
        %1924 = vmatpush2.bf16.msra.mxu0 0
        %1925 = vmatprep.subr.bf16.mxu0 0
        %1926 = vmatpush2.bf16.msra.mxu0 0
        %1927 = vmatprep.subr.bf16.mxu0 0
        %1928 = vmatpush2.bf16.msra.mxu0 0
        %1929 = vmatprep.mubr.bf16.mxu0 0
        %1930 = vmatmul.mubr.bf16.gmra.mxu0 %v1891
        %v1931 = vpop.f32.mrf.mxu0
        %v1932 = vadd.f32 0.0, %v1931
        %v1933 = vpop.f32.mrf.mxu0
        %v1934 = vpop.f32.mrf.mxu0
        %v1935 = vpop.f32.mrf.mxu0
        %1936 = vdwg.mxu0
        %v1938 = vsel %vm1809, %v1883, 0
        %v1941 = vsel %vm1893, %v1403, 0
        %1943 = vmatprep.subr.bf16.mxu0 0
        %1944 = vmatpush1.bf16.msra.mxu0 0
        %1945 = vmatprep.subr.bf16.mxu0 0
        %1946 = vmatpush1.bf16.msra.mxu0 0
        %1947 = vmatprep.subr.bf16.mxu0 0
        %1948 = vmatpush1.bf16.msra.mxu0 0
        %1949 = vmatprep.subr.bf16.mxu0 0
        %1950 = vmatpush1.bf16.msra.mxu0 0
        %1951 = vmatprep.subr.bf16.mxu0 0
        %1952 = vmatpush1.bf16.msra.mxu0 0
        %1953 = vmatprep.subr.bf16.mxu0 0
        %1954 = vmatpush1.bf16.msra.mxu0 0
        %1955 = vmatprep.subr.bf16.mxu0 0
        %1956 = vmatpush1.bf16.msra.mxu0 0
        %1957 = vmatprep.subr.bf16.mxu0 0
        %1958 = vmatpush1.bf16.msra.mxu0 %v1941
        %1959 = vmatprep.subr.bf16.mxu0 0
        %1960 = vmatpush2.bf16.msra.mxu0 0
        %1961 = vmatprep.subr.bf16.mxu0 0
        %1962 = vmatpush2.bf16.msra.mxu0 0
        %1963 = vmatprep.subr.bf16.mxu0 0
        %1964 = vmatpush2.bf16.msra.mxu0 0
        %1965 = vmatprep.subr.bf16.mxu0 0
        %1966 = vmatpush2.bf16.msra.mxu0 0
        %1967 = vmatprep.subr.bf16.mxu0 0
        %1968 = vmatpush2.bf16.msra.mxu0 0
        %1969 = vmatprep.subr.bf16.mxu0 0
        %1970 = vmatpush2.bf16.msra.mxu0 0
        %1971 = vmatprep.subr.bf16.mxu0 0
        %1972 = vmatpush2.bf16.msra.mxu0 0
        %1973 = vmatprep.subr.bf16.mxu0 0
        %1974 = vmatpush2.bf16.msra.mxu0 0
        %1975 = vmatprep.mubr.bf16.mxu0 0
        %1976 = vmatmul.mubr.bf16.gmra.mxu0 %v1938
        %v1977 = vpop.f32.mrf.mxu0
        %v1978 = vadd.f32 0.0, %v1977
        %v1979 = vpop.f32.mrf.mxu0
        %v1980 = vpop.f32.mrf.mxu0
        %v1981 = vpop.f32.mrf.mxu0
        %1982 = vdwg.mxu0
        %v1984 = vsel %vm1809, %v1884, 0
        %v1987 = vsel %vm1893, %v1429, 0
        %1989 = vmatprep.subr.bf16.mxu0 0
        %1990 = vmatpush1.bf16.msra.mxu0 0
        %1991 = vmatprep.subr.bf16.mxu0 0
        %1992 = vmatpush1.bf16.msra.mxu0 0
        %1993 = vmatprep.subr.bf16.mxu0 0
        %1994 = vmatpush1.bf16.msra.mxu0 0
        %1995 = vmatprep.subr.bf16.mxu0 0
        %1996 = vmatpush1.bf16.msra.mxu0 0
        %1997 = vmatprep.subr.bf16.mxu0 0
        %1998 = vmatpush1.bf16.msra.mxu0 0
        %1999 = vmatprep.subr.bf16.mxu0 0
        %2000 = vmatpush1.bf16.msra.mxu0 0
        %2001 = vmatprep.subr.bf16.mxu0 0
        %2002 = vmatpush1.bf16.msra.mxu0 0
        %2003 = vmatprep.subr.bf16.mxu0 0
        %2004 = vmatpush1.bf16.msra.mxu0 %v1987
        %2005 = vmatprep.subr.bf16.mxu0 0
        %2006 = vmatpush2.bf16.msra.mxu0 0
        %2007 = vmatprep.subr.bf16.mxu0 0
        %2008 = vmatpush2.bf16.msra.mxu0 0
        %2009 = vmatprep.subr.bf16.mxu0 0
        %2010 = vmatpush2.bf16.msra.mxu0 0
        %2011 = vmatprep.subr.bf16.mxu0 0
        %2012 = vmatpush2.bf16.msra.mxu0 0
        %2013 = vmatprep.subr.bf16.mxu0 0
        %2014 = vmatpush2.bf16.msra.mxu0 0
        %2015 = vmatprep.subr.bf16.mxu0 0
        %2016 = vmatpush2.bf16.msra.mxu0 0
        %2017 = vmatprep.subr.bf16.mxu0 0
        %2018 = vmatpush2.bf16.msra.mxu0 0
        %2019 = vmatprep.subr.bf16.mxu0 0
        %2020 = vmatpush2.bf16.msra.mxu0 0
        %2021 = vmatprep.mubr.bf16.mxu0 0
        %2022 = vmatmul.mubr.bf16.gmra.mxu0 %v1984
        %v2023 = vpop.f32.mrf.mxu0
        %v2024 = vadd.f32 0.0, %v2023
        %v2025 = vpop.f32.mrf.mxu0
        %v2026 = vpop.f32.mrf.mxu0
        %v2027 = vpop.f32.mrf.mxu0
        %2028 = vdwg.mxu0
        %v2030 = vsel %vm1809, %v1885, 0
        %v2033 = vsel %vm1893, %v1431, 0
        %2035 = vmatprep.subr.bf16.mxu0 0
        %2036 = vmatpush1.bf16.msra.mxu0 0
        %2037 = vmatprep.subr.bf16.mxu0 0
        %2038 = vmatpush1.bf16.msra.mxu0 0
        %2039 = vmatprep.subr.bf16.mxu0 0
        %2040 = vmatpush1.bf16.msra.mxu0 0
        %2041 = vmatprep.subr.bf16.mxu0 0
        %2042 = vmatpush1.bf16.msra.mxu0 0
        %2043 = vmatprep.subr.bf16.mxu0 0
        %2044 = vmatpush1.bf16.msra.mxu0 0
        %2045 = vmatprep.subr.bf16.mxu0 0
        %2046 = vmatpush1.bf16.msra.mxu0 0
        %2047 = vmatprep.subr.bf16.mxu0 0
        %2048 = vmatpush1.bf16.msra.mxu0 0
        %2049 = vmatprep.subr.bf16.mxu0 0
        %2050 = vmatpush1.bf16.msra.mxu0 %v2033
        %2051 = vmatprep.subr.bf16.mxu0 0
        %2052 = vmatpush2.bf16.msra.mxu0 0
        %2053 = vmatprep.subr.bf16.mxu0 0
        %2054 = vmatpush2.bf16.msra.mxu0 0
        %2055 = vmatprep.subr.bf16.mxu0 0
        %2056 = vmatpush2.bf16.msra.mxu0 0
        %2057 = vmatprep.subr.bf16.mxu0 0
        %2058 = vmatpush2.bf16.msra.mxu0 0
        %2059 = vmatprep.subr.bf16.mxu0 0
        %2060 = vmatpush2.bf16.msra.mxu0 0
        %2061 = vmatprep.subr.bf16.mxu0 0
        %2062 = vmatpush2.bf16.msra.mxu0 0
        %2063 = vmatprep.subr.bf16.mxu0 0
        %2064 = vmatpush2.bf16.msra.mxu0 0
        %2065 = vmatprep.subr.bf16.mxu0 0
        %2066 = vmatpush2.bf16.msra.mxu0 0
        %2067 = vmatprep.mubr.bf16.mxu0 0
        %2068 = vmatmul.mubr.bf16.gmra.mxu0 %v2030
        %v2069 = vpop.f32.mrf.mxu0
        %v2070 = vadd.f32 0.0, %v2069
        %v2071 = vpop.f32.mrf.mxu0
        %v2072 = vpop.f32.mrf.mxu0
        %v2073 = vpop.f32.mrf.mxu0
        %2074 = vdwg.mxu0
        %v2076 = vsel %vm1809, %v1886, 0
        %v2079 = vsel %vm1893, %v1433, 0
        %2081 = vmatprep.subr.bf16.mxu0 0
        %2082 = vmatpush1.bf16.msra.mxu0 0
        %2083 = vmatprep.subr.bf16.mxu0 0
        %2084 = vmatpush1.bf16.msra.mxu0 0
        %2085 = vmatprep.subr.bf16.mxu0 0
        %2086 = vmatpush1.bf16.msra.mxu0 0
        %2087 = vmatprep.subr.bf16.mxu0 0
        %2088 = vmatpush1.bf16.msra.mxu0 0
        %2089 = vmatprep.subr.bf16.mxu0 0
        %2090 = vmatpush1.bf16.msra.mxu0 0
        %2091 = vmatprep.subr.bf16.mxu0 0
        %2092 = vmatpush1.bf16.msra.mxu0 0
        %2093 = vmatprep.subr.bf16.mxu0 0
        %2094 = vmatpush1.bf16.msra.mxu0 0
        %2095 = vmatprep.subr.bf16.mxu0 0
        %2096 = vmatpush1.bf16.msra.mxu0 %v2079
        %2097 = vmatprep.subr.bf16.mxu0 0
        %2098 = vmatpush2.bf16.msra.mxu0 0
        %2099 = vmatprep.subr.bf16.mxu0 0
        %2100 = vmatpush2.bf16.msra.mxu0 0
        %2101 = vmatprep.subr.bf16.mxu0 0
        %2102 = vmatpush2.bf16.msra.mxu0 0
        %2103 = vmatprep.subr.bf16.mxu0 0
        %2104 = vmatpush2.bf16.msra.mxu0 0
        %2105 = vmatprep.subr.bf16.mxu0 0
        %2106 = vmatpush2.bf16.msra.mxu0 0
        %2107 = vmatprep.subr.bf16.mxu0 0
        %2108 = vmatpush2.bf16.msra.mxu0 0
        %2109 = vmatprep.subr.bf16.mxu0 0
        %2110 = vmatpush2.bf16.msra.mxu0 0
        %2111 = vmatprep.subr.bf16.mxu0 0
        %2112 = vmatpush2.bf16.msra.mxu0 0
        %2113 = vmatprep.mubr.bf16.mxu0 0
        %2114 = vmatmul.mubr.bf16.gmra.mxu0 %v2076
        %v2115 = vpop.f32.mrf.mxu0
        %v2116 = vadd.f32 0.0, %v2115
        %v2117 = vpop.f32.mrf.mxu0
        %v2118 = vpop.f32.mrf.mxu0
        %v2119 = vpop.f32.mrf.mxu0
        %2120 = vdwg.mxu0
        %v2122 = vsel %vm1809, %v1887, 0
        %v2125 = vsel %vm1893, %v1435, 0
        %2127 = vmatprep.subr.bf16.mxu0 0
        %2128 = vmatpush1.bf16.msra.mxu0 0
        %2129 = vmatprep.subr.bf16.mxu0 0
        %2130 = vmatpush1.bf16.msra.mxu0 0
        %2131 = vmatprep.subr.bf16.mxu0 0
        %2132 = vmatpush1.bf16.msra.mxu0 0
        %2133 = vmatprep.subr.bf16.mxu0 0
        %2134 = vmatpush1.bf16.msra.mxu0 0
        %2135 = vmatprep.subr.bf16.mxu0 0
        %2136 = vmatpush1.bf16.msra.mxu0 0
        %2137 = vmatprep.subr.bf16.mxu0 0
        %2138 = vmatpush1.bf16.msra.mxu0 0
        %2139 = vmatprep.subr.bf16.mxu0 0
        %2140 = vmatpush1.bf16.msra.mxu0 0
        %2141 = vmatprep.subr.bf16.mxu0 0
        %2142 = vmatpush1.bf16.msra.mxu0 %v2125
        %2143 = vmatprep.subr.bf16.mxu0 0
        %2144 = vmatpush2.bf16.msra.mxu0 0
        %2145 = vmatprep.subr.bf16.mxu0 0
        %2146 = vmatpush2.bf16.msra.mxu0 0
        %2147 = vmatprep.subr.bf16.mxu0 0
        %2148 = vmatpush2.bf16.msra.mxu0 0
        %2149 = vmatprep.subr.bf16.mxu0 0
        %2150 = vmatpush2.bf16.msra.mxu0 0
        %2151 = vmatprep.subr.bf16.mxu0 0
        %2152 = vmatpush2.bf16.msra.mxu0 0
        %2153 = vmatprep.subr.bf16.mxu0 0
        %2154 = vmatpush2.bf16.msra.mxu0 0
        %2155 = vmatprep.subr.bf16.mxu0 0
        %2156 = vmatpush2.bf16.msra.mxu0 0
        %2157 = vmatprep.subr.bf16.mxu0 0
        %2158 = vmatpush2.bf16.msra.mxu0 0
        %2159 = vmatprep.mubr.bf16.mxu0 0
        %2160 = vmatmul.mubr.bf16.gmra.mxu0 %v2122
        %v2161 = vpop.f32.mrf.mxu0
        %v2162 = vadd.f32 0.0, %v2161
        %v2163 = vpop.f32.mrf.mxu0
        %v2164 = vpop.f32.mrf.mxu0
        %v2165 = vpop.f32.mrf.mxu0
        %2166 = vdwg.mxu0
        %v2168 = vsel %vm1809, %v1888, 0
        %v2171 = vsel %vm1893, %v1437, 0
        %2173 = vmatprep.subr.bf16.mxu0 0
        %2174 = vmatpush1.bf16.msra.mxu0 0
        %2175 = vmatprep.subr.bf16.mxu0 0
        %2176 = vmatpush1.bf16.msra.mxu0 0
        %2177 = vmatprep.subr.bf16.mxu0 0
        %2178 = vmatpush1.bf16.msra.mxu0 0
        %2179 = vmatprep.subr.bf16.mxu0 0
        %2180 = vmatpush1.bf16.msra.mxu0 0
        %2181 = vmatprep.subr.bf16.mxu0 0
        %2182 = vmatpush1.bf16.msra.mxu0 0
        %2183 = vmatprep.subr.bf16.mxu0 0
        %2184 = vmatpush1.bf16.msra.mxu0 0
        %2185 = vmatprep.subr.bf16.mxu0 0
        %2186 = vmatpush1.bf16.msra.mxu0 0
        %2187 = vmatprep.subr.bf16.mxu0 0
        %2188 = vmatpush1.bf16.msra.mxu0 %v2171
        %2189 = vmatprep.subr.bf16.mxu0 0
        %2190 = vmatpush2.bf16.msra.mxu0 0
        %2191 = vmatprep.subr.bf16.mxu0 0
        %2192 = vmatpush2.bf16.msra.mxu0 0
        %2193 = vmatprep.subr.bf16.mxu0 0
        %2194 = vmatpush2.bf16.msra.mxu0 0
        %2195 = vmatprep.subr.bf16.mxu0 0
        %2196 = vmatpush2.bf16.msra.mxu0 0
        %2197 = vmatprep.subr.bf16.mxu0 0
        %2198 = vmatpush2.bf16.msra.mxu0 0
        %2199 = vmatprep.subr.bf16.mxu0 0
        %2200 = vmatpush2.bf16.msra.mxu0 0
        %2201 = vmatprep.subr.bf16.mxu0 0
        %2202 = vmatpush2.bf16.msra.mxu0 0
        %2203 = vmatprep.subr.bf16.mxu0 0
        %2204 = vmatpush2.bf16.msra.mxu0 0
        %2205 = vmatprep.mubr.bf16.mxu0 0
        %2206 = vmatmul.mubr.bf16.gmra.mxu0 %v2168
        %v2207 = vpop.f32.mrf.mxu0
        %v2208 = vadd.f32 0.0, %v2207
        %v2209 = vpop.f32.mrf.mxu0
        %v2210 = vpop.f32.mrf.mxu0
        %v2211 = vpop.f32.mrf.mxu0
        %2212 = vdwg.mxu0
        %v2214 = vsel %vm1809, %v1889, 0
        %v2217 = vsel %vm1893, %v1439, 0
        %2219 = vmatprep.subr.bf16.mxu0 0
        %2220 = vmatpush1.bf16.msra.mxu0 0
        %2221 = vmatprep.subr.bf16.mxu0 0
        %2222 = vmatpush1.bf16.msra.mxu0 0
        %2223 = vmatprep.subr.bf16.mxu0 0
        %2224 = vmatpush1.bf16.msra.mxu0 0
        %2225 = vmatprep.subr.bf16.mxu0 0
        %2226 = vmatpush1.bf16.msra.mxu0 0
        %2227 = vmatprep.subr.bf16.mxu0 0
        %2228 = vmatpush1.bf16.msra.mxu0 0
        %2229 = vmatprep.subr.bf16.mxu0 0
        %2230 = vmatpush1.bf16.msra.mxu0 0
        %2231 = vmatprep.subr.bf16.mxu0 0
        %2232 = vmatpush1.bf16.msra.mxu0 0
        %2233 = vmatprep.subr.bf16.mxu0 0
        %2234 = vmatpush1.bf16.msra.mxu0 %v2217
        %2235 = vmatprep.subr.bf16.mxu0 0
        %2236 = vmatpush2.bf16.msra.mxu0 0
        %2237 = vmatprep.subr.bf16.mxu0 0
        %2238 = vmatpush2.bf16.msra.mxu0 0
        %2239 = vmatprep.subr.bf16.mxu0 0
        %2240 = vmatpush2.bf16.msra.mxu0 0
        %2241 = vmatprep.subr.bf16.mxu0 0
        %2242 = vmatpush2.bf16.msra.mxu0 0
        %2243 = vmatprep.subr.bf16.mxu0 0
        %2244 = vmatpush2.bf16.msra.mxu0 0
        %2245 = vmatprep.subr.bf16.mxu0 0
        %2246 = vmatpush2.bf16.msra.mxu0 0
        %2247 = vmatprep.subr.bf16.mxu0 0
        %2248 = vmatpush2.bf16.msra.mxu0 0
        %2249 = vmatprep.subr.bf16.mxu0 0
        %2250 = vmatpush2.bf16.msra.mxu0 0
        %2251 = vmatprep.mubr.bf16.mxu0 0
        %2252 = vmatmul.mubr.bf16.gmra.mxu0 %v2214
        %v2253 = vpop.f32.mrf.mxu0
        %v2254 = vadd.f32 0.0, %v2253
        %v2255 = vpop.f32.mrf.mxu0
        %v2256 = vpop.f32.mrf.mxu0
        %v2257 = vpop.f32.mrf.mxu0
        %2258 = vdwg.mxu0
        %v2259 = vrcp.pop %v1860
        %v2260 = vrcp.pop %v1863
        %v2261 = vrcp.pop %v1866
        %v2262 = vrcp.pop %v1869
        %v2263 = vrcp.pop %v1872
        %v2264 = vrcp.pop %v1875
        %v2265 = vrcp.pop %v1878
        %v2266 = vrcp.pop %v1881
        %v2267 = vmul.f32 %v1932, %v2259
        %v2268 = vmul.f32 %v1978, %v2260
        %v2269 = vmul.f32 %v2024, %v2261
        %v2270 = vmul.f32 %v2070, %v2262
        %v2271 = vmul.f32 %v2116, %v2263
        %v2272 = vmul.f32 %v2162, %v2264
        %v2273 = vmul.f32 %v2208, %v2265
        %v2274 = vmul.f32 %v2254, %v2266
        %2277 = vrot.lane.b32.xlu0 %v2269, 32
        %v2278 = vpop.permute.xlu0 %2277
        %2279 = vrot.lane.b32.xlu0 %v2270, 32
        %v2280 = vpop.permute.xlu0 %2279
        %2285 = vrot.lane.b32.xlu0 %v2271, 64
        %v2286 = vpop.permute.xlu0 %2285
        %2287 = vrot.lane.b32.xlu0 %v2272, 64
        %v2288 = vpop.permute.xlu0 %2287
        %2293 = vrot.lane.b32.xlu0 %v2273, 96
        %v2294 = vpop.permute.xlu0 %2293
        %2295 = vrot.lane.b32.xlu0 %v2274, 96
        %v2296 = vpop.permute.xlu0 %2295
        %v2299 = vsel %vm1440, %v2267, %v2278
        %v2300 = vsel %vm1440, %v2268, %v2280
        %vm2301 = vcmask 523264
        %v2302 = vsel %vm2301, %v2299, %v2286
        %v2303 = vsel %vm2301, %v2300, %v2288
        %vm2304 = vcmask 785408
        %v2305 = vsel %vm2304, %v2302, %v2294
        %v2306 = vsel %vm2304, %v2303, %v2296
        %v2307 = vpack.c.bf16 %v2306, %v2305
        %v2308 = vld [vmem:[%s828] sm:$0xf]
        %v2309 = vld [vmem:[%s828 + $0x4] sm:$0xf]
        %v2310 = vld [vmem:[%s828 + $0x8] sm:$0xf]
        %v2311 = vld [vmem:[%s828 + $0xc] sm:$0xf]
        %v2312 = vld [vmem:[%s828 + $0x10] sm:$0xf]
        %v2313 = vld [vmem:[%s828 + $0x14] sm:$0xf]
        %v2314 = vld [vmem:[%s828 + $0x18] sm:$0xf]
        %v2315 = vld [vmem:[%s828 + $0x1c] sm:$0xf]
        %v2316 = vld [vmem:[%s828 + $0x20] sm:$0xf]
        %v2317 = vld [vmem:[%s828 + $0x24] sm:$0xf]
        %v2318 = vld [vmem:[%s828 + $0x28] sm:$0xf]
        %v2319 = vld [vmem:[%s828 + $0x2c] sm:$0xf]
        %v2320 = vld [vmem:[%s828 + $0x30] sm:$0xf]
        %v2321 = vld [vmem:[%s828 + $0x34] sm:$0xf]
        %v2322 = vld [vmem:[%s828 + $0x38] sm:$0xf]
        %v2323 = vld [vmem:[%s828 + $0x3c] sm:$0xf]
        %v2324 = vld [vmem:[%s953] sm:$0x1]
        %v2326 = vlaneseq
        %v2327 = vshrl.u32 %v2326, 7
        %v2328 = vsub.s32 0, %v2327
        %v2329 = vrot.slane %v2324, %v2328
        %v2347 = vunpack.c.l.b16 %v2308
        %v2348 = vunpack.c.l.b16 %v2309
        %v2349 = vunpack.c.l.b16 %v2310
        %v2350 = vunpack.c.l.b16 %v2311
        %v2351 = vunpack.c.l.b16 %v2312
        %v2352 = vunpack.c.l.b16 %v2313
        %v2353 = vunpack.c.l.b16 %v2314
        %v2354 = vunpack.c.l.b16 %v2315
        %v2355 = vunpack.c.l.b16 %v2316
        %v2356 = vunpack.c.l.b16 %v2317
        %v2357 = vunpack.c.l.b16 %v2318
        %v2358 = vunpack.c.l.b16 %v2319
        %v2359 = vunpack.c.l.b16 %v2320
        %v2360 = vunpack.c.l.b16 %v2321
        %v2361 = vunpack.c.l.b16 %v2322
        %v2362 = vunpack.c.l.b16 %v2323
        %v2363 = vpack.c.b16 %v2348, %v2347
        %v2364 = vpack.c.b16 %v2350, %v2349
        %v2365 = vpack.c.b16 %v2352, %v2351
        %v2366 = vpack.c.b16 %v2354, %v2353
        %v2367 = vpack.c.b16 %v2356, %v2355
        %v2368 = vpack.c.b16 %v2358, %v2357
        %v2369 = vpack.c.b16 %v2360, %v2359
        %v2370 = vpack.c.b16 %v2362, %v2361
        %2379 = vmatprep.subr.bf16.mxu0 0
        %2380 = vmatpush1.bf16.msra.mxu0 %v2370
        %2381 = vmatprep.subr.bf16.mxu0 0
        %2382 = vmatpush1.bf16.msra.mxu0 %v2369
        %2383 = vmatprep.subr.bf16.mxu0 0
        %2384 = vmatpush1.bf16.msra.mxu0 %v2368
        %2385 = vmatprep.subr.bf16.mxu0 0
        %2386 = vmatpush1.bf16.msra.mxu0 %v2367
        %2387 = vmatprep.subr.bf16.mxu0 0
        %2388 = vmatpush1.bf16.msra.mxu0 %v2366
        %2389 = vmatprep.subr.bf16.mxu0 0
        %2390 = vmatpush1.bf16.msra.mxu0 %v2365
        %2391 = vmatprep.subr.bf16.mxu0 0
        %2392 = vmatpush1.bf16.msra.mxu0 %v2364
        %2393 = vmatprep.subr.bf16.mxu0 0
        %2394 = vmatpush1.bf16.msra.mxu0 %v2363
        %2395 = vmatprep.subr.bf16.mxu0 0
        %2396 = vmatpush2.bf16.msra.mxu0 0
        %2397 = vmatprep.subr.bf16.mxu0 0
        %2398 = vmatpush2.bf16.msra.mxu0 0
        %2399 = vmatprep.subr.bf16.mxu0 0
        %2400 = vmatpush2.bf16.msra.mxu0 0
        %2401 = vmatprep.subr.bf16.mxu0 0
        %2402 = vmatpush2.bf16.msra.mxu0 0
        %2403 = vmatprep.subr.bf16.mxu0 0
        %2404 = vmatpush2.bf16.msra.mxu0 0
        %2405 = vmatprep.subr.bf16.mxu0 0
        %2406 = vmatpush2.bf16.msra.mxu0 0
        %2407 = vmatprep.subr.bf16.mxu0 0
        %2408 = vmatpush2.bf16.msra.mxu0 0
        %2409 = vmatprep.subr.bf16.mxu0 0
        %2410 = vmatpush2.bf16.msra.mxu0 0
        %2411 = vmatprep.mubr.bf16.mxu0 0
        %2412 = vmatmul.mubr.bf16.gmra.mxu0 %v2307
        %v2413 = vpop.f32.mrf.mxu0
        %v2414 = vadd.f32 %v2329, %v2413
        %v2415 = vpop.f32.mrf.mxu0
        %v2416 = vpop.f32.mrf.mxu0
        %v2417 = vadd.f32 %v2329, %v2416
        %v2418 = vpop.f32.mrf.mxu0
        %2419 = vdwg.mxu0
        %v2420 = vadd.f32 %v1079, %v2414
        %v2421 = vadd.f32 %v1080, %v2417
        %v2422 = vld [vmem:[%s836] sm:$0x1]
        %v2423 = vld [vmem:[%s956] sm:$0x1]
        %2424 = vadd.xlane.f32.xlu0 %v2420
        %v2425 = vpop.xlane.xlu0 %2424
        %2426 = vadd.xlane.f32.xlu0 %v2421
        %v2427 = vpop.xlane.xlu0 %2426
        %v2428 = vmul.f32 %v2425, %v1087
        %v2429 = vmul.f32 %v2427, %v1087
        %v2430 = vsub.f32 %v2420, %v2428
        %v2431 = vsub.f32 %v2421, %v2429
        %v2432 = vmul.f32 %v2430, %v2430
        %v2433 = vmul.f32 %v2431, %v2431
        %2434 = vadd.xlane.f32.xlu0 %v2432
        %v2435 = vpop.xlane.xlu0 %2434
        %2436 = vadd.xlane.f32.xlu0 %v2433
        %v2437 = vpop.xlane.xlu0 %2436
        %v2438 = vmul.f32 %v2435, %v1087
        %v2439 = vmul.f32 %v2437, %v1087
        %v2440 = vadd.f32 %v2438, 1e-05
        %v2441 = vadd.f32 %v2439, 1e-05
        %v2442 = vrsqrt.pop %v2440
        %v2443 = vrsqrt.pop %v2441
        %v2444 = vmul.f32 %v2430, %v2442
        %v2445 = vmul.f32 %v2431, %v2443
        %v2447 = vlaneseq
        %v2448 = vshrl.u32 %v2447, 7
        %v2449 = vsub.s32 0, %v2448
        %v2450 = vrot.slane %v2422, %v2449
        %v2452 = vmul.f32 %v2444, %v2450
        %v2453 = vmul.f32 %v2445, %v2450
        %v2455 = vlaneseq
        %v2456 = vshrl.u32 %v2455, 7
        %v2457 = vsub.s32 0, %v2456
        %v2458 = vrot.slane %v2423, %v2457
        %v2460 = vadd.f32 %v2452, %v2458
        %v2461 = vadd.f32 %v2453, %v2458
        %v2462 = vpack.c.bf16 %v2461, %v2460
        %v2463 = vld [vmem:[%s845] sm:$0xff]
        %v2464 = vld [vmem:[%s845 + $0x8] sm:$0xff]
        %v2465 = vld [vmem:[%s845 + $0x10] sm:$0xff]
        %v2466 = vld [vmem:[%s845 + $0x18] sm:$0xff]
        %v2467 = vld [vmem:[%s845 + $0x20] sm:$0xff]
        %v2468 = vld [vmem:[%s845 + $0x28] sm:$0xff]
        %v2469 = vld [vmem:[%s845 + $0x30] sm:$0xff]
        %v2470 = vld [vmem:[%s845 + $0x38] sm:$0xff]
        %v2471 = vld [vmem:[%s845 + $0x40] sm:$0xff]
        %v2472 = vld [vmem:[%s845 + $0x48] sm:$0xff]
        %v2473 = vld [vmem:[%s845 + $0x50] sm:$0xff]
        %v2474 = vld [vmem:[%s845 + $0x58] sm:$0xff]
        %v2475 = vld [vmem:[%s845 + $0x60] sm:$0xff]
        %v2476 = vld [vmem:[%s845 + $0x68] sm:$0xff]
        %v2477 = vld [vmem:[%s845 + $0x70] sm:$0xff]
        %v2478 = vld [vmem:[%s845 + $0x78] sm:$0xff]
        %v2479 = vld [vmem:[%s960] sm:$0x3]
        %v2481 = vlaneseq
        %v2482 = vshrl.u32 %v2481, 7
        %v2483 = vsub.s32 0, %v2482
        %v2484 = vrot.slane %v2479, %v2483
        %v2485 = vlaneseq
        %v2486 = vshrl.u32 %v2485, 7
        %v2487 = vsub.s32 1, %v2486
        %v2488 = vrot.slane %v2479, %v2487
        %v2507 = vunpack.c.l.b16 %v2463
        %v2508 = vunpack.c.h.b16 %v2463
        %v2509 = vunpack.c.l.b16 %v2464
        %v2510 = vunpack.c.h.b16 %v2464
        %v2511 = vunpack.c.l.b16 %v2465
        %v2512 = vunpack.c.h.b16 %v2465
        %v2513 = vunpack.c.l.b16 %v2466
        %v2514 = vunpack.c.h.b16 %v2466
        %v2515 = vunpack.c.l.b16 %v2467
        %v2516 = vunpack.c.h.b16 %v2467
        %v2517 = vunpack.c.l.b16 %v2468
        %v2518 = vunpack.c.h.b16 %v2468
        %v2519 = vunpack.c.l.b16 %v2469
        %v2520 = vunpack.c.h.b16 %v2469
        %v2521 = vunpack.c.l.b16 %v2470
        %v2522 = vunpack.c.h.b16 %v2470
        %v2523 = vunpack.c.l.b16 %v2471
        %v2524 = vunpack.c.h.b16 %v2471
        %v2525 = vunpack.c.l.b16 %v2472
        %v2526 = vunpack.c.h.b16 %v2472
        %v2527 = vunpack.c.l.b16 %v2473
        %v2528 = vunpack.c.h.b16 %v2473
        %v2529 = vunpack.c.l.b16 %v2474
        %v2530 = vunpack.c.h.b16 %v2474
        %v2531 = vunpack.c.l.b16 %v2475
        %v2532 = vunpack.c.h.b16 %v2475
        %v2533 = vunpack.c.l.b16 %v2476
        %v2534 = vunpack.c.h.b16 %v2476
        %v2535 = vunpack.c.l.b16 %v2477
        %v2536 = vunpack.c.h.b16 %v2477
        %v2537 = vunpack.c.l.b16 %v2478
        %v2538 = vunpack.c.h.b16 %v2478
        %v2539 = vpack.c.b16 %v2509, %v2507
        %v2540 = vpack.c.b16 %v2510, %v2508
        %v2541 = vpack.c.b16 %v2513, %v2511
        %v2542 = vpack.c.b16 %v2514, %v2512
        %v2543 = vpack.c.b16 %v2517, %v2515
        %v2544 = vpack.c.b16 %v2518, %v2516
        %v2545 = vpack.c.b16 %v2521, %v2519
        %v2546 = vpack.c.b16 %v2522, %v2520
        %v2547 = vpack.c.b16 %v2525, %v2523
        %v2548 = vpack.c.b16 %v2526, %v2524
        %v2549 = vpack.c.b16 %v2529, %v2527
        %v2550 = vpack.c.b16 %v2530, %v2528
        %v2551 = vpack.c.b16 %v2533, %v2531
        %v2552 = vpack.c.b16 %v2534, %v2532
        %v2553 = vpack.c.b16 %v2537, %v2535
        %v2554 = vpack.c.b16 %v2538, %v2536
        %2571 = vmatprep.subr.bf16.mxu0 %v2554
        %2572 = vmatpush1.bf16.msra.mxu0 %v2553
        %2573 = vmatprep.subr.bf16.mxu0 %v2552
        %2574 = vmatpush1.bf16.msra.mxu0 %v2551
        %2575 = vmatprep.subr.bf16.mxu0 %v2550
        %2576 = vmatpush1.bf16.msra.mxu0 %v2549
        %2577 = vmatprep.subr.bf16.mxu0 %v2548
        %2578 = vmatpush1.bf16.msra.mxu0 %v2547
        %2579 = vmatprep.subr.bf16.mxu0 %v2546
        %2580 = vmatpush1.bf16.msra.mxu0 %v2545
        %2581 = vmatprep.subr.bf16.mxu0 %v2544
        %2582 = vmatpush1.bf16.msra.mxu0 %v2543
        %2583 = vmatprep.subr.bf16.mxu0 %v2542
        %2584 = vmatpush1.bf16.msra.mxu0 %v2541
        %2585 = vmatprep.subr.bf16.mxu0 %v2540
        %2586 = vmatpush1.bf16.msra.mxu0 %v2539
        %2587 = vmatprep.subr.bf16.mxu0 0
        %2588 = vmatpush2.bf16.msra.mxu0 0
        %2589 = vmatprep.subr.bf16.mxu0 0
        %2590 = vmatpush2.bf16.msra.mxu0 0
        %2591 = vmatprep.subr.bf16.mxu0 0
        %2592 = vmatpush2.bf16.msra.mxu0 0
        %2593 = vmatprep.subr.bf16.mxu0 0
        %2594 = vmatpush2.bf16.msra.mxu0 0
        %2595 = vmatprep.subr.bf16.mxu0 0
        %2596 = vmatpush2.bf16.msra.mxu0 0
        %2597 = vmatprep.subr.bf16.mxu0 0
        %2598 = vmatpush2.bf16.msra.mxu0 0
        %2599 = vmatprep.subr.bf16.mxu0 0
        %2600 = vmatpush2.bf16.msra.mxu0 0
        %2601 = vmatprep.subr.bf16.mxu0 0
        %2602 = vmatpush2.bf16.msra.mxu0 0
        %2603 = vmatprep.mubr.bf16.mxu0 0
        %2604 = vmatmul.mubr.bf16.gmra.mxu0 %v2462
        %v2605 = vpop.f32.mrf.mxu0
        %v2606 = vadd.f32 %v2484, %v2605
        %v2607 = vpop.f32.mrf.mxu0
        %v2608 = vadd.f32 %v2488, %v2607
        %v2609 = vpop.f32.mrf.mxu0
        %v2610 = vadd.f32 %v2484, %v2609
        %v2611 = vpop.f32.mrf.mxu0
        %v2612 = vadd.f32 %v2488, %v2611
        %2613 = vdwg.mxu0
        %v2614 = vmax.f32 %v2606, 0.0
        %v2615 = vmax.f32 %v2608, 0.0
        %v2616 = vmax.f32 %v2610, 0.0
        %v2617 = vmax.f32 %v2612, 0.0
        %v2618 = vpack.c.bf16 %v2616, %v2614
        %v2619 = vpack.c.bf16 %v2617, %v2615
        %v2620 = vld [vmem:[%s854] sm:$0xf]
        %v2621 = vld [vmem:[%s854 + $0x4] sm:$0xf]
        %v2622 = vld [vmem:[%s854 + $0x8] sm:$0xf]
        %v2623 = vld [vmem:[%s854 + $0xc] sm:$0xf]
        %v2624 = vld [vmem:[%s854 + $0x10] sm:$0xf]
        %v2625 = vld [vmem:[%s854 + $0x14] sm:$0xf]
        %v2626 = vld [vmem:[%s854 + $0x18] sm:$0xf]
        %v2627 = vld [vmem:[%s854 + $0x1c] sm:$0xf]
        %v2628 = vld [vmem:[%s854 + $0x20] sm:$0xf]
        %v2629 = vld [vmem:[%s854 + $0x24] sm:$0xf]
        %v2630 = vld [vmem:[%s854 + $0x28] sm:$0xf]
        %v2631 = vld [vmem:[%s854 + $0x2c] sm:$0xf]
        %v2632 = vld [vmem:[%s854 + $0x30] sm:$0xf]
        %v2633 = vld [vmem:[%s854 + $0x34] sm:$0xf]
        %v2634 = vld [vmem:[%s854 + $0x38] sm:$0xf]
        %v2635 = vld [vmem:[%s854 + $0x3c] sm:$0xf]
        %v2636 = vld [vmem:[%s854 + $0x40] sm:$0xf]
        %v2637 = vld [vmem:[%s854 + $0x44] sm:$0xf]
        %v2638 = vld [vmem:[%s854 + $0x48] sm:$0xf]
        %v2639 = vld [vmem:[%s854 + $0x4c] sm:$0xf]
        %v2640 = vld [vmem:[%s854 + $0x50] sm:$0xf]
        %v2641 = vld [vmem:[%s854 + $0x54] sm:$0xf]
        %v2642 = vld [vmem:[%s854 + $0x58] sm:$0xf]
        %v2643 = vld [vmem:[%s854 + $0x5c] sm:$0xf]
        %v2644 = vld [vmem:[%s854 + $0x60] sm:$0xf]
        %v2645 = vld [vmem:[%s854 + $0x64] sm:$0xf]
        %v2646 = vld [vmem:[%s854 + $0x68] sm:$0xf]
        %v2647 = vld [vmem:[%s854 + $0x6c] sm:$0xf]
        %v2648 = vld [vmem:[%s854 + $0x70] sm:$0xf]
        %v2649 = vld [vmem:[%s854 + $0x74] sm:$0xf]
        %v2650 = vld [vmem:[%s854 + $0x78] sm:$0xf]
        %v2651 = vld [vmem:[%s854 + $0x7c] sm:$0xf]
        %v2652 = vld [vmem:[%s963] sm:$0x1]
        %v2654 = vlaneseq
        %v2655 = vshrl.u32 %v2654, 7
        %v2656 = vsub.s32 0, %v2655
        %v2657 = vrot.slane %v2652, %v2656
        %v2691 = vunpack.c.l.b16 %v2620
        %v2692 = vunpack.c.l.b16 %v2621
        %v2693 = vunpack.c.l.b16 %v2622
        %v2694 = vunpack.c.l.b16 %v2623
        %v2695 = vunpack.c.l.b16 %v2624
        %v2696 = vunpack.c.l.b16 %v2625
        %v2697 = vunpack.c.l.b16 %v2626
        %v2698 = vunpack.c.l.b16 %v2627
        %v2699 = vunpack.c.l.b16 %v2628
        %v2700 = vunpack.c.l.b16 %v2629
        %v2701 = vunpack.c.l.b16 %v2630
        %v2702 = vunpack.c.l.b16 %v2631
        %v2703 = vunpack.c.l.b16 %v2632
        %v2704 = vunpack.c.l.b16 %v2633
        %v2705 = vunpack.c.l.b16 %v2634
        %v2706 = vunpack.c.l.b16 %v2635
        %v2707 = vunpack.c.l.b16 %v2636
        %v2708 = vunpack.c.l.b16 %v2637
        %v2709 = vunpack.c.l.b16 %v2638
        %v2710 = vunpack.c.l.b16 %v2639
        %v2711 = vunpack.c.l.b16 %v2640
        %v2712 = vunpack.c.l.b16 %v2641
        %v2713 = vunpack.c.l.b16 %v2642
        %v2714 = vunpack.c.l.b16 %v2643
        %v2715 = vunpack.c.l.b16 %v2644
        %v2716 = vunpack.c.l.b16 %v2645
        %v2717 = vunpack.c.l.b16 %v2646
        %v2718 = vunpack.c.l.b16 %v2647
        %v2719 = vunpack.c.l.b16 %v2648
        %v2720 = vunpack.c.l.b16 %v2649
        %v2721 = vunpack.c.l.b16 %v2650
        %v2722 = vunpack.c.l.b16 %v2651
        %v2723 = vpack.c.b16 %v2692, %v2691
        %v2724 = vpack.c.b16 %v2694, %v2693
        %v2725 = vpack.c.b16 %v2696, %v2695
        %v2726 = vpack.c.b16 %v2698, %v2697
        %v2727 = vpack.c.b16 %v2700, %v2699
        %v2728 = vpack.c.b16 %v2702, %v2701
        %v2729 = vpack.c.b16 %v2704, %v2703
        %v2730 = vpack.c.b16 %v2706, %v2705
        %v2731 = vpack.c.b16 %v2708, %v2707
        %v2732 = vpack.c.b16 %v2710, %v2709
        %v2733 = vpack.c.b16 %v2712, %v2711
        %v2734 = vpack.c.b16 %v2714, %v2713
        %v2735 = vpack.c.b16 %v2716, %v2715
        %v2736 = vpack.c.b16 %v2718, %v2717
        %v2737 = vpack.c.b16 %v2720, %v2719
        %v2738 = vpack.c.b16 %v2722, %v2721
        %2755 = vmatprep.subr.bf16.mxu0 0
        %2756 = vmatpush1.bf16.msra.mxu0 %v2730
        %2757 = vmatprep.subr.bf16.mxu0 0
        %2758 = vmatpush1.bf16.msra.mxu0 %v2729
        %2759 = vmatprep.subr.bf16.mxu0 0
        %2760 = vmatpush1.bf16.msra.mxu0 %v2728
        %2761 = vmatprep.subr.bf16.mxu0 0
        %2762 = vmatpush1.bf16.msra.mxu0 %v2727
        %2763 = vmatprep.subr.bf16.mxu0 0
        %2764 = vmatpush1.bf16.msra.mxu0 %v2726
        %2765 = vmatprep.subr.bf16.mxu0 0
        %2766 = vmatpush1.bf16.msra.mxu0 %v2725
        %2767 = vmatprep.subr.bf16.mxu0 0
        %2768 = vmatpush1.bf16.msra.mxu0 %v2724
        %2769 = vmatprep.subr.bf16.mxu0 0
        %2770 = vmatpush1.bf16.msra.mxu0 %v2723
        %2771 = vmatprep.subr.bf16.mxu0 0
        %2772 = vmatpush2.bf16.msra.mxu0 %v2738
        %2773 = vmatprep.subr.bf16.mxu0 0
        %2774 = vmatpush2.bf16.msra.mxu0 %v2737
        %2775 = vmatprep.subr.bf16.mxu0 0
        %2776 = vmatpush2.bf16.msra.mxu0 %v2736
        %2777 = vmatprep.subr.bf16.mxu0 0
        %2778 = vmatpush2.bf16.msra.mxu0 %v2735
        %2779 = vmatprep.subr.bf16.mxu0 0
        %2780 = vmatpush2.bf16.msra.mxu0 %v2734
        %2781 = vmatprep.subr.bf16.mxu0 0
        %2782 = vmatpush2.bf16.msra.mxu0 %v2733
        %2783 = vmatprep.subr.bf16.mxu0 0
        %2784 = vmatpush2.bf16.msra.mxu0 %v2732
        %2785 = vmatprep.subr.bf16.mxu0 0
        %2786 = vmatpush2.bf16.msra.mxu0 %v2731
        %2787 = vmatprep.mubr.bf16.mxu0 %v2619
        %2788 = vmatmul.mubr.bf16.gmra.mxu0 %v2618
        %v2789 = vpop.f32.mrf.mxu0
        %v2790 = vadd.f32 %v2657, %v2789
        %v2791 = vpop.f32.mrf.mxu0
        %v2792 = vpop.f32.mrf.mxu0
        %v2793 = vadd.f32 %v2657, %v2792
        %v2794 = vpop.f32.mrf.mxu0
        %2795 = vdwg.mxu0
        %v2796 = vadd.f32 %v2420, %v2790
        %v2797 = vadd.f32 %v2421, %v2793
        %2798 = vst [vmem:[#allocation22] sm:$0xff] %v2796
        %2799 = vst [vmem:[#allocation22 + $0x8] sm:$0xff] %v2797
        // Predicated region
        $region145: #{tpu_custom_call.1} parent=91 // pred_check
          %p2800 = pneg %p518
        $region146: #{tpu_custom_call.1} parent=91 // pred_check_branch
          %2802 = sbr.rel (%p2800) target = $region148
        $region147: #{tpu_custom_call.1} parent=91 // pred_region
          %s2803 = smul.u32 2, %s49
          %s2805 = ssub.s32 256, 256
          %2806 = vsyncadd [#allocation4], %s2805
          %s2807 = smul.addr %s2803, 128
          %s2808 = scalar_lea.hbm %s18, %s2807
          %s2809 = sshll.u32 [#allocation22], 4
          %s2810 = int_to_ptr.vmem [resolvable:$true] %s2809
          %2815 = dma.vmem_to_hbm [thread:$0]  %s2810, 256, %s2808, [#allocation4], 128, 128, 8
        $region148: #{tpu_custom_call.1} parent=91 // pred_fallthru
          _
        // Predicated region
        $region149: #{tpu_custom_call.1} parent=91 // pred_check
          %p2816 = pneg %p518
        $region150: #{tpu_custom_call.1} parent=91 // pred_check_branch
          %2818 = sbr.rel (%p2816) target = $region152
        $region151: #{tpu_custom_call.1} parent=91 // pred_region
          %2819 = dma.done [#allocation4], 256
        $region152: #{tpu_custom_call.1} parent=91 // pred_fallthru
          _
      $region92: #{tpu_custom_call.1} parent=5 // pred_fallthru
        _
      %p2820 = scmp.le.s32.totalorder 2, %s40
      // Predicated region
      $region153: #{tpu_custom_call.1} parent=5 // pred_check
        %p2821 = pneg %p2820
      $region154: #{tpu_custom_call.1} parent=5 // pred_check_branch
        %2823 = sbr.rel (%p2821) target = $region156
      $region155: #{tpu_custom_call.1} parent=5 // pred_region
        %s2824 = ssub.s32 %s40, 2
      $region156: #{tpu_custom_call.1} parent=5 // pred_fallthru
        _
    $region6: #{tpu_custom_call.1} parent=1 // loop_footer
      %s44 = sadd.s32 1, %s40
    $region7: #{tpu_custom_call.1} parent=1 // loop_footer_branch
      %39 = sbr.rel target = $region3
    $region8: #{tpu_custom_call.1} parent=1 // loop_exit
      _
    %2825 = vsyncpa [#allocation3], 1
    %s2826 = scalar_lea.sflag [#allocation3], 1
    %2827 = vsyncpa %s2826, 1
    %2828 = vsyncpa [#allocation6], 1
    %2829 = vsyncpa [#allocation9], 1
    %2830 = vsyncpa [#allocation12], 1
    %s2831 = scalar_lea.sflag [#allocation12], 1
    %2832 = vsyncpa %s2831, 1
    %2833 = vsyncpa [#allocation15], 1
    %s2834 = scalar_lea.sflag [#allocation15], 1
    %2835 = vsyncpa %s2834, 1
    %2836 = vsyncpa [#allocation18], 1
    %s2837 = scalar_lea.sflag [#allocation18], 1
    %2838 = vsyncpa %s2837, 1
    %2839 = vsyncpa [#allocation21], 1
    %s2840 = scalar_lea.sflag [#allocation21], 1
    %2841 = vsyncpa %s2840, 1
    %2842 = vsyncpa [#allocation4], 1
    %s2843 = scalar_lea.sflag [#allocation4], 1
    %2844 = vsyncpa %s2843, 1

</llo_original>
